<compile_context>
chip_gen: v6e
topology: v6e:2x2x1
jax: 0.10.0
libtpu: 0.0.40
codegen_flags: <defaults>
</compile_context>

<pallas_src>
import jax
import jax.numpy as jnp
from jax.experimental import pallas as pl
from jax.experimental.pallas import tpu as pltpu

# ---- small, self-consistent config (scaled-down WaveNet) ----
LAYERS = 4
BLOCK_SIZE = 2
KERNEL_SIZE = 3
RES_CH = 32      # residual_channels
LAYER_CH = 32    # layer_channels
SKIP_CH = 32     # skip_channels
AGG_CH = 32      # aggregate_channels
CLASSES = 32     # classes
BATCH = 2
N = 128          # time samples per batch element (lane-aligned)


def wavenet_kernel(x_ref, emb_w_ref, emb_b_ref,
                   fgw_ref, fgb_ref, rw_ref, rb_ref, sw_ref, sb_sum_ref,
                   aw_ref, ab_ref, ow_ref, ob_ref,
                   out_ref, xs_ref, z_ref):
    # x_ref: (1, 1, W) slice; W = fold*N lanes. Activations are (channels, W).
    # xs_ref: (KERNEL_SIZE*RES_CH, W) bf16 scratch -- staged causal taps.
    # z_ref : (LAYERS*LAYER_CH, W)   bf16 scratch -- per-layer gated outputs
    #                                               for the deferred skip matmul.
    x = x_ref[0]                                   # (1, W) f32
    W = x.shape[1]

    # embedding: Conv1d(1, R, 1)  ->  per-channel scale + bias (VPU, f32)
    h = emb_w_ref[...] * x + emb_b_ref[...]        # (R, W)

    # per-segment time index; f32 causal masks for the unique shifts, hoisted
    # out of the layer loop. (t % N) zeroes the roll wrap-around at folded
    # batch-segment starts.
    t_mod = jax.lax.broadcasted_iota(jnp.int32, (RES_CH, W), 1) % N
    unique_shifts = sorted(
        {(KERNEL_SIZE - 1 - j) * (2 ** (l % BLOCK_SIZE))
         for l in range(LAYERS) for j in range(KERNEL_SIZE)} - {0})
    masks = {s: (t_mod >= s).astype(jnp.float32) for s in unique_shifts}

    for l in range(LAYERS):                        # static unrolled layer loop
        d = 2 ** (l % BLOCK_SIZE)
        # Stage the KERNEL_SIZE causally shifted taps directly into the bf16
        # VMEM scratch along the contraction axis:
        #   xs[j*R:(j+1)*R] = (h shifted right by (K-1-j)*d, causally zeroed)
        for j in range(KERNEL_SIZE):
            s = (KERNEL_SIZE - 1 - j) * d
            if s == 0:
                tap = h
            else:
                # shifted[t] = h[t - s] for (t % N) >= s else 0
                tap = pltpu.roll(h, shift=s, axis=1) * masks[s]
            xs_ref[pl.ds(j * RES_CH, RES_CH), :] = tap.astype(jnp.bfloat16)

        # one fused (2L, K*R)=(64,96) @ (96, W) matmul for filter + gate
        fg = jnp.dot(fgw_ref[l], xs_ref[...],
                     preferred_element_type=jnp.float32) + fgb_ref[l]   # (2L, W)
        z = jnp.tanh(fg[:LAYER_CH]) * jax.nn.sigmoid(fg[LAYER_CH:])     # (L, W)
        z_bf16 = z.astype(jnp.bfloat16)
        z_ref[pl.ds(l * LAYER_CH, LAYER_CH), :] = z_bf16                # stash for skip

        # residual 1x1 conv stays on the sequential chain: (R, L)=(32,32) matmul
        h = h + jnp.dot(rw_ref[l], z_bf16,
                        preferred_element_type=jnp.float32) + rb_ref[l]

    # deferred skip path: ONE (S, LAYERS*L)=(32,128) @ (128, W) matmul.
    # skip biases (layer-independent additive constants) were summed on host.
    skip = jnp.dot(sw_ref[...], z_ref[...],
                   preferred_element_type=jnp.float32) + sb_sum_ref[...]  # (S, W)

    agg = jnp.dot(aw_ref[...],
                  jnp.maximum(skip, 0.0).astype(jnp.bfloat16),
                  preferred_element_type=jnp.float32) + ab_ref[...]       # (A, W)
    out = jnp.dot(ow_ref[...],
                  jnp.maximum(agg, 0.0).astype(jnp.bfloat16),
                  preferred_element_type=jnp.float32) + ob_ref[...]       # (C, W)

    # log_softmax over the channel axis (PyTorch dim=1), f32
    m = jnp.max(out, axis=0, keepdims=True)
    lse = jnp.log(jnp.sum(jnp.exp(out - m), axis=0, keepdims=True)) + m
    out_ref[0] = out - lse


def init_params(key):
    ks = jax.random.split(key, 14)

    def w(k, shape, fan_in):
        return (jax.random.normal(k, shape, jnp.float32)
                / jnp.sqrt(jnp.float32(fan_in))).astype(jnp.float32)

    emb_w = w(ks[0], (RES_CH, 1), 1.0)
    emb_b = w(ks[1], (RES_CH, 1), 1.0)
    fw = w(ks[2], (LAYERS, KERNEL_SIZE, LAYER_CH, RES_CH), RES_CH * KERNEL_SIZE)
    fb = w(ks[3], (LAYERS, LAYER_CH, 1), RES_CH * KERNEL_SIZE)
    gw = w(ks[4], (LAYERS, KERNEL_SIZE, LAYER_CH, RES_CH), RES_CH * KERNEL_SIZE)
    gb = w(ks[5], (LAYERS, LAYER_CH, 1), RES_CH * KERNEL_SIZE)
    sw = w(ks[6], (LAYERS, SKIP_CH, LAYER_CH), LAYER_CH)
    sb = w(ks[7], (LAYERS, SKIP_CH, 1), LAYER_CH)
    rw = w(ks[8], (LAYERS, RES_CH, LAYER_CH), LAYER_CH)
    rb = w(ks[9], (LAYERS, RES_CH, 1), LAYER_CH)
    aw = w(ks[10], (AGG_CH, SKIP_CH), SKIP_CH)
    ab = w(ks[11], (AGG_CH, 1), SKIP_CH)
    ow = w(ks[12], (CLASSES, AGG_CH), AGG_CH)
    ob = w(ks[13], (CLASSES, 1), AGG_CH)
    return (emb_w, emb_b, fw, fb, gw, gb, sw, sb, rw, rb, aw, ab, ow, ob)


def prep_params(params):
    """Host-side weight fusion / packing / bf16 cast (layout work stays out of
    the kernel)."""
    emb_w, emb_b, fw, fb, gw, gb, sw, sb, rw, rb, aw, ab, ow, ob = params
    # fused gate weight: (LAYERS, 2L, K*R); taps stacked along the contraction
    # axis to match the tap-scratch ordering (fw_flat[l, o, j*R + i] == fw[l, j, o, i]).
    fw_flat = jnp.transpose(fw, (0, 2, 1, 3)).reshape(
        LAYERS, LAYER_CH, KERNEL_SIZE * RES_CH)
    gw_flat = jnp.transpose(gw, (0, 2, 1, 3)).reshape(
        LAYERS, LAYER_CH, KERNEL_SIZE * RES_CH)
    fgw = jnp.concatenate([fw_flat, gw_flat], axis=1).astype(jnp.bfloat16)
    fgb = jnp.concatenate([fb, gb], axis=1)                    # (LAYERS, 2L, 1)
    # skip weights packed for the single deferred matmul over the stacked z:
    # sw_all[:, l*L + c] == sw[l, :, c]   -> (S, LAYERS*L)
    sw_all = jnp.transpose(sw, (1, 0, 2)).reshape(
        SKIP_CH, LAYERS * LAYER_CH).astype(jnp.bfloat16)
    sb_sum = jnp.sum(sb, axis=0)                               # (S, 1)
    return (emb_w, emb_b, fgw, fgb, rw.astype(jnp.bfloat16), rb, sw_all, sb_sum,
            aw.astype(jnp.bfloat16), ab, ow.astype(jnp.bfloat16), ob)


def _default_fold(batch):
    """Batch elements folded into the lane axis per grid step."""
    kind = jax.devices()[0].device_kind.lower()
    # 2-TC chips (v7x, e.g. device_kind "TPU7x") vs single-TC v5e/v6e.
    two_tc = "7" in kind
    if two_tc and batch > 2 and batch % 2 == 0:
        # pairs -> grid=(B/2,) "parallel": both TensorCores, full 256-lane faces
        return 2
    # single TC (or B<=2): fold everything into one lane-dense grid step
    return batch


def wavenet_forward(x, params, fold=None):
    """x: (B, N) float32 samples -> (B, CLASSES, N) log-probs."""
    B, Nt = x.shape
    assert Nt == N
    if fold is None:
        fold = _default_fold(B)
    assert B % fold == 0
    G = B // fold          # grid steps
    W = fold * Nt          # lanes per grid step

    prepped = prep_params(params)

    x_in = x.reshape(G, 1, W).astype(jnp.float32)
    x_spec = pl.BlockSpec((1, 1, W), lambda i: (i, 0, 0))
    out_spec = pl.BlockSpec((1, CLASSES, W), lambda i: (i, 0, 0))
    out_shape = jax.ShapeDtypeStruct((G, CLASSES, W), jnp.float32)

    def full_spec(a):
        return pl.BlockSpec(a.shape, lambda i, _nd=a.ndim: (0,) * _nd)

    in_specs = [x_spec] + [full_spec(p) for p in prepped]

    # advisory cost hint so XLA can overlap this few-microsecond call with
    # surrounding HLO instead of treating it as opaque
    lanes = B * Nt
    flops = 2 * lanes * (LAYERS * (2 * LAYER_CH * KERNEL_SIZE * RES_CH
                                   + RES_CH * LAYER_CH)
                         + SKIP_CH * LAYERS * LAYER_CH
                         + AGG_CH * SKIP_CH + CLASSES * AGG_CH)
    transcendentals = lanes * (2 * LAYER_CH * LAYERS + CLASSES + 1)
    param_bytes = sum(int(p.size) * p.dtype.itemsize for p in prepped)
    bytes_accessed = int(x.size) * 4 + B * CLASSES * Nt * 4 + param_bytes

    out = pl.pallas_call(
        wavenet_kernel,
        out_shape=out_shape,
        grid_spec=pltpu.PrefetchScalarGridSpec(
            num_scalar_prefetch=0,
            grid=(G,),
            in_specs=in_specs,
            out_specs=out_spec,
            scratch_shapes=[
                pltpu.VMEM((KERNEL_SIZE * RES_CH, W), jnp.bfloat16),   # taps
                pltpu.VMEM((LAYERS * LAYER_CH, W), jnp.bfloat16),      # stacked z
            ],
        ),
        compiler_params=pltpu.CompilerParams(
            dimension_semantics=("parallel",),
        ),
        cost_estimate=pl.CostEstimate(flops=int(flops),
                                      transcendentals=int(transcendentals),
                                      bytes_accessed=int(bytes_accessed)),
    )(x_in, *prepped)

    # wrapper-side layout plumbing: (G, C, fold*N) -> (B, C, N)
    out = out.reshape(G, CLASSES, fold, Nt).transpose(0, 2, 1, 3)
    return out.reshape(B, CLASSES, Nt)


def reference_forward(x, params):
    """Pure-JAX f32 reference using lax.conv_general_dilated (matches PyTorch
    Conv1d semantics with causal left padding)."""
    emb_w, emb_b, fw, fb, gw, gb, sw, sb, rw, rb, aw, ab, ow, ob = params
    h = emb_w[None] * x[:, None, :] + emb_b[None]                  # (B, R, N)
    skip_acc = jnp.zeros((x.shape[0], SKIP_CH, x.shape[1]), jnp.float32)
    for l in range(LAYERS):
        d = 2 ** (l % BLOCK_SIZE)
        pad = d * (KERNEL_SIZE - 1)
        wf = jnp.transpose(fw[l], (1, 2, 0))                       # (L, R, K)
        wg = jnp.transpose(gw[l], (1, 2, 0))
        conv = lambda inp, w_: jax.lax.conv_general_dilated(
            inp, w_, window_strides=(1,), padding=[(pad, 0)], rhs_dilation=(d,),
            dimension_numbers=('NCH', 'OIH', 'NCH'))
        f = conv(h, wf) + fb[l][None]
        g = conv(h, wg) + gb[l][None]
        z = jnp.tanh(f) * jax.nn.sigmoid(g)
        skip_acc = skip_acc + jnp.einsum('sl,bln->bsn', sw[l], z) + sb[l][None]
        h = h + jnp.einsum('rl,bln->brn', rw[l], z) + rb[l][None]
    agg = jnp.einsum('as,bsn->ban', aw, jnp.maximum(skip_acc, 0.0)) + ab[None]
    out = jnp.einsum('ca,ban->bcn', ow, jnp.maximum(agg, 0.0)) + ob[None]
    return jax.nn.log_softmax(out, axis=1)


if __name__ == "__main__":
    key = jax.random.PRNGKey(0)
    k_in, k_p = jax.random.split(key)
    x = jax.random.normal(k_in, (BATCH, N), jnp.float32)
    params = init_params(k_p)

    ref = reference_forward(x, params)

    # exercise: device-default fold, fully-folded (grid=(1,), W=256), and the
    # per-batch-element grid path (grid=(B,), W=128)
    for fold in (None, BATCH, 1):
        out = jax.block_until_ready(wavenet_forward(x, params, fold=fold))
        assert out.shape == (BATCH, CLASSES, N), out.shape

        # sanity: log-softmax probabilities sum to 1 over the channel axis
        probs_sum = jnp.exp(out).sum(axis=1)
        assert jnp.allclose(probs_sum, 1.0, atol=1e-3)

        # correctness vs. the f32 pure-JAX reference (bf16 MXU inputs, f32 accum)
        assert jnp.allclose(out, ref, rtol=5e-2, atol=5e-2), \
            (fold, float(jnp.max(jnp.abs(out - ref))))

    print("KERNEL_OK")
</pallas_src>

<mosaic_0001>
module attributes {stable_mosaic.version = 11 : i64} {
  func.func @wavenet_kernel(%arg0: i32, %arg1: memref<1x1x256xf32, #tpu.memory_space<vmem>>, %arg2: memref<32x1xf32, #tpu.memory_space<vmem>>, %arg3: memref<32x1xf32, #tpu.memory_space<vmem>>, %arg4: memref<4x64x96xbf16, #tpu.memory_space<vmem>>, %arg5: memref<4x64x1xf32, #tpu.memory_space<vmem>>, %arg6: memref<4x32x32xbf16, #tpu.memory_space<vmem>>, %arg7: memref<4x32x1xf32, #tpu.memory_space<vmem>>, %arg8: memref<32x128xbf16, #tpu.memory_space<vmem>>, %arg9: memref<32x1xf32, #tpu.memory_space<vmem>>, %arg10: memref<32x32xbf16, #tpu.memory_space<vmem>>, %arg11: memref<32x1xf32, #tpu.memory_space<vmem>>, %arg12: memref<32x32xbf16, #tpu.memory_space<vmem>>, %arg13: memref<32x1xf32, #tpu.memory_space<vmem>>, %arg14: memref<1x32x256xf32, #tpu.memory_space<vmem>>, %arg15: memref<96x256xbf16, #tpu.memory_space<vmem>>, %arg16: memref<128x256xbf16, #tpu.memory_space<vmem>>) attributes {dimension_semantics = [#tpu.dimension_semantics<parallel>], iteration_bounds = array<i64: 1>, scalar_prefetch = 0 : i64, scratch_operands = 2 : i64, tpu.core_type = #tpu.core_type<tc>, window_params = [{transform_indices = @transform_0, window_bounds = array<i64: 1, 1, 256>}, {pipeline_mode = #tpu.pipeline_mode<synchronous>, transform_indices = @transform_1, window_bounds = array<i64: 32, 1>}, {pipeline_mode = #tpu.pipeline_mode<synchronous>, transform_indices = @transform_2, window_bounds = array<i64: 32, 1>}, {pipeline_mode = #tpu.pipeline_mode<synchronous>, transform_indices = @transform_3, window_bounds = array<i64: 4, 64, 96>}, {pipeline_mode = #tpu.pipeline_mode<synchronous>, transform_indices = @transform_4, window_bounds = array<i64: 4, 64, 1>}, {pipeline_mode = #tpu.pipeline_mode<synchronous>, transform_indices = @transform_5, window_bounds = array<i64: 4, 32, 32>}, {pipeline_mode = #tpu.pipeline_mode<synchronous>, transform_indices = @transform_6, window_bounds = array<i64: 4, 32, 1>}, {pipeline_mode = #tpu.pipeline_mode<synchronous>, transform_indices = @transform_7, window_bounds = array<i64: 32, 128>}, {pipeline_mode = #tpu.pipeline_mode<synchronous>, transform_indices = @transform_8, window_bounds = array<i64: 32, 1>}, {pipeline_mode = #tpu.pipeline_mode<synchronous>, transform_indices = @transform_9, window_bounds = array<i64: 32, 32>}, {pipeline_mode = #tpu.pipeline_mode<synchronous>, transform_indices = @transform_10, window_bounds = array<i64: 32, 1>}, {pipeline_mode = #tpu.pipeline_mode<synchronous>, transform_indices = @transform_11, window_bounds = array<i64: 32, 32>}, {pipeline_mode = #tpu.pipeline_mode<synchronous>, transform_indices = @transform_12, window_bounds = array<i64: 32, 1>}, {transform_indices = @transform_13, window_bounds = array<i64: 1, 32, 256>}]} {
    %c0 = arith.constant 0 : index
    %c0_0 = arith.constant 0 : index
    %c0_1 = arith.constant 0 : index
    %0 = vector.load %arg1[%c0, %c0_0, %c0_1] : memref<1x1x256xf32, #tpu.memory_space<vmem>>, vector<1x1x256xf32>
    %1 = vector.shape_cast %0 : vector<1x1x256xf32> to vector<1x256xf32>
    %c0_2 = arith.constant 0 : index
    %c0_3 = arith.constant 0 : index
    %2 = vector.load %arg2[%c0_2, %c0_3] : memref<32x1xf32, #tpu.memory_space<vmem>>, vector<32x1xf32>
    %3 = vector.broadcast %2 : vector<32x1xf32> to vector<32x256xf32>
    %4 = vector.broadcast %1 : vector<1x256xf32> to vector<32x256xf32>
    %5 = arith.mulf %3, %4 : vector<32x256xf32>
    %c0_4 = arith.constant 0 : index
    %c0_5 = arith.constant 0 : index
    %6 = vector.load %arg3[%c0_4, %c0_5] : memref<32x1xf32, #tpu.memory_space<vmem>>, vector<32x1xf32>
    %7 = vector.broadcast %6 : vector<32x1xf32> to vector<32x256xf32>
    %8 = arith.addf %5, %7 : vector<32x256xf32>
    %9 = tpu.iota {dimensions = array<i32: 1>} : vector<32x256xi32>
    %c128_i32 = arith.constant 128 : i32
    %c0_i32 = arith.constant 0 : i32
    %10 = arith.cmpi eq, %c128_i32, %c0_i32 : i32
    %c1_i32 = arith.constant 1 : i32
    %11 = arith.select %10, %c1_i32, %c128_i32 : i32
    %12 = vector.broadcast %11 : i32 to vector<32x256xi32>
    %13 = arith.remsi %9, %12 : vector<32x256xi32>
    %c0_i32_6 = arith.constant 0 : i32
    %14 = vector.broadcast %c0_i32_6 : i32 to vector<32x256xi32>
    %15 = arith.cmpi ne, %13, %14 : vector<32x256xi32>
    %c0_i32_7 = arith.constant 0 : i32
    %16 = vector.broadcast %c0_i32_7 : i32 to vector<32x256xi32>
    %17 = arith.cmpi slt, %13, %16 : vector<32x256xi32>
    %c0_i32_8 = arith.constant 0 : i32
    %18 = arith.cmpi slt, %11, %c0_i32_8 : i32
    %19 = vector.broadcast %18 : i1 to vector<32x256xi1>
    %20 = vector.broadcast %19 : vector<32x256xi1> to vector<32x256xi1>
    %21 = arith.xori %17, %20 : vector<32x256xi1>
    %22 = arith.andi %21, %15 : vector<32x256xi1>
    %23 = vector.broadcast %11 : i32 to vector<32x256xi32>
    %24 = arith.addi %13, %23 : vector<32x256xi32>
    %25 = arith.select %22, %24, %13 : vector<32x256xi1>, vector<32x256xi32>
    %c1_i32_9 = arith.constant 1 : i32
    %26 = vector.broadcast %c1_i32_9 : i32 to vector<32x256xi32>
    %27 = arith.cmpi sge, %25, %26 : vector<32x256xi32>
    %28 = arith.extui %27 : vector<32x256xi1> to vector<32x256xi32>
    %29 = arith.sitofp %28 : vector<32x256xi32> to vector<32x256xf32>
    %c2_i32 = arith.constant 2 : i32
    %30 = vector.broadcast %c2_i32 : i32 to vector<32x256xi32>
    %31 = arith.cmpi sge, %25, %30 : vector<32x256xi32>
    %32 = arith.extui %31 : vector<32x256xi1> to vector<32x256xi32>
    %33 = arith.sitofp %32 : vector<32x256xi32> to vector<32x256xf32>
    %c4_i32 = arith.constant 4 : i32
    %34 = vector.broadcast %c4_i32 : i32 to vector<32x256xi32>
    %35 = arith.cmpi sge, %25, %34 : vector<32x256xi32>
    %36 = arith.extui %35 : vector<32x256xi1> to vector<32x256xi32>
    %37 = arith.sitofp %36 : vector<32x256xi32> to vector<32x256xf32>
    %c2_i32_10 = arith.constant 2 : i32
    %38 = tpu.dynamic_rotate %8 by %c2_i32_10 dim 1 : vector<32x256xf32>, i32 -> vector<32x256xf32>
    %39 = arith.mulf %38, %33 : vector<32x256xf32>
    %40 = arith.truncf %39 : vector<32x256xf32> to vector<32x256xbf16>
    %c0_11 = arith.constant 0 : index
    %c0_12 = arith.constant 0 : index
    %41 = vector.load %arg15[%c0_11, %c0_12] : memref<96x256xbf16, #tpu.memory_space<vmem>>, vector<32x256xbf16>
    tpu.vector_store %arg15[%c0_11, %c0_12], %40 {strides = array<i32>} : memref<96x256xbf16, #tpu.memory_space<vmem>>, vector<32x256xbf16>,
    %c1_i32_13 = arith.constant 1 : i32
    %42 = tpu.dynamic_rotate %8 by %c1_i32_13 dim 1 : vector<32x256xf32>, i32 -> vector<32x256xf32>
    %43 = arith.mulf %42, %29 : vector<32x256xf32>
    %44 = arith.truncf %43 : vector<32x256xf32> to vector<32x256xbf16>
    %c32 = arith.constant 32 : index
    %c0_14 = arith.constant 0 : index
    %45 = vector.load %arg15[%c32, %c0_14] : memref<96x256xbf16, #tpu.memory_space<vmem>>, vector<32x256xbf16>
    tpu.vector_store %arg15[%c32, %c0_14], %44 {strides = array<i32>} : memref<96x256xbf16, #tpu.memory_space<vmem>>, vector<32x256xbf16>,
    %46 = arith.truncf %8 : vector<32x256xf32> to vector<32x256xbf16>
    %c64 = arith.constant 64 : index
    %c0_15 = arith.constant 0 : index
    %47 = vector.load %arg15[%c64, %c0_15] : memref<96x256xbf16, #tpu.memory_space<vmem>>, vector<32x256xbf16>
    tpu.vector_store %arg15[%c64, %c0_15], %46 {strides = array<i32>} : memref<96x256xbf16, #tpu.memory_space<vmem>>, vector<32x256xbf16>,
    %c0_16 = arith.constant 0 : index
    %c0_17 = arith.constant 0 : index
    %c0_18 = arith.constant 0 : index
    %48 = vector.load %arg4[%c0_16, %c0_17, %c0_18] : memref<4x64x96xbf16, #tpu.memory_space<vmem>>, vector<1x64x96xbf16>
    %49 = vector.shape_cast %48 : vector<1x64x96xbf16> to vector<64x96xbf16>
    %c0_19 = arith.constant 0 : index
    %c0_20 = arith.constant 0 : index
    %50 = vector.load %arg15[%c0_19, %c0_20] : memref<96x256xbf16, #tpu.memory_space<vmem>>, vector<96x256xbf16>
    %cst = arith.constant dense<0.000000e+00> : vector<64x256xf32>
    %51 = tpu.matmul %49, %50, %cst {dimension_numbers = #tpu.dot_dimension_numbers<[1], [0], [0], [1], [0, 0, 1, 1], [], []>} : vector<64x96xbf16>, vector<96x256xbf16>, vector<64x256xf32> -> vector<64x256xf32>
    %c0_21 = arith.constant 0 : index
    %c0_22 = arith.constant 0 : index
    %c0_23 = arith.constant 0 : index
    %52 = vector.load %arg5[%c0_21, %c0_22, %c0_23] : memref<4x64x1xf32, #tpu.memory_space<vmem>>, vector<1x64x1xf32>
    %53 = vector.shape_cast %52 : vector<1x64x1xf32> to vector<64x1xf32>
    %54 = vector.broadcast %53 : vector<64x1xf32> to vector<64x256xf32>
    %55 = arith.addf %51, %54 : vector<64x256xf32>
    %56 = vector.extract_strided_slice %55 {offsets = [0, 0], sizes = [32, 256], strides = [1, 1]} : vector<64x256xf32> to vector<32x256xf32>
    %57 = math.tanh %56 : vector<32x256xf32>
    %58 = vector.extract_strided_slice %55 {offsets = [32, 0], sizes = [32, 256], strides = [1, 1]} : vector<64x256xf32> to vector<32x256xf32>
    %59 = arith.negf %58 : vector<32x256xf32>
    %60 = math.exp %59 : vector<32x256xf32>
    %cst_24 = arith.constant 1.000000e+00 : f32
    %61 = vector.broadcast %cst_24 : f32 to vector<32x256xf32>
    %62 = arith.addf %61, %60 : vector<32x256xf32>
    %63 = arith.divf %61, %62 : vector<32x256xf32>
    %64 = arith.mulf %57, %63 : vector<32x256xf32>
    %65 = arith.truncf %64 : vector<32x256xf32> to vector<32x256xbf16>
    %c0_25 = arith.constant 0 : index
    %c0_26 = arith.constant 0 : index
    %66 = vector.load %arg16[%c0_25, %c0_26] : memref<128x256xbf16, #tpu.memory_space<vmem>>, vector<32x256xbf16>
    tpu.vector_store %arg16[%c0_25, %c0_26], %65 {strides = array<i32>} : memref<128x256xbf16, #tpu.memory_space<vmem>>, vector<32x256xbf16>,
    %c0_27 = arith.constant 0 : index
    %c0_28 = arith.constant 0 : index
    %c0_29 = arith.constant 0 : index
    %67 = vector.load %arg6[%c0_27, %c0_28, %c0_29] : memref<4x32x32xbf16, #tpu.memory_space<vmem>>, vector<1x32x32xbf16>
    %68 = vector.shape_cast %67 : vector<1x32x32xbf16> to vector<32x32xbf16>
    %cst_30 = arith.constant dense<0.000000e+00> : vector<32x256xf32>
    %69 = tpu.matmul %68, %65, %cst_30 {dimension_numbers = #tpu.dot_dimension_numbers<[1], [0], [0], [1], [0, 0, 1, 1], [], []>} : vector<32x32xbf16>, vector<32x256xbf16>, vector<32x256xf32> -> vector<32x256xf32>
    %70 = arith.addf %8, %69 : vector<32x256xf32>
    %c0_31 = arith.constant 0 : index
    %c0_32 = arith.constant 0 : index
    %c0_33 = arith.constant 0 : index
    %71 = vector.load %arg7[%c0_31, %c0_32, %c0_33] : memref<4x32x1xf32, #tpu.memory_space<vmem>>, vector<1x32x1xf32>
    %72 = vector.shape_cast %71 : vector<1x32x1xf32> to vector<32x1xf32>
    %73 = vector.broadcast %72 : vector<32x1xf32> to vector<32x256xf32>
    %74 = arith.addf %70, %73 : vector<32x256xf32>
    %c4_i32_34 = arith.constant 4 : i32
    %75 = tpu.dynamic_rotate %74 by %c4_i32_34 dim 1 : vector<32x256xf32>, i32 -> vector<32x256xf32>
    %76 = arith.mulf %75, %37 : vector<32x256xf32>
    %77 = arith.truncf %76 : vector<32x256xf32> to vector<32x256xbf16>
    %c0_35 = arith.constant 0 : index
    %c0_36 = arith.constant 0 : index
    %78 = vector.load %arg15[%c0_35, %c0_36] : memref<96x256xbf16, #tpu.memory_space<vmem>>, vector<32x256xbf16>
    tpu.vector_store %arg15[%c0_35, %c0_36], %77 {strides = array<i32>} : memref<96x256xbf16, #tpu.memory_space<vmem>>, vector<32x256xbf16>,
    %c2_i32_37 = arith.constant 2 : i32
    %79 = tpu.dynamic_rotate %74 by %c2_i32_37 dim 1 : vector<32x256xf32>, i32 -> vector<32x256xf32>
    %80 = arith.mulf %79, %33 : vector<32x256xf32>
    %81 = arith.truncf %80 : vector<32x256xf32> to vector<32x256xbf16>
    %c32_38 = arith.constant 32 : index
    %c0_39 = arith.constant 0 : index
    %82 = vector.load %arg15[%c32_38, %c0_39] : memref<96x256xbf16, #tpu.memory_space<vmem>>, vector<32x256xbf16>
    tpu.vector_store %arg15[%c32_38, %c0_39], %81 {strides = array<i32>} : memref<96x256xbf16, #tpu.memory_space<vmem>>, vector<32x256xbf16>,
    %83 = arith.truncf %74 : vector<32x256xf32> to vector<32x256xbf16>
    %c64_40 = arith.constant 64 : index
    %c0_41 = arith.constant 0 : index
    %84 = vector.load %arg15[%c64_40, %c0_41] : memref<96x256xbf16, #tpu.memory_space<vmem>>, vector<32x256xbf16>
    tpu.vector_store %arg15[%c64_40, %c0_41], %83 {strides = array<i32>} : memref<96x256xbf16, #tpu.memory_space<vmem>>, vector<32x256xbf16>,
    %c1 = arith.constant 1 : index
    %c0_42 = arith.constant 0 : index
    %c0_43 = arith.constant 0 : index
    %85 = vector.load %arg4[%c1, %c0_42, %c0_43] : memref<4x64x96xbf16, #tpu.memory_space<vmem>>, vector<1x64x96xbf16>
    %86 = vector.shape_cast %85 : vector<1x64x96xbf16> to vector<64x96xbf16>
    %c0_44 = arith.constant 0 : index
    %c0_45 = arith.constant 0 : index
    %87 = vector.load %arg15[%c0_44, %c0_45] : memref<96x256xbf16, #tpu.memory_space<vmem>>, vector<96x256xbf16>
    %cst_46 = arith.constant dense<0.000000e+00> : vector<64x256xf32>
    %88 = tpu.matmul %86, %87, %cst_46 {dimension_numbers = #tpu.dot_dimension_numbers<[1], [0], [0], [1], [0, 0, 1, 1], [], []>} : vector<64x96xbf16>, vector<96x256xbf16>, vector<64x256xf32> -> vector<64x256xf32>
    %c1_47 = arith.constant 1 : index
    %c0_48 = arith.constant 0 : index
    %c0_49 = arith.constant 0 : index
    %89 = vector.load %arg5[%c1_47, %c0_48, %c0_49] : memref<4x64x1xf32, #tpu.memory_space<vmem>>, vector<1x64x1xf32>
    %90 = vector.shape_cast %89 : vector<1x64x1xf32> to vector<64x1xf32>
    %91 = vector.broadcast %90 : vector<64x1xf32> to vector<64x256xf32>
    %92 = arith.addf %88, %91 : vector<64x256xf32>
    %93 = vector.extract_strided_slice %92 {offsets = [0, 0], sizes = [32, 256], strides = [1, 1]} : vector<64x256xf32> to vector<32x256xf32>
    %94 = math.tanh %93 : vector<32x256xf32>
    %95 = vector.extract_strided_slice %92 {offsets = [32, 0], sizes = [32, 256], strides = [1, 1]} : vector<64x256xf32> to vector<32x256xf32>
    %96 = arith.negf %95 : vector<32x256xf32>
    %97 = math.exp %96 : vector<32x256xf32>
    %cst_50 = arith.constant 1.000000e+00 : f32
    %98 = vector.broadcast %cst_50 : f32 to vector<32x256xf32>
    %99 = arith.addf %98, %97 : vector<32x256xf32>
    %100 = arith.divf %98, %99 : vector<32x256xf32>
    %101 = arith.mulf %94, %100 : vector<32x256xf32>
    %102 = arith.truncf %101 : vector<32x256xf32> to vector<32x256xbf16>
    %c32_51 = arith.constant 32 : index
    %c0_52 = arith.constant 0 : index
    %103 = vector.load %arg16[%c32_51, %c0_52] : memref<128x256xbf16, #tpu.memory_space<vmem>>, vector<32x256xbf16>
    tpu.vector_store %arg16[%c32_51, %c0_52], %102 {strides = array<i32>} : memref<128x256xbf16, #tpu.memory_space<vmem>>, vector<32x256xbf16>,
    %c1_53 = arith.constant 1 : index
    %c0_54 = arith.constant 0 : index
    %c0_55 = arith.constant 0 : index
    %104 = vector.load %arg6[%c1_53, %c0_54, %c0_55] : memref<4x32x32xbf16, #tpu.memory_space<vmem>>, vector<1x32x32xbf16>
    %105 = vector.shape_cast %104 : vector<1x32x32xbf16> to vector<32x32xbf16>
    %cst_56 = arith.constant dense<0.000000e+00> : vector<32x256xf32>
    %106 = tpu.matmul %105, %102, %cst_56 {dimension_numbers = #tpu.dot_dimension_numbers<[1], [0], [0], [1], [0, 0, 1, 1], [], []>} : vector<32x32xbf16>, vector<32x256xbf16>, vector<32x256xf32> -> vector<32x256xf32>
    %107 = arith.addf %74, %106 : vector<32x256xf32>
    %c1_57 = arith.constant 1 : index
    %c0_58 = arith.constant 0 : index
    %c0_59 = arith.constant 0 : index
    %108 = vector.load %arg7[%c1_57, %c0_58, %c0_59] : memref<4x32x1xf32, #tpu.memory_space<vmem>>, vector<1x32x1xf32>
    %109 = vector.shape_cast %108 : vector<1x32x1xf32> to vector<32x1xf32>
    %110 = vector.broadcast %109 : vector<32x1xf32> to vector<32x256xf32>
    %111 = arith.addf %107, %110 : vector<32x256xf32>
    %c2_i32_60 = arith.constant 2 : i32
    %112 = tpu.dynamic_rotate %111 by %c2_i32_60 dim 1 : vector<32x256xf32>, i32 -> vector<32x256xf32>
    %113 = arith.mulf %112, %33 : vector<32x256xf32>
    %114 = arith.truncf %113 : vector<32x256xf32> to vector<32x256xbf16>
    %c0_61 = arith.constant 0 : index
    %c0_62 = arith.constant 0 : index
    %115 = vector.load %arg15[%c0_61, %c0_62] : memref<96x256xbf16, #tpu.memory_space<vmem>>, vector<32x256xbf16>
    tpu.vector_store %arg15[%c0_61, %c0_62], %114 {strides = array<i32>} : memref<96x256xbf16, #tpu.memory_space<vmem>>, vector<32x256xbf16>,
    %c1_i32_63 = arith.constant 1 : i32
    %116 = tpu.dynamic_rotate %111 by %c1_i32_63 dim 1 : vector<32x256xf32>, i32 -> vector<32x256xf32>
    %117 = arith.mulf %116, %29 : vector<32x256xf32>
    %118 = arith.truncf %117 : vector<32x256xf32> to vector<32x256xbf16>
    %c32_64 = arith.constant 32 : index
    %c0_65 = arith.constant 0 : index
    %119 = vector.load %arg15[%c32_64, %c0_65] : memref<96x256xbf16, #tpu.memory_space<vmem>>, vector<32x256xbf16>
    tpu.vector_store %arg15[%c32_64, %c0_65], %118 {strides = array<i32>} : memref<96x256xbf16, #tpu.memory_space<vmem>>, vector<32x256xbf16>,
    %120 = arith.truncf %111 : vector<32x256xf32> to vector<32x256xbf16>
    %c64_66 = arith.constant 64 : index
    %c0_67 = arith.constant 0 : index
    %121 = vector.load %arg15[%c64_66, %c0_67] : memref<96x256xbf16, #tpu.memory_space<vmem>>, vector<32x256xbf16>
    tpu.vector_store %arg15[%c64_66, %c0_67], %120 {strides = array<i32>} : memref<96x256xbf16, #tpu.memory_space<vmem>>, vector<32x256xbf16>,
    %c2 = arith.constant 2 : index
    %c0_68 = arith.constant 0 : index
    %c0_69 = arith.constant 0 : index
    %122 = vector.load %arg4[%c2, %c0_68, %c0_69] : memref<4x64x96xbf16, #tpu.memory_space<vmem>>, vector<1x64x96xbf16>
    %123 = vector.shape_cast %122 : vector<1x64x96xbf16> to vector<64x96xbf16>
    %c0_70 = arith.constant 0 : index
    %c0_71 = arith.constant 0 : index
    %124 = vector.load %arg15[%c0_70, %c0_71] : memref<96x256xbf16, #tpu.memory_space<vmem>>, vector<96x256xbf16>
    %cst_72 = arith.constant dense<0.000000e+00> : vector<64x256xf32>
    %125 = tpu.matmul %123, %124, %cst_72 {dimension_numbers = #tpu.dot_dimension_numbers<[1], [0], [0], [1], [0, 0, 1, 1], [], []>} : vector<64x96xbf16>, vector<96x256xbf16>, vector<64x256xf32> -> vector<64x256xf32>
    %c2_73 = arith.constant 2 : index
    %c0_74 = arith.constant 0 : index
    %c0_75 = arith.constant 0 : index
    %126 = vector.load %arg5[%c2_73, %c0_74, %c0_75] : memref<4x64x1xf32, #tpu.memory_space<vmem>>, vector<1x64x1xf32>
    %127 = vector.shape_cast %126 : vector<1x64x1xf32> to vector<64x1xf32>
    %128 = vector.broadcast %127 : vector<64x1xf32> to vector<64x256xf32>
    %129 = arith.addf %125, %128 : vector<64x256xf32>
    %130 = vector.extract_strided_slice %129 {offsets = [0, 0], sizes = [32, 256], strides = [1, 1]} : vector<64x256xf32> to vector<32x256xf32>
    %131 = math.tanh %130 : vector<32x256xf32>
    %132 = vector.extract_strided_slice %129 {offsets = [32, 0], sizes = [32, 256], strides = [1, 1]} : vector<64x256xf32> to vector<32x256xf32>
    %133 = arith.negf %132 : vector<32x256xf32>
    %134 = math.exp %133 : vector<32x256xf32>
    %cst_76 = arith.constant 1.000000e+00 : f32
    %135 = vector.broadcast %cst_76 : f32 to vector<32x256xf32>
    %136 = arith.addf %135, %134 : vector<32x256xf32>
    %137 = arith.divf %135, %136 : vector<32x256xf32>
    %138 = arith.mulf %131, %137 : vector<32x256xf32>
    %139 = arith.truncf %138 : vector<32x256xf32> to vector<32x256xbf16>
    %c64_77 = arith.constant 64 : index
    %c0_78 = arith.constant 0 : index
    %140 = vector.load %arg16[%c64_77, %c0_78] : memref<128x256xbf16, #tpu.memory_space<vmem>>, vector<32x256xbf16>
    tpu.vector_store %arg16[%c64_77, %c0_78], %139 {strides = array<i32>} : memref<128x256xbf16, #tpu.memory_space<vmem>>, vector<32x256xbf16>,
    %c2_79 = arith.constant 2 : index
    %c0_80 = arith.constant 0 : index
    %c0_81 = arith.constant 0 : index
    %141 = vector.load %arg6[%c2_79, %c0_80, %c0_81] : memref<4x32x32xbf16, #tpu.memory_space<vmem>>, vector<1x32x32xbf16>
    %142 = vector.shape_cast %141 : vector<1x32x32xbf16> to vector<32x32xbf16>
    %cst_82 = arith.constant dense<0.000000e+00> : vector<32x256xf32>
    %143 = tpu.matmul %142, %139, %cst_82 {dimension_numbers = #tpu.dot_dimension_numbers<[1], [0], [0], [1], [0, 0, 1, 1], [], []>} : vector<32x32xbf16>, vector<32x256xbf16>, vector<32x256xf32> -> vector<32x256xf32>
    %144 = arith.addf %111, %143 : vector<32x256xf32>
    %c2_83 = arith.constant 2 : index
    %c0_84 = arith.constant 0 : index
    %c0_85 = arith.constant 0 : index
    %145 = vector.load %arg7[%c2_83, %c0_84, %c0_85] : memref<4x32x1xf32, #tpu.memory_space<vmem>>, vector<1x32x1xf32>
    %146 = vector.shape_cast %145 : vector<1x32x1xf32> to vector<32x1xf32>
    %147 = vector.broadcast %146 : vector<32x1xf32> to vector<32x256xf32>
    %148 = arith.addf %144, %147 : vector<32x256xf32>
    %c4_i32_86 = arith.constant 4 : i32
    %149 = tpu.dynamic_rotate %148 by %c4_i32_86 dim 1 : vector<32x256xf32>, i32 -> vector<32x256xf32>
    %150 = arith.mulf %149, %37 : vector<32x256xf32>
    %151 = arith.truncf %150 : vector<32x256xf32> to vector<32x256xbf16>
    %c0_87 = arith.constant 0 : index
    %c0_88 = arith.constant 0 : index
    %152 = vector.load %arg15[%c0_87, %c0_88] : memref<96x256xbf16, #tpu.memory_space<vmem>>, vector<32x256xbf16>
    tpu.vector_store %arg15[%c0_87, %c0_88], %151 {strides = array<i32>} : memref<96x256xbf16, #tpu.memory_space<vmem>>, vector<32x256xbf16>,
    %c2_i32_89 = arith.constant 2 : i32
    %153 = tpu.dynamic_rotate %148 by %c2_i32_89 dim 1 : vector<32x256xf32>, i32 -> vector<32x256xf32>
    %154 = arith.mulf %153, %33 : vector<32x256xf32>
    %155 = arith.truncf %154 : vector<32x256xf32> to vector<32x256xbf16>
    %c32_90 = arith.constant 32 : index
    %c0_91 = arith.constant 0 : index
    %156 = vector.load %arg15[%c32_90, %c0_91] : memref<96x256xbf16, #tpu.memory_space<vmem>>, vector<32x256xbf16>
    tpu.vector_store %arg15[%c32_90, %c0_91], %155 {strides = array<i32>} : memref<96x256xbf16, #tpu.memory_space<vmem>>, vector<32x256xbf16>,
    %157 = arith.truncf %148 : vector<32x256xf32> to vector<32x256xbf16>
    %c64_92 = arith.constant 64 : index
    %c0_93 = arith.constant 0 : index
    %158 = vector.load %arg15[%c64_92, %c0_93] : memref<96x256xbf16, #tpu.memory_space<vmem>>, vector<32x256xbf16>
    tpu.vector_store %arg15[%c64_92, %c0_93], %157 {strides = array<i32>} : memref<96x256xbf16, #tpu.memory_space<vmem>>, vector<32x256xbf16>,
    %c3 = arith.constant 3 : index
    %c0_94 = arith.constant 0 : index
    %c0_95 = arith.constant 0 : index
    %159 = vector.load %arg4[%c3, %c0_94, %c0_95] : memref<4x64x96xbf16, #tpu.memory_space<vmem>>, vector<1x64x96xbf16>
    %160 = vector.shape_cast %159 : vector<1x64x96xbf16> to vector<64x96xbf16>
    %c0_96 = arith.constant 0 : index
    %c0_97 = arith.constant 0 : index
    %161 = vector.load %arg15[%c0_96, %c0_97] : memref<96x256xbf16, #tpu.memory_space<vmem>>, vector<96x256xbf16>
    %cst_98 = arith.constant dense<0.000000e+00> : vector<64x256xf32>
    %162 = tpu.matmul %160, %161, %cst_98 {dimension_numbers = #tpu.dot_dimension_numbers<[1], [0], [0], [1], [0, 0, 1, 1], [], []>} : vector<64x96xbf16>, vector<96x256xbf16>, vector<64x256xf32> -> vector<64x256xf32>
    %c3_99 = arith.constant 3 : index
    %c0_100 = arith.constant 0 : index
    %c0_101 = arith.constant 0 : index
    %163 = vector.load %arg5[%c3_99, %c0_100, %c0_101] : memref<4x64x1xf32, #tpu.memory_space<vmem>>, vector<1x64x1xf32>
    %164 = vector.shape_cast %163 : vector<1x64x1xf32> to vector<64x1xf32>
    %165 = vector.broadcast %164 : vector<64x1xf32> to vector<64x256xf32>
    %166 = arith.addf %162, %165 : vector<64x256xf32>
    %167 = vector.extract_strided_slice %166 {offsets = [0, 0], sizes = [32, 256], strides = [1, 1]} : vector<64x256xf32> to vector<32x256xf32>
    %168 = math.tanh %167 : vector<32x256xf32>
    %169 = vector.extract_strided_slice %166 {offsets = [32, 0], sizes = [32, 256], strides = [1, 1]} : vector<64x256xf32> to vector<32x256xf32>
    %170 = arith.negf %169 : vector<32x256xf32>
    %171 = math.exp %170 : vector<32x256xf32>
    %cst_102 = arith.constant 1.000000e+00 : f32
    %172 = vector.broadcast %cst_102 : f32 to vector<32x256xf32>
    %173 = arith.addf %172, %171 : vector<32x256xf32>
    %174 = arith.divf %172, %173 : vector<32x256xf32>
    %175 = arith.mulf %168, %174 : vector<32x256xf32>
    %176 = arith.truncf %175 : vector<32x256xf32> to vector<32x256xbf16>
    %c96 = arith.constant 96 : index
    %c0_103 = arith.constant 0 : index
    %177 = vector.load %arg16[%c96, %c0_103] : memref<128x256xbf16, #tpu.memory_space<vmem>>, vector<32x256xbf16>
    tpu.vector_store %arg16[%c96, %c0_103], %176 {strides = array<i32>} : memref<128x256xbf16, #tpu.memory_space<vmem>>, vector<32x256xbf16>,
    %c0_104 = arith.constant 0 : index
    %c0_105 = arith.constant 0 : index
    %178 = vector.load %arg8[%c0_104, %c0_105] : memref<32x128xbf16, #tpu.memory_space<vmem>>, vector<32x128xbf16>
    %c0_106 = arith.constant 0 : index
    %c0_107 = arith.constant 0 : index
    %179 = vector.load %arg16[%c0_106, %c0_107] : memref<128x256xbf16, #tpu.memory_space<vmem>>, vector<128x256xbf16>
    %cst_108 = arith.constant dense<0.000000e+00> : vector<32x256xf32>
    %180 = tpu.matmul %178, %179, %cst_108 {dimension_numbers = #tpu.dot_dimension_numbers<[1], [0], [0], [1], [0, 0, 1, 1], [], []>} : vector<32x128xbf16>, vector<128x256xbf16>, vector<32x256xf32> -> vector<32x256xf32>
    %c0_109 = arith.constant 0 : index
    %c0_110 = arith.constant 0 : index
    %181 = vector.load %arg9[%c0_109, %c0_110] : memref<32x1xf32, #tpu.memory_space<vmem>>, vector<32x1xf32>
    %182 = vector.broadcast %181 : vector<32x1xf32> to vector<32x256xf32>
    %183 = arith.addf %180, %182 : vector<32x256xf32>
    %c0_111 = arith.constant 0 : index
    %c0_112 = arith.constant 0 : index
    %184 = vector.load %arg10[%c0_111, %c0_112] : memref<32x32xbf16, #tpu.memory_space<vmem>>, vector<32x32xbf16>
    %cst_113 = arith.constant 0.000000e+00 : f32
    %185 = vector.broadcast %cst_113 : f32 to vector<32x256xf32>
    %186 = arith.maximumf %183, %185 : vector<32x256xf32>
    %187 = arith.truncf %186 : vector<32x256xf32> to vector<32x256xbf16>
    %cst_114 = arith.constant dense<0.000000e+00> : vector<32x256xf32>
    %188 = tpu.matmul %184, %187, %cst_114 {dimension_numbers = #tpu.dot_dimension_numbers<[1], [0], [0], [1], [0, 0, 1, 1], [], []>} : vector<32x32xbf16>, vector<32x256xbf16>, vector<32x256xf32> -> vector<32x256xf32>
    %c0_115 = arith.constant 0 : index
    %c0_116 = arith.constant 0 : index
    %189 = vector.load %arg11[%c0_115, %c0_116] : memref<32x1xf32, #tpu.memory_space<vmem>>, vector<32x1xf32>
    %190 = vector.broadcast %189 : vector<32x1xf32> to vector<32x256xf32>
    %191 = arith.addf %188, %190 : vector<32x256xf32>
    %c0_117 = arith.constant 0 : index
    %c0_118 = arith.constant 0 : index
    %192 = vector.load %arg12[%c0_117, %c0_118] : memref<32x32xbf16, #tpu.memory_space<vmem>>, vector<32x32xbf16>
    %cst_119 = arith.constant 0.000000e+00 : f32
    %193 = vector.broadcast %cst_119 : f32 to vector<32x256xf32>
    %194 = arith.maximumf %191, %193 : vector<32x256xf32>
    %195 = arith.truncf %194 : vector<32x256xf32> to vector<32x256xbf16>
    %cst_120 = arith.constant dense<0.000000e+00> : vector<32x256xf32>
    %196 = tpu.matmul %192, %195, %cst_120 {dimension_numbers = #tpu.dot_dimension_numbers<[1], [0], [0], [1], [0, 0, 1, 1], [], []>} : vector<32x32xbf16>, vector<32x256xbf16>, vector<32x256xf32> -> vector<32x256xf32>
    %c0_121 = arith.constant 0 : index
    %c0_122 = arith.constant 0 : index
    %197 = vector.load %arg13[%c0_121, %c0_122] : memref<32x1xf32, #tpu.memory_space<vmem>>, vector<32x1xf32>
    %198 = vector.broadcast %197 : vector<32x1xf32> to vector<32x256xf32>
    %199 = arith.addf %196, %198 : vector<32x256xf32>
    %cst_123 = arith.constant dense<0xFF800000> : vector<256xf32>
    %200 = vector.multi_reduction <maximumf>, %199, %cst_123 [0] : vector<32x256xf32> to vector<256xf32>
    %201 = vector.shape_cast %200 : vector<256xf32> to vector<1x256xf32>
    %202 = vector.broadcast %201 : vector<1x256xf32> to vector<32x256xf32>
    %203 = arith.subf %199, %202 : vector<32x256xf32>
    %204 = math.exp %203 : vector<32x256xf32>
    %cst_124 = arith.constant dense<0.000000e+00> : vector<256xf32>
    %205 = vector.multi_reduction <add>, %204, %cst_124 [0] : vector<32x256xf32> to vector<256xf32>
    %206 = vector.shape_cast %205 : vector<256xf32> to vector<1x256xf32>
    %207 = math.log %206 : vector<1x256xf32>
    %208 = arith.addf %207, %201 : vector<1x256xf32>
    %209 = vector.broadcast %208 : vector<1x256xf32> to vector<32x256xf32>
    %210 = arith.subf %199, %209 : vector<32x256xf32>
    %c0_125 = arith.constant 0 : index
    %c0_126 = arith.constant 0 : index
    %c0_127 = arith.constant 0 : index
    %211 = vector.load %arg14[%c0_125, %c0_126, %c0_127] : memref<1x32x256xf32, #tpu.memory_space<vmem>>, vector<1x32x256xf32>
    %212 = vector.shape_cast %211 : vector<1x32x256xf32> to vector<32x256xf32>
    %213 = vector.shape_cast %210 : vector<32x256xf32> to vector<1x32x256xf32>
    tpu.vector_store %arg14[%c0_125, %c0_126, %c0_127], %213 {strides = array<i32>} : memref<1x32x256xf32, #tpu.memory_space<vmem>>, vector<1x32x256xf32>,
    return
  }
  func.func @transform_0(%arg0: i32) -> (i32, i32, i32) {
    %c0_i32 = arith.constant 0 : i32
    %c0_i32_0 = arith.constant 0 : i32
    %c0_i32_1 = arith.constant 0 : i32
    return %arg0, %c0_i32, %c0_i32_0 : i32, i32, i32
  }
  func.func @transform_1(%arg0: i32) -> (i32, i32) {
    %c0_i32 = arith.constant 0 : i32
    %c0_i32_0 = arith.constant 0 : i32
    %c0_i32_1 = arith.constant 0 : i32
    return %c0_i32, %c0_i32_0 : i32, i32
  }
  func.func @transform_2(%arg0: i32) -> (i32, i32) {
    %c0_i32 = arith.constant 0 : i32
    %c0_i32_0 = arith.constant 0 : i32
    %c0_i32_1 = arith.constant 0 : i32
    return %c0_i32, %c0_i32_0 : i32, i32
  }
  func.func @transform_3(%arg0: i32) -> (i32, i32, i32) {
    %c0_i32 = arith.constant 0 : i32
    %c0_i32_0 = arith.constant 0 : i32
    %c0_i32_1 = arith.constant 0 : i32
    %c0_i32_2 = arith.constant 0 : i32
    return %c0_i32, %c0_i32_0, %c0_i32_1 : i32, i32, i32
  }
  func.func @transform_4(%arg0: i32) -> (i32, i32, i32) {
    %c0_i32 = arith.constant 0 : i32
    %c0_i32_0 = arith.constant 0 : i32
    %c0_i32_1 = arith.constant 0 : i32
    %c0_i32_2 = arith.constant 0 : i32
    return %c0_i32, %c0_i32_0, %c0_i32_1 : i32, i32, i32
  }
  func.func @transform_5(%arg0: i32) -> (i32, i32, i32) {
    %c0_i32 = arith.constant 0 : i32
    %c0_i32_0 = arith.constant 0 : i32
    %c0_i32_1 = arith.constant 0 : i32
    %c0_i32_2 = arith.constant 0 : i32
    return %c0_i32, %c0_i32_0, %c0_i32_1 : i32, i32, i32
  }
  func.func @transform_6(%arg0: i32) -> (i32, i32, i32) {
    %c0_i32 = arith.constant 0 : i32
    %c0_i32_0 = arith.constant 0 : i32
    %c0_i32_1 = arith.constant 0 : i32
    %c0_i32_2 = arith.constant 0 : i32
    return %c0_i32, %c0_i32_0, %c0_i32_1 : i32, i32, i32
  }
  func.func @transform_7(%arg0: i32) -> (i32, i32) {
    %c0_i32 = arith.constant 0 : i32
    %c0_i32_0 = arith.constant 0 : i32
    %c0_i32_1 = arith.constant 0 : i32
    return %c0_i32, %c0_i32_0 : i32, i32
  }
  func.func @transform_8(%arg0: i32) -> (i32, i32) {
    %c0_i32 = arith.constant 0 : i32
    %c0_i32_0 = arith.constant 0 : i32
    %c0_i32_1 = arith.constant 0 : i32
    return %c0_i32, %c0_i32_0 : i32, i32
  }
  func.func @transform_9(%arg0: i32) -> (i32, i32) {
    %c0_i32 = arith.constant 0 : i32
    %c0_i32_0 = arith.constant 0 : i32
    %c0_i32_1 = arith.constant 0 : i32
    return %c0_i32, %c0_i32_0 : i32, i32
  }
  func.func @transform_10(%arg0: i32) -> (i32, i32) {
    %c0_i32 = arith.constant 0 : i32
    %c0_i32_0 = arith.constant 0 : i32
    %c0_i32_1 = arith.constant 0 : i32
    return %c0_i32, %c0_i32_0 : i32, i32
  }
  func.func @transform_11(%arg0: i32) -> (i32, i32) {
    %c0_i32 = arith.constant 0 : i32
    %c0_i32_0 = arith.constant 0 : i32
    %c0_i32_1 = arith.constant 0 : i32
    return %c0_i32, %c0_i32_0 : i32, i32
  }
  func.func @transform_12(%arg0: i32) -> (i32, i32) {
    %c0_i32 = arith.constant 0 : i32
    %c0_i32_0 = arith.constant 0 : i32
    %c0_i32_1 = arith.constant 0 : i32
    return %c0_i32, %c0_i32_0 : i32, i32
  }
  func.func @transform_13(%arg0: i32) -> (i32, i32, i32) {
    %c0_i32 = arith.constant 0 : i32
    %c0_i32_0 = arith.constant 0 : i32
    %c0_i32_1 = arith.constant 0 : i32
    return %arg0, %c0_i32, %c0_i32_0 : i32, i32, i32
  }
}

</mosaic_0001>

<llo_original>
// kernel: tpu_custom_call.1
$region0: #{tpu_custom_call.1}
  #allocation0 [shape = 'u32[]', space=smem, size = 0x4, offset = 0x4, fixed_abs, tag = 'smem constant byte address 0x4 - core index']
  #allocation1 [shape = 'u32[144,128]{1,0:T(1,128)}', space=vmem, size = 0x12000, scoped, tag = 'internal scratch']
  #allocation2 [shape = 'bf16[96,256]{1,0:T(8,128)(2,1)}', space=vmem, size = 0xc000, scoped, tag = 'scratch operand']
  #allocation3 [shape = 'bf16[128,256]{1,0:T(8,128)(2,1)}', space=vmem, size = 0x10000, scoped, tag = 'scratch operand']
  %s0 = inlined_call_operand.vmem [shape: f32[1,1,256], index: 0, kind: input, shape index: {}]
  %s1 = inlined_call_operand.vmem [shape: f32[32,1], index: 1, kind: input, shape index: {}]
  %s2 = inlined_call_operand.vmem [shape: f32[32,1], index: 2, kind: input, shape index: {}]
  %s3 = inlined_call_operand.vmem [shape: bf16[4,64,96], index: 3, kind: input, shape index: {}]
  %s4 = inlined_call_operand.vmem [shape: f32[4,64,1], index: 4, kind: input, shape index: {}]
  %s5 = inlined_call_operand.vmem [shape: bf16[4,32,32], index: 5, kind: input, shape index: {}]
  %s6 = inlined_call_operand.vmem [shape: f32[4,32,1], index: 6, kind: input, shape index: {}]
  %s7 = inlined_call_operand.vmem [shape: bf16[32,128], index: 7, kind: input, shape index: {}]
  %s8 = inlined_call_operand.vmem [shape: f32[32,1], index: 8, kind: input, shape index: {}]
  %s9 = inlined_call_operand.vmem [shape: bf16[32,32], index: 9, kind: input, shape index: {}]
  %s10 = inlined_call_operand.vmem [shape: f32[32,1], index: 10, kind: input, shape index: {}]
  %s11 = inlined_call_operand.vmem [shape: bf16[32,32], index: 11, kind: input, shape index: {}]
  %s12 = inlined_call_operand.vmem [shape: f32[32,1], index: 12, kind: input, shape index: {}]
  %s13 = inlined_call_operand.hbm [shape: f32[1,32,256], index: 13, kind: output, shape index: {}]
  %s14 = sld [smem:[#allocation0]]
  $region62: #{tpu_custom_call.1} parent=0
    _
  %s16 = ssub.s32 1, %s14
  %s17 = scalar_select 0, %s16, %s14
  $region1: #{tpu_custom_call.1} parent=0
    #allocation4 [shape = 'u8[32768]{0}', space=vmem, size = 0x8000, scoped, tag = 'output window, operand 0, single buffered']
    #allocation5 [shape = 's32[1]{0}', space=sflag, size = 0x4, scoped, tag = 'scoped memory for tpu_custom_call.1']
    %18 = vsyncpa [#allocation5], 0
    // Predicated region
    $region2: #{tpu_custom_call.1} parent=1 // pred_check
      _
    $region3: #{tpu_custom_call.1} parent=1 // pred_check_branch
      %20 = sbr.rel (0) target = $region5
    $region4: #{tpu_custom_call.1} parent=1 // pred_region
      _
    $region5: #{tpu_custom_call.1} parent=1 // pred_fallthru
      _
    // Predicated region
    $region6: #{tpu_custom_call.1} parent=1 // pred_check
      _
    $region7: #{tpu_custom_call.1} parent=1 // pred_check_branch
      %22 = sbr.rel (0) target = $region9
    $region8: #{tpu_custom_call.1} parent=1 // pred_region
      _
    $region9: #{tpu_custom_call.1} parent=1 // pred_fallthru
      _
    // Predicated region
    $region10: #{tpu_custom_call.1} parent=1 // pred_check
      _
    $region11: #{tpu_custom_call.1} parent=1 // pred_check_branch
      %24 = sbr.rel (0) target = $region13
    $region12: #{tpu_custom_call.1} parent=1 // pred_region
      _
    $region13: #{tpu_custom_call.1} parent=1 // pred_fallthru
      _
    // Predicated region
    $region14: #{tpu_custom_call.1} parent=1 // pred_check
      _
    $region15: #{tpu_custom_call.1} parent=1 // pred_check_branch
      %26 = sbr.rel (0) target = $region17
    $region16: #{tpu_custom_call.1} parent=1 // pred_region
      _
    $region17: #{tpu_custom_call.1} parent=1 // pred_fallthru
      _
    // Predicated region
    $region18: #{tpu_custom_call.1} parent=1 // pred_check
      _
    $region19: #{tpu_custom_call.1} parent=1 // pred_check_branch
      %28 = sbr.rel (0) target = $region21
    $region20: #{tpu_custom_call.1} parent=1 // pred_region
      _
    $region21: #{tpu_custom_call.1} parent=1 // pred_fallthru
      _
    // Predicated region
    $region22: #{tpu_custom_call.1} parent=1 // pred_check
      _
    $region23: #{tpu_custom_call.1} parent=1 // pred_check_branch
      %30 = sbr.rel (0) target = $region25
    $region24: #{tpu_custom_call.1} parent=1 // pred_region
      _
    $region25: #{tpu_custom_call.1} parent=1 // pred_fallthru
      _
    // Predicated region
    $region26: #{tpu_custom_call.1} parent=1 // pred_check
      _
    $region27: #{tpu_custom_call.1} parent=1 // pred_check_branch
      %32 = sbr.rel (0) target = $region29
    $region28: #{tpu_custom_call.1} parent=1 // pred_region
      _
    $region29: #{tpu_custom_call.1} parent=1 // pred_fallthru
      _
    // Predicated region
    $region30: #{tpu_custom_call.1} parent=1 // pred_check
      _
    $region31: #{tpu_custom_call.1} parent=1 // pred_check_branch
      %34 = sbr.rel (0) target = $region33
    $region32: #{tpu_custom_call.1} parent=1 // pred_region
      _
    $region33: #{tpu_custom_call.1} parent=1 // pred_fallthru
      _
    // Predicated region
    $region34: #{tpu_custom_call.1} parent=1 // pred_check
      _
    $region35: #{tpu_custom_call.1} parent=1 // pred_check_branch
      %36 = sbr.rel (0) target = $region37
    $region36: #{tpu_custom_call.1} parent=1 // pred_region
      _
    $region37: #{tpu_custom_call.1} parent=1 // pred_fallthru
      _
    // Predicated region
    $region38: #{tpu_custom_call.1} parent=1 // pred_check
      _
    $region39: #{tpu_custom_call.1} parent=1 // pred_check_branch
      %38 = sbr.rel (0) target = $region41
    $region40: #{tpu_custom_call.1} parent=1 // pred_region
      _
    $region41: #{tpu_custom_call.1} parent=1 // pred_fallthru
      _
    // Predicated region
    $region42: #{tpu_custom_call.1} parent=1 // pred_check
      _
    $region43: #{tpu_custom_call.1} parent=1 // pred_check_branch
      %40 = sbr.rel (0) target = $region45
    $region44: #{tpu_custom_call.1} parent=1 // pred_region
      _
    $region45: #{tpu_custom_call.1} parent=1 // pred_fallthru
      _
    // Predicated region
    $region46: #{tpu_custom_call.1} parent=1 // pred_check
      _
    $region47: #{tpu_custom_call.1} parent=1 // pred_check_branch
      %42 = sbr.rel (0) target = $region49
    $region48: #{tpu_custom_call.1} parent=1 // pred_region
      _
    $region49: #{tpu_custom_call.1} parent=1 // pred_fallthru
      _
    // Predicated region
    $region50: #{tpu_custom_call.1} parent=1 // pred_check
      _
    $region51: #{tpu_custom_call.1} parent=1 // pred_check_branch
      %44 = sbr.rel (0) target = $region53
    $region52: #{tpu_custom_call.1} parent=1 // pred_region
      _
    $region53: #{tpu_custom_call.1} parent=1 // pred_fallthru
      _
    %v46 = vld [vmem:[%s0] sm:$0x3]
    %v47 = vld [vmem:[%s1] sm:$0xff]
    %v48 = vld [vmem:[%s1 + $0x8] sm:$0xff]
    %v49 = vld [vmem:[%s1 + $0x10] sm:$0xff]
    %v50 = vld [vmem:[%s1 + $0x18] sm:$0xff]
    %52 = vset.pattern.permute.xlu0 0
    %53 = vperm.xlu0 %52, %v47
    %v54 = vpop.permute.xlu0 %53
    %57 = vset.pattern.permute.xlu0 0
    %58 = vperm.xlu0 %57, %v48
    %v59 = vpop.permute.xlu0 %58
    %62 = vset.pattern.permute.xlu0 0
    %63 = vperm.xlu0 %62, %v49
    %v64 = vpop.permute.xlu0 %63
    %67 = vset.pattern.permute.xlu0 0
    %68 = vperm.xlu0 %67, %v50
    %v69 = vpop.permute.xlu0 %68
    %v72 = vlaneseq
    %v73 = vshrl.u32 %v72, 7
    %v74 = vsub.s32 0, %v73
    %v75 = vrot.slane %v46, %v74
    %v76 = vlaneseq
    %v77 = vshrl.u32 %v76, 7
    %v78 = vsub.s32 1, %v77
    %v79 = vrot.slane %v46, %v78
    %v82 = vmul.f32 %v54, %v75
    %v83 = vmul.f32 %v54, %v79
    %v84 = vmul.f32 %v59, %v75
    %v85 = vmul.f32 %v59, %v79
    %v86 = vmul.f32 %v64, %v75
    %v87 = vmul.f32 %v64, %v79
    %v88 = vmul.f32 %v69, %v75
    %v89 = vmul.f32 %v69, %v79
    %v90 = vld [vmem:[%s2] sm:$0xff]
    %v91 = vld [vmem:[%s2 + $0x8] sm:$0xff]
    %v92 = vld [vmem:[%s2 + $0x10] sm:$0xff]
    %v93 = vld [vmem:[%s2 + $0x18] sm:$0xff]
    %95 = vset.pattern.permute.xlu0 0
    %96 = vperm.xlu0 %95, %v90
    %v97 = vpop.permute.xlu0 %96
    %100 = vset.pattern.permute.xlu0 0
    %101 = vperm.xlu0 %100, %v91
    %v102 = vpop.permute.xlu0 %101
    %105 = vset.pattern.permute.xlu0 0
    %106 = vperm.xlu0 %105, %v92
    %v107 = vpop.permute.xlu0 %106
    %110 = vset.pattern.permute.xlu0 0
    %111 = vperm.xlu0 %110, %v93
    %v112 = vpop.permute.xlu0 %111
    %v114 = vadd.f32 %v82, %v97
    %v115 = vadd.f32 %v83, %v97
    %v116 = vadd.f32 %v84, %v102
    %v117 = vadd.f32 %v85, %v102
    %v118 = vadd.f32 %v86, %v107
    %v119 = vadd.f32 %v87, %v107
    %v120 = vadd.f32 %v88, %v112
    %v121 = vadd.f32 %v89, %v112
    %v122 = vlaneseq
    %v123 = vand.u32 %v122, 127
    %v124 = vadd.s32 %v123, 128
    %vm125 = vcmp.lt.s32.totalorder %v123, 0
    %v126 = vsub.s32 0, %v123
    %v127 = vsel %vm125, %v126, %v123
    %v128 = vshrl.u32 %v127, 7
    %v129 = vand.u32 %v127, 127
    %v130 = vsub.s32 0, %v129
    %v131 = vsel %vm125, %v130, %v129
    %vm132 = vcmp.lt.s32.totalorder %v124, 0
    %v133 = vsub.s32 0, %v124
    %v134 = vsel %vm132, %v133, %v124
    %v135 = vshrl.u32 %v134, 7
    %v136 = vand.u32 %v134, 127
    %v137 = vsub.s32 0, %v136
    %v138 = vsel %vm132, %v137, %v136
    %vm139 = vcmp.ne.s32.totalorder %v131, 0
    %vm140 = vcmp.ne.s32.totalorder %v138, 0
    %vm141 = vcmp.lt.s32.totalorder %v131, 0
    %vm142 = vcmp.lt.s32.totalorder %v138, 0
    %vm143 = vmand %vm141, %vm139
    %vm144 = vmand %vm142, %vm140
    %v145 = vadd.s32 %v131, 128
    %v146 = vadd.s32 %v138, 128
    %v147 = vsel %vm143, %v145, %v131
    %v148 = vsel %vm144, %v146, %v138
    %vm149 = vcmp.ge.s32.totalorder %v147, 1
    %vm150 = vcmp.ge.s32.totalorder %v148, 1
    %v151 = vsel %vm149, 1, 0
    %v152 = vsel %vm150, 1, 0
    %v153 = vcvt.s32.f32 %v151
    %v154 = vcvt.s32.f32 %v152
    %vm155 = vcmp.ge.s32.totalorder %v147, 2
    %vm156 = vcmp.ge.s32.totalorder %v148, 2
    %v157 = vsel %vm155, 1, 0
    %v158 = vsel %vm156, 1, 0
    %v159 = vcvt.s32.f32 %v157
    %v160 = vcvt.s32.f32 %v158
    %vm161 = vcmp.ge.s32.totalorder %v147, 4
    %vm162 = vcmp.ge.s32.totalorder %v148, 4
    %v163 = vsel %vm161, 1, 0
    %v164 = vsel %vm162, 1, 0
    %v165 = vcvt.s32.f32 %v163
    %v166 = vcvt.s32.f32 %v164
    %167 = vrot.lane.b32.xlu0 %v114, 2
    %v168 = vpop.permute.xlu0 %167
    %169 = vrot.lane.b32.xlu0 %v116, 2
    %v170 = vpop.permute.xlu0 %169
    %171 = vrot.lane.b32.xlu0 %v118, 2
    %v172 = vpop.permute.xlu0 %171
    %173 = vrot.lane.b32.xlu0 %v120, 2
    %v174 = vpop.permute.xlu0 %173
    %175 = vrot.lane.b32.xlu0 %v115, 2
    %v176 = vpop.permute.xlu0 %175
    %177 = vrot.lane.b32.xlu0 %v117, 2
    %v178 = vpop.permute.xlu0 %177
    %179 = vrot.lane.b32.xlu0 %v119, 2
    %v180 = vpop.permute.xlu0 %179
    %181 = vrot.lane.b32.xlu0 %v121, 2
    %v182 = vpop.permute.xlu0 %181
    %vm183 = vcmp.lt.s32.totalorder %v123, 2
    %v184 = vsel %vm183, %v168, %v176
    %v185 = vsel %vm183, %v170, %v178
    %v186 = vsel %vm183, %v172, %v180
    %v187 = vsel %vm183, %v174, %v182
    %v188 = vsel %vm183, %v176, %v168
    %v189 = vsel %vm183, %v178, %v170
    %v190 = vsel %vm183, %v180, %v172
    %v191 = vsel %vm183, %v182, %v174
    %v192 = vmul.f32 %v188, %v159
    %v193 = vmul.f32 %v184, %v160
    %v194 = vmul.f32 %v189, %v159
    %v195 = vmul.f32 %v185, %v160
    %v196 = vmul.f32 %v190, %v159
    %v197 = vmul.f32 %v186, %v160
    %v198 = vmul.f32 %v191, %v159
    %v199 = vmul.f32 %v187, %v160
    %v200 = vpack.c.bf16 %v194, %v192
    %v201 = vpack.c.bf16 %v195, %v193
    %v202 = vpack.c.bf16 %v198, %v196
    %v203 = vpack.c.bf16 %v199, %v197
    %v208 = vunpack.c.l.b16 %v200
    %v209 = vunpack.c.l.b16 %v201
    %v210 = vunpack.c.h.b16 %v200
    %v211 = vunpack.c.h.b16 %v201
    %v212 = vunpack.c.l.b16 %v202
    %v213 = vunpack.c.l.b16 %v203
    %v214 = vunpack.c.h.b16 %v202
    %v215 = vunpack.c.h.b16 %v203
    %v216 = vpack.c.b16 %v209, %v208
    %v217 = vpack.c.b16 %v211, %v210
    %v218 = vpack.c.b16 %v213, %v212
    %v219 = vpack.c.b16 %v215, %v214
    %224 = vst [vmem:[#allocation2] sm:$0xff] %v216
    %225 = vst [vmem:[#allocation2 + $0x8] sm:$0xff] %v217
    %226 = vst [vmem:[#allocation2 + $0x10] sm:$0xff] %v218
    %227 = vst [vmem:[#allocation2 + $0x18] sm:$0xff] %v219
    %228 = vrot.lane.b32.xlu0 %v114, 1
    %v229 = vpop.permute.xlu0 %228
    %230 = vrot.lane.b32.xlu0 %v116, 1
    %v231 = vpop.permute.xlu0 %230
    %232 = vrot.lane.b32.xlu0 %v118, 1
    %v233 = vpop.permute.xlu0 %232
    %234 = vrot.lane.b32.xlu0 %v120, 1
    %v235 = vpop.permute.xlu0 %234
    %236 = vrot.lane.b32.xlu0 %v115, 1
    %v237 = vpop.permute.xlu0 %236
    %238 = vrot.lane.b32.xlu0 %v117, 1
    %v239 = vpop.permute.xlu0 %238
    %240 = vrot.lane.b32.xlu0 %v119, 1
    %v241 = vpop.permute.xlu0 %240
    %242 = vrot.lane.b32.xlu0 %v121, 1
    %v243 = vpop.permute.xlu0 %242
    %vm244 = vcmp.lt.s32.totalorder %v123, 1
    %v245 = vsel %vm244, %v229, %v237
    %v246 = vsel %vm244, %v231, %v239
    %v247 = vsel %vm244, %v233, %v241
    %v248 = vsel %vm244, %v235, %v243
    %v249 = vsel %vm244, %v237, %v229
    %v250 = vsel %vm244, %v239, %v231
    %v251 = vsel %vm244, %v241, %v233
    %v252 = vsel %vm244, %v243, %v235
    %v253 = vmul.f32 %v249, %v153
    %v254 = vmul.f32 %v245, %v154
    %v255 = vmul.f32 %v250, %v153
    %v256 = vmul.f32 %v246, %v154
    %v257 = vmul.f32 %v251, %v153
    %v258 = vmul.f32 %v247, %v154
    %v259 = vmul.f32 %v252, %v153
    %v260 = vmul.f32 %v248, %v154
    %v261 = vpack.c.bf16 %v255, %v253
    %v262 = vpack.c.bf16 %v256, %v254
    %v263 = vpack.c.bf16 %v259, %v257
    %v264 = vpack.c.bf16 %v260, %v258
    %v269 = vunpack.c.l.b16 %v261
    %v270 = vunpack.c.l.b16 %v262
    %v271 = vunpack.c.h.b16 %v261
    %v272 = vunpack.c.h.b16 %v262
    %v273 = vunpack.c.l.b16 %v263
    %v274 = vunpack.c.l.b16 %v264
    %v275 = vunpack.c.h.b16 %v263
    %v276 = vunpack.c.h.b16 %v264
    %v277 = vpack.c.b16 %v270, %v269
    %v278 = vpack.c.b16 %v272, %v271
    %v279 = vpack.c.b16 %v274, %v273
    %v280 = vpack.c.b16 %v276, %v275
    %285 = vst [vmem:[#allocation2 + $0x20] sm:$0xff] %v277
    %286 = vst [vmem:[#allocation2 + $0x28] sm:$0xff] %v278
    %287 = vst [vmem:[#allocation2 + $0x30] sm:$0xff] %v279
    %288 = vst [vmem:[#allocation2 + $0x38] sm:$0xff] %v280
    %v289 = vpack.c.bf16 %v116, %v114
    %v290 = vpack.c.bf16 %v117, %v115
    %v291 = vpack.c.bf16 %v120, %v118
    %v292 = vpack.c.bf16 %v121, %v119
    %v297 = vunpack.c.l.b16 %v289
    %v298 = vunpack.c.l.b16 %v290
    %v299 = vunpack.c.h.b16 %v289
    %v300 = vunpack.c.h.b16 %v290
    %v301 = vunpack.c.l.b16 %v291
    %v302 = vunpack.c.l.b16 %v292
    %v303 = vunpack.c.h.b16 %v291
    %v304 = vunpack.c.h.b16 %v292
    %v305 = vpack.c.b16 %v298, %v297
    %v306 = vpack.c.b16 %v300, %v299
    %v307 = vpack.c.b16 %v302, %v301
    %v308 = vpack.c.b16 %v304, %v303
    %313 = vst [vmem:[#allocation2 + $0x40] sm:$0xff] %v305
    %314 = vst [vmem:[#allocation2 + $0x48] sm:$0xff] %v306
    %315 = vst [vmem:[#allocation2 + $0x50] sm:$0xff] %v307
    %316 = vst [vmem:[#allocation2 + $0x58] sm:$0xff] %v308
    %v317 = vld [vmem:[%s3] sm:$0xf]
    %v318 = vld [vmem:[%s3 + $0x4] sm:$0xf]
    %v319 = vld [vmem:[%s3 + $0x8] sm:$0xf]
    %v320 = vld [vmem:[%s3 + $0xc] sm:$0xf]
    %v321 = vld [vmem:[%s3 + $0x10] sm:$0xf]
    %v322 = vld [vmem:[%s3 + $0x14] sm:$0xf]
    %v323 = vld [vmem:[%s3 + $0x18] sm:$0xf]
    %v324 = vld [vmem:[%s3 + $0x1c] sm:$0xf]
    %v325 = vld [vmem:[#allocation2] sm:$0xff]
    %v326 = vld [vmem:[#allocation2 + $0x8] sm:$0xff]
    %v327 = vld [vmem:[#allocation2 + $0x10] sm:$0xff]
    %v328 = vld [vmem:[#allocation2 + $0x18] sm:$0xff]
    %v329 = vld [vmem:[#allocation2 + $0x20] sm:$0xff]
    %v330 = vld [vmem:[#allocation2 + $0x28] sm:$0xff]
    %v331 = vld [vmem:[#allocation2 + $0x30] sm:$0xff]
    %v332 = vld [vmem:[#allocation2 + $0x38] sm:$0xff]
    %v333 = vld [vmem:[#allocation2 + $0x40] sm:$0xff]
    %v334 = vld [vmem:[#allocation2 + $0x48] sm:$0xff]
    %v335 = vld [vmem:[#allocation2 + $0x50] sm:$0xff]
    %v336 = vld [vmem:[#allocation2 + $0x58] sm:$0xff]
    %v337 = vld [vmem:[%s4] sm:$0xff]
    %v338 = vld [vmem:[%s4 + $0x8] sm:$0xff]
    %v339 = vld [vmem:[%s4 + $0x10] sm:$0xff]
    %v340 = vld [vmem:[%s4 + $0x18] sm:$0xff]
    %v341 = vld [vmem:[%s4 + $0x20] sm:$0xff]
    %v342 = vld [vmem:[%s4 + $0x28] sm:$0xff]
    %v343 = vld [vmem:[%s4 + $0x30] sm:$0xff]
    %v344 = vld [vmem:[%s4 + $0x38] sm:$0xff]
    %346 = vset.pattern.permute.xlu0 0
    %347 = vperm.xlu0 %346, %v337
    %v348 = vpop.permute.xlu0 %347
    %351 = vset.pattern.permute.xlu0 0
    %352 = vperm.xlu0 %351, %v338
    %v353 = vpop.permute.xlu0 %352
    %356 = vset.pattern.permute.xlu0 0
    %357 = vperm.xlu0 %356, %v339
    %v358 = vpop.permute.xlu0 %357
    %361 = vset.pattern.permute.xlu0 0
    %362 = vperm.xlu0 %361, %v340
    %v363 = vpop.permute.xlu0 %362
    %366 = vset.pattern.permute.xlu0 0
    %367 = vperm.xlu0 %366, %v341
    %v368 = vpop.permute.xlu0 %367
    %371 = vset.pattern.permute.xlu0 0
    %372 = vperm.xlu0 %371, %v342
    %v373 = vpop.permute.xlu0 %372
    %376 = vset.pattern.permute.xlu0 0
    %377 = vperm.xlu0 %376, %v343
    %v378 = vpop.permute.xlu0 %377
    %381 = vset.pattern.permute.xlu0 0
    %382 = vperm.xlu0 %381, %v344
    %v383 = vpop.permute.xlu0 %382
    %v393 = vunpack.c.l.b16 %v317
    %v394 = vunpack.c.l.b16 %v318
    %v395 = vunpack.c.l.b16 %v319
    %v396 = vunpack.c.l.b16 %v320
    %v397 = vunpack.c.l.b16 %v321
    %v398 = vunpack.c.l.b16 %v322
    %v399 = vunpack.c.l.b16 %v323
    %v400 = vunpack.c.l.b16 %v324
    %v401 = vpack.c.b16 %v394, %v393
    %v402 = vpack.c.b16 %v396, %v395
    %v403 = vpack.c.b16 %v398, %v397
    %v404 = vpack.c.b16 %v400, %v399
    %v417 = vunpack.c.l.b16 %v325
    %v418 = vunpack.c.h.b16 %v325
    %v419 = vunpack.c.l.b16 %v326
    %v420 = vunpack.c.h.b16 %v326
    %v421 = vunpack.c.l.b16 %v327
    %v422 = vunpack.c.h.b16 %v327
    %v423 = vunpack.c.l.b16 %v328
    %v424 = vunpack.c.h.b16 %v328
    %v425 = vunpack.c.l.b16 %v329
    %v426 = vunpack.c.h.b16 %v329
    %v427 = vunpack.c.l.b16 %v330
    %v428 = vunpack.c.h.b16 %v330
    %v429 = vunpack.c.l.b16 %v331
    %v430 = vunpack.c.h.b16 %v331
    %v431 = vunpack.c.l.b16 %v332
    %v432 = vunpack.c.h.b16 %v332
    %v433 = vunpack.c.l.b16 %v333
    %v434 = vunpack.c.h.b16 %v333
    %v435 = vunpack.c.l.b16 %v334
    %v436 = vunpack.c.h.b16 %v334
    %v437 = vunpack.c.l.b16 %v335
    %v438 = vunpack.c.h.b16 %v335
    %v439 = vunpack.c.l.b16 %v336
    %v440 = vunpack.c.h.b16 %v336
    %v441 = vpack.c.b16 %v419, %v417
    %v442 = vpack.c.b16 %v420, %v418
    %v443 = vpack.c.b16 %v423, %v421
    %v444 = vpack.c.b16 %v424, %v422
    %v445 = vpack.c.b16 %v427, %v425
    %v446 = vpack.c.b16 %v428, %v426
    %v447 = vpack.c.b16 %v431, %v429
    %v448 = vpack.c.b16 %v432, %v430
    %v449 = vpack.c.b16 %v435, %v433
    %v450 = vpack.c.b16 %v436, %v434
    %v451 = vpack.c.b16 %v439, %v437
    %v452 = vpack.c.b16 %v440, %v438
    %vm465 = vcmask 785408
    %v467 = vsel %vm465, %v401, 0
    %v470 = vsel %vm465, %v402, 0
    %v473 = vsel %vm465, %v403, 0
    %v476 = vsel %vm465, %v404, 0
    %478 = vmatprep.subr.bf16.mxu0 0
    %479 = vmatpush1.bf16.msra.mxu0 0
    %480 = vmatprep.subr.bf16.mxu0 0
    %481 = vmatpush1.bf16.msra.mxu0 0
    %482 = vmatprep.subr.bf16.mxu0 %v452
    %483 = vmatpush1.bf16.msra.mxu0 %v451
    %484 = vmatprep.subr.bf16.mxu0 %v450
    %485 = vmatpush1.bf16.msra.mxu0 %v449
    %486 = vmatprep.subr.bf16.mxu0 %v448
    %487 = vmatpush1.bf16.msra.mxu0 %v447
    %488 = vmatprep.subr.bf16.mxu0 %v446
    %489 = vmatpush1.bf16.msra.mxu0 %v445
    %490 = vmatprep.subr.bf16.mxu0 %v444
    %491 = vmatpush1.bf16.msra.mxu0 %v443
    %492 = vmatprep.subr.bf16.mxu0 %v442
    %493 = vmatpush1.bf16.msra.mxu0 %v441
    %494 = vmatprep.subr.bf16.mxu0 0
    %495 = vmatpush2.bf16.msra.mxu0 0
    %496 = vmatprep.subr.bf16.mxu0 0
    %497 = vmatpush2.bf16.msra.mxu0 0
    %498 = vmatprep.subr.bf16.mxu0 0
    %499 = vmatpush2.bf16.msra.mxu0 0
    %500 = vmatprep.subr.bf16.mxu0 0
    %501 = vmatpush2.bf16.msra.mxu0 0
    %502 = vmatprep.subr.bf16.mxu0 0
    %503 = vmatpush2.bf16.msra.mxu0 0
    %504 = vmatprep.subr.bf16.mxu0 0
    %505 = vmatpush2.bf16.msra.mxu0 0
    %506 = vmatprep.subr.bf16.mxu0 0
    %507 = vmatpush2.bf16.msra.mxu0 0
    %508 = vmatprep.subr.bf16.mxu0 0
    %509 = vmatpush2.bf16.msra.mxu0 0
    %510 = vmatprep.mubr.bf16.mxu0 0
    %511 = vmatmul.mubr.bf16.gmra.mxu0 %v467
    %v512 = vpop.f32.mrf.mxu0
    %v513 = vadd.f32 %v348, %v512
    %v514 = vpop.f32.mrf.mxu0
    %v515 = vadd.f32 %v348, %v514
    %v516 = vpop.f32.mrf.mxu0
    %v517 = vadd.f32 %v353, %v516
    %v518 = vpop.f32.mrf.mxu0
    %v519 = vadd.f32 %v353, %v518
    %520 = vmatprep.mubr.bf16.mxu0 0
    %521 = vmatmul.mubr.bf16.gmra.mxu0 %v470
    %v522 = vpop.f32.mrf.mxu0
    %v523 = vadd.f32 %v358, %v522
    %v524 = vpop.f32.mrf.mxu0
    %v525 = vadd.f32 %v358, %v524
    %v526 = vpop.f32.mrf.mxu0
    %v527 = vadd.f32 %v363, %v526
    %v528 = vpop.f32.mrf.mxu0
    %v529 = vadd.f32 %v363, %v528
    %530 = vmatprep.mubr.bf16.mxu0 0
    %531 = vmatmul.mubr.bf16.gmra.mxu0 %v473
    %v532 = vpop.f32.mrf.mxu0
    %v533 = vadd.f32 %v368, %v532
    %v534 = vpop.f32.mrf.mxu0
    %v535 = vadd.f32 %v368, %v534
    %v536 = vpop.f32.mrf.mxu0
    %v537 = vadd.f32 %v373, %v536
    %v538 = vpop.f32.mrf.mxu0
    %v539 = vadd.f32 %v373, %v538
    %540 = vmatprep.mubr.bf16.mxu0 0
    %541 = vmatmul.mubr.bf16.gmra.mxu0 %v476
    %v542 = vpop.f32.mrf.mxu0
    %v543 = vadd.f32 %v378, %v542
    %v544 = vpop.f32.mrf.mxu0
    %v545 = vadd.f32 %v378, %v544
    %v546 = vpop.f32.mrf.mxu0
    %v547 = vadd.f32 %v383, %v546
    %v548 = vpop.f32.mrf.mxu0
    %v549 = vadd.f32 %v383, %v548
    %550 = vdwg.mxu0
    %v551 = vtanh.pop %v513
    %v552 = vtanh.pop %v515
    %v553 = vtanh.pop %v517
    %v554 = vtanh.pop %v519
    %v555 = vtanh.pop %v523
    %v556 = vtanh.pop %v525
    %v557 = vtanh.pop %v527
    %v558 = vtanh.pop %v529
    %v559 = vxor.u32 %v533, 2147483648
    %v560 = vxor.u32 %v535, 2147483648
    %v561 = vxor.u32 %v537, 2147483648
    %v562 = vxor.u32 %v539, 2147483648
    %v563 = vxor.u32 %v543, 2147483648
    %v564 = vxor.u32 %v545, 2147483648
    %v565 = vxor.u32 %v547, 2147483648
    %v566 = vxor.u32 %v549, 2147483648
    %v567 = vmul.f32 %v559, 1.442695
    %v568 = vpow.pop %v567
    %v569 = vmul.f32 %v560, 1.442695
    %v570 = vpow.pop %v569
    %v571 = vmul.f32 %v561, 1.442695
    %v572 = vpow.pop %v571
    %v573 = vmul.f32 %v562, 1.442695
    %v574 = vpow.pop %v573
    %v575 = vmul.f32 %v563, 1.442695
    %v576 = vpow.pop %v575
    %v577 = vmul.f32 %v564, 1.442695
    %v578 = vpow.pop %v577
    %v579 = vmul.f32 %v565, 1.442695
    %v580 = vpow.pop %v579
    %v581 = vmul.f32 %v566, 1.442695
    %v582 = vpow.pop %v581
    %v583 = vadd.f32 %v568, 1.0
    %v584 = vadd.f32 %v570, 1.0
    %v585 = vadd.f32 %v572, 1.0
    %v586 = vadd.f32 %v574, 1.0
    %v587 = vadd.f32 %v576, 1.0
    %v588 = vadd.f32 %v578, 1.0
    %v589 = vadd.f32 %v580, 1.0
    %v590 = vadd.f32 %v582, 1.0
    %v591 = vrcp.pop %v583
    %v592 = vmul.f32 1.0, %v591
    %v593 = vrcp.pop %v584
    %v594 = vmul.f32 1.0, %v593
    %v595 = vrcp.pop %v585
    %v596 = vmul.f32 1.0, %v595
    %v597 = vrcp.pop %v586
    %v598 = vmul.f32 1.0, %v597
    %v599 = vrcp.pop %v587
    %v600 = vmul.f32 1.0, %v599
    %v601 = vrcp.pop %v588
    %v602 = vmul.f32 1.0, %v601
    %v603 = vrcp.pop %v589
    %v604 = vmul.f32 1.0, %v603
    %v605 = vrcp.pop %v590
    %v606 = vmul.f32 1.0, %v605
    %v607 = vmul.f32 %v551, %v592
    %v608 = vmul.f32 %v552, %v594
    %v609 = vmul.f32 %v553, %v596
    %v610 = vmul.f32 %v554, %v598
    %v611 = vmul.f32 %v555, %v600
    %v612 = vmul.f32 %v556, %v602
    %v613 = vmul.f32 %v557, %v604
    %v614 = vmul.f32 %v558, %v606
    %v615 = vpack.c.bf16 %v609, %v607
    %v616 = vpack.c.bf16 %v610, %v608
    %v617 = vpack.c.bf16 %v613, %v611
    %v618 = vpack.c.bf16 %v614, %v612
    %v623 = vunpack.c.l.b16 %v615
    %v624 = vunpack.c.l.b16 %v616
    %v625 = vunpack.c.h.b16 %v615
    %v626 = vunpack.c.h.b16 %v616
    %v627 = vunpack.c.l.b16 %v617
    %v628 = vunpack.c.l.b16 %v618
    %v629 = vunpack.c.h.b16 %v617
    %v630 = vunpack.c.h.b16 %v618
    %v631 = vpack.c.b16 %v624, %v623
    %v632 = vpack.c.b16 %v626, %v625
    %v633 = vpack.c.b16 %v628, %v627
    %v634 = vpack.c.b16 %v630, %v629
    %639 = vst [vmem:[#allocation3] sm:$0xff] %v631
    %640 = vst [vmem:[#allocation3 + $0x8] sm:$0xff] %v632
    %641 = vst [vmem:[#allocation3 + $0x10] sm:$0xff] %v633
    %642 = vst [vmem:[#allocation3 + $0x18] sm:$0xff] %v634
    %v643 = vld [vmem:[%s5] sm:$0xf]
    %v644 = vld [vmem:[%s5 + $0x4] sm:$0xf]
    %v645 = vld [vmem:[%s5 + $0x8] sm:$0xf]
    %v646 = vld [vmem:[%s5 + $0xc] sm:$0xf]
    %v651 = vunpack.c.l.b16 %v643
    %v652 = vunpack.c.l.b16 %v644
    %v653 = vunpack.c.l.b16 %v645
    %v654 = vunpack.c.l.b16 %v646
    %v655 = vpack.c.b16 %v652, %v651
    %v656 = vpack.c.b16 %v654, %v653
    %vm657 = vcmask 261120
    %v659 = vsel %vm657, %v655, 0
    %v662 = vsel %vm657, %v656, 0
    %664 = vmatprep.subr.bf16.mxu0 0
    %665 = vmatpush1.bf16.msra.mxu0 0
    %666 = vmatprep.subr.bf16.mxu0 0
    %667 = vmatpush1.bf16.msra.mxu0 0
    %668 = vmatprep.subr.bf16.mxu0 0
    %669 = vmatpush1.bf16.msra.mxu0 0
    %670 = vmatprep.subr.bf16.mxu0 0
    %671 = vmatpush1.bf16.msra.mxu0 0
    %672 = vmatprep.subr.bf16.mxu0 0
    %673 = vmatpush1.bf16.msra.mxu0 0
    %674 = vmatprep.subr.bf16.mxu0 0
    %675 = vmatpush1.bf16.msra.mxu0 0
    %676 = vmatprep.subr.bf16.mxu0 %v618
    %677 = vmatpush1.bf16.msra.mxu0 %v617
    %678 = vmatprep.subr.bf16.mxu0 %v616
    %679 = vmatpush1.bf16.msra.mxu0 %v615
    %680 = vmatprep.subr.bf16.mxu0 0
    %681 = vmatpush2.bf16.msra.mxu0 0
    %682 = vmatprep.subr.bf16.mxu0 0
    %683 = vmatpush2.bf16.msra.mxu0 0
    %684 = vmatprep.subr.bf16.mxu0 0
    %685 = vmatpush2.bf16.msra.mxu0 0
    %686 = vmatprep.subr.bf16.mxu0 0
    %687 = vmatpush2.bf16.msra.mxu0 0
    %688 = vmatprep.subr.bf16.mxu0 0
    %689 = vmatpush2.bf16.msra.mxu0 0
    %690 = vmatprep.subr.bf16.mxu0 0
    %691 = vmatpush2.bf16.msra.mxu0 0
    %692 = vmatprep.subr.bf16.mxu0 0
    %693 = vmatpush2.bf16.msra.mxu0 0
    %694 = vmatprep.subr.bf16.mxu0 0
    %695 = vmatpush2.bf16.msra.mxu0 0
    %696 = vmatprep.mubr.bf16.mxu0 0
    %697 = vmatmul.mubr.bf16.gmra.mxu0 %v659
    %v698 = vpop.f32.mrf.mxu0
    %v699 = vadd.f32 0.0, %v698
    %v700 = vpop.f32.mrf.mxu0
    %v701 = vadd.f32 0.0, %v700
    %v702 = vpop.f32.mrf.mxu0
    %v703 = vadd.f32 0.0, %v702
    %v704 = vpop.f32.mrf.mxu0
    %v705 = vadd.f32 0.0, %v704
    %706 = vmatprep.mubr.bf16.mxu0 0
    %707 = vmatmul.mubr.bf16.gmra.mxu0 %v662
    %v708 = vpop.f32.mrf.mxu0
    %v709 = vadd.f32 0.0, %v708
    %v710 = vpop.f32.mrf.mxu0
    %v711 = vadd.f32 0.0, %v710
    %v712 = vpop.f32.mrf.mxu0
    %v713 = vadd.f32 0.0, %v712
    %v714 = vpop.f32.mrf.mxu0
    %v715 = vadd.f32 0.0, %v714
    %716 = vdwg.mxu0
    %v717 = vadd.f32 %v114, %v699
    %v718 = vadd.f32 %v115, %v701
    %v719 = vadd.f32 %v116, %v703
    %v720 = vadd.f32 %v117, %v705
    %v721 = vadd.f32 %v118, %v709
    %v722 = vadd.f32 %v119, %v711
    %v723 = vadd.f32 %v120, %v713
    %v724 = vadd.f32 %v121, %v715
    %v725 = vld [vmem:[%s6] sm:$0xff]
    %v726 = vld [vmem:[%s6 + $0x8] sm:$0xff]
    %v727 = vld [vmem:[%s6 + $0x10] sm:$0xff]
    %v728 = vld [vmem:[%s6 + $0x18] sm:$0xff]
    %730 = vset.pattern.permute.xlu0 0
    %731 = vperm.xlu0 %730, %v725
    %v732 = vpop.permute.xlu0 %731
    %735 = vset.pattern.permute.xlu0 0
    %736 = vperm.xlu0 %735, %v726
    %v737 = vpop.permute.xlu0 %736
    %740 = vset.pattern.permute.xlu0 0
    %741 = vperm.xlu0 %740, %v727
    %v742 = vpop.permute.xlu0 %741
    %745 = vset.pattern.permute.xlu0 0
    %746 = vperm.xlu0 %745, %v728
    %v747 = vpop.permute.xlu0 %746
    %v749 = vadd.f32 %v717, %v732
    %v750 = vadd.f32 %v718, %v732
    %v751 = vadd.f32 %v719, %v737
    %v752 = vadd.f32 %v720, %v737
    %v753 = vadd.f32 %v721, %v742
    %v754 = vadd.f32 %v722, %v742
    %v755 = vadd.f32 %v723, %v747
    %v756 = vadd.f32 %v724, %v747
    %757 = vrot.lane.b32.xlu0 %v749, 4
    %v758 = vpop.permute.xlu0 %757
    %759 = vrot.lane.b32.xlu0 %v751, 4
    %v760 = vpop.permute.xlu0 %759
    %761 = vrot.lane.b32.xlu0 %v753, 4
    %v762 = vpop.permute.xlu0 %761
    %763 = vrot.lane.b32.xlu0 %v755, 4
    %v764 = vpop.permute.xlu0 %763
    %765 = vrot.lane.b32.xlu0 %v750, 4
    %v766 = vpop.permute.xlu0 %765
    %767 = vrot.lane.b32.xlu0 %v752, 4
    %v768 = vpop.permute.xlu0 %767
    %769 = vrot.lane.b32.xlu0 %v754, 4
    %v770 = vpop.permute.xlu0 %769
    %771 = vrot.lane.b32.xlu0 %v756, 4
    %v772 = vpop.permute.xlu0 %771
    %vm773 = vcmp.lt.s32.totalorder %v123, 4
    %v774 = vsel %vm773, %v758, %v766
    %v775 = vsel %vm773, %v760, %v768
    %v776 = vsel %vm773, %v762, %v770
    %v777 = vsel %vm773, %v764, %v772
    %v778 = vsel %vm773, %v766, %v758
    %v779 = vsel %vm773, %v768, %v760
    %v780 = vsel %vm773, %v770, %v762
    %v781 = vsel %vm773, %v772, %v764
    %v782 = vmul.f32 %v778, %v165
    %v783 = vmul.f32 %v774, %v166
    %v784 = vmul.f32 %v779, %v165
    %v785 = vmul.f32 %v775, %v166
    %v786 = vmul.f32 %v780, %v165
    %v787 = vmul.f32 %v776, %v166
    %v788 = vmul.f32 %v781, %v165
    %v789 = vmul.f32 %v777, %v166
    %v790 = vpack.c.bf16 %v784, %v782
    %v791 = vpack.c.bf16 %v785, %v783
    %v792 = vpack.c.bf16 %v788, %v786
    %v793 = vpack.c.bf16 %v789, %v787
    %v798 = vunpack.c.l.b16 %v790
    %v799 = vunpack.c.l.b16 %v791
    %v800 = vunpack.c.h.b16 %v790
    %v801 = vunpack.c.h.b16 %v791
    %v802 = vunpack.c.l.b16 %v792
    %v803 = vunpack.c.l.b16 %v793
    %v804 = vunpack.c.h.b16 %v792
    %v805 = vunpack.c.h.b16 %v793
    %v806 = vpack.c.b16 %v799, %v798
    %v807 = vpack.c.b16 %v801, %v800
    %v808 = vpack.c.b16 %v803, %v802
    %v809 = vpack.c.b16 %v805, %v804
    %814 = vst [vmem:[#allocation2] sm:$0xff] %v806
    %815 = vst [vmem:[#allocation2 + $0x8] sm:$0xff] %v807
    %816 = vst [vmem:[#allocation2 + $0x10] sm:$0xff] %v808
    %817 = vst [vmem:[#allocation2 + $0x18] sm:$0xff] %v809
    %818 = vrot.lane.b32.xlu0 %v749, 2
    %v819 = vpop.permute.xlu0 %818
    %820 = vrot.lane.b32.xlu0 %v751, 2
    %v821 = vpop.permute.xlu0 %820
    %822 = vrot.lane.b32.xlu0 %v753, 2
    %v823 = vpop.permute.xlu0 %822
    %824 = vrot.lane.b32.xlu0 %v755, 2
    %v825 = vpop.permute.xlu0 %824
    %826 = vrot.lane.b32.xlu0 %v750, 2
    %v827 = vpop.permute.xlu0 %826
    %828 = vrot.lane.b32.xlu0 %v752, 2
    %v829 = vpop.permute.xlu0 %828
    %830 = vrot.lane.b32.xlu0 %v754, 2
    %v831 = vpop.permute.xlu0 %830
    %832 = vrot.lane.b32.xlu0 %v756, 2
    %v833 = vpop.permute.xlu0 %832
    %v834 = vsel %vm183, %v819, %v827
    %v835 = vsel %vm183, %v821, %v829
    %v836 = vsel %vm183, %v823, %v831
    %v837 = vsel %vm183, %v825, %v833
    %v838 = vsel %vm183, %v827, %v819
    %v839 = vsel %vm183, %v829, %v821
    %v840 = vsel %vm183, %v831, %v823
    %v841 = vsel %vm183, %v833, %v825
    %v842 = vmul.f32 %v838, %v159
    %v843 = vmul.f32 %v834, %v160
    %v844 = vmul.f32 %v839, %v159
    %v845 = vmul.f32 %v835, %v160
    %v846 = vmul.f32 %v840, %v159
    %v847 = vmul.f32 %v836, %v160
    %v848 = vmul.f32 %v841, %v159
    %v849 = vmul.f32 %v837, %v160
    %v850 = vpack.c.bf16 %v844, %v842
    %v851 = vpack.c.bf16 %v845, %v843
    %v852 = vpack.c.bf16 %v848, %v846
    %v853 = vpack.c.bf16 %v849, %v847
    %v858 = vunpack.c.l.b16 %v850
    %v859 = vunpack.c.l.b16 %v851
    %v860 = vunpack.c.h.b16 %v850
    %v861 = vunpack.c.h.b16 %v851
    %v862 = vunpack.c.l.b16 %v852
    %v863 = vunpack.c.l.b16 %v853
    %v864 = vunpack.c.h.b16 %v852
    %v865 = vunpack.c.h.b16 %v853
    %v866 = vpack.c.b16 %v859, %v858
    %v867 = vpack.c.b16 %v861, %v860
    %v868 = vpack.c.b16 %v863, %v862
    %v869 = vpack.c.b16 %v865, %v864
    %874 = vst [vmem:[#allocation2 + $0x20] sm:$0xff] %v866
    %875 = vst [vmem:[#allocation2 + $0x28] sm:$0xff] %v867
    %876 = vst [vmem:[#allocation2 + $0x30] sm:$0xff] %v868
    %877 = vst [vmem:[#allocation2 + $0x38] sm:$0xff] %v869
    %v878 = vpack.c.bf16 %v751, %v749
    %v879 = vpack.c.bf16 %v752, %v750
    %v880 = vpack.c.bf16 %v755, %v753
    %v881 = vpack.c.bf16 %v756, %v754
    %v886 = vunpack.c.l.b16 %v878
    %v887 = vunpack.c.l.b16 %v879
    %v888 = vunpack.c.h.b16 %v878
    %v889 = vunpack.c.h.b16 %v879
    %v890 = vunpack.c.l.b16 %v880
    %v891 = vunpack.c.l.b16 %v881
    %v892 = vunpack.c.h.b16 %v880
    %v893 = vunpack.c.h.b16 %v881
    %v894 = vpack.c.b16 %v887, %v886
    %v895 = vpack.c.b16 %v889, %v888
    %v896 = vpack.c.b16 %v891, %v890
    %v897 = vpack.c.b16 %v893, %v892
    %902 = vst [vmem:[#allocation2 + $0x40] sm:$0xff] %v894
    %903 = vst [vmem:[#allocation2 + $0x48] sm:$0xff] %v895
    %904 = vst [vmem:[#allocation2 + $0x50] sm:$0xff] %v896
    %905 = vst [vmem:[#allocation2 + $0x58] sm:$0xff] %v897
    %s906 = scalar_lea.vmem %s3, 32
    %v907 = vld [vmem:[%s906] sm:$0xf]
    %v908 = vld [vmem:[%s906 + $0x4] sm:$0xf]
    %v909 = vld [vmem:[%s906 + $0x8] sm:$0xf]
    %v910 = vld [vmem:[%s906 + $0xc] sm:$0xf]
    %v911 = vld [vmem:[%s906 + $0x10] sm:$0xf]
    %v912 = vld [vmem:[%s906 + $0x14] sm:$0xf]
    %v913 = vld [vmem:[%s906 + $0x18] sm:$0xf]
    %v914 = vld [vmem:[%s906 + $0x1c] sm:$0xf]
    %v915 = vld [vmem:[#allocation2] sm:$0xff]
    %v916 = vld [vmem:[#allocation2 + $0x8] sm:$0xff]
    %v917 = vld [vmem:[#allocation2 + $0x10] sm:$0xff]
    %v918 = vld [vmem:[#allocation2 + $0x18] sm:$0xff]
    %v919 = vld [vmem:[#allocation2 + $0x20] sm:$0xff]
    %v920 = vld [vmem:[#allocation2 + $0x28] sm:$0xff]
    %v921 = vld [vmem:[#allocation2 + $0x30] sm:$0xff]
    %v922 = vld [vmem:[#allocation2 + $0x38] sm:$0xff]
    %v923 = vld [vmem:[#allocation2 + $0x40] sm:$0xff]
    %v924 = vld [vmem:[#allocation2 + $0x48] sm:$0xff]
    %v925 = vld [vmem:[#allocation2 + $0x50] sm:$0xff]
    %v926 = vld [vmem:[#allocation2 + $0x58] sm:$0xff]
    %s927 = scalar_lea.vmem %s4, 64
    %v928 = vld [vmem:[%s927] sm:$0xff]
    %v929 = vld [vmem:[%s927 + $0x8] sm:$0xff]
    %v930 = vld [vmem:[%s927 + $0x10] sm:$0xff]
    %v931 = vld [vmem:[%s927 + $0x18] sm:$0xff]
    %v932 = vld [vmem:[%s927 + $0x20] sm:$0xff]
    %v933 = vld [vmem:[%s927 + $0x28] sm:$0xff]
    %v934 = vld [vmem:[%s927 + $0x30] sm:$0xff]
    %v935 = vld [vmem:[%s927 + $0x38] sm:$0xff]
    %937 = vset.pattern.permute.xlu0 0
    %938 = vperm.xlu0 %937, %v928
    %v939 = vpop.permute.xlu0 %938
    %942 = vset.pattern.permute.xlu0 0
    %943 = vperm.xlu0 %942, %v929
    %v944 = vpop.permute.xlu0 %943
    %947 = vset.pattern.permute.xlu0 0
    %948 = vperm.xlu0 %947, %v930
    %v949 = vpop.permute.xlu0 %948
    %952 = vset.pattern.permute.xlu0 0
    %953 = vperm.xlu0 %952, %v931
    %v954 = vpop.permute.xlu0 %953
    %957 = vset.pattern.permute.xlu0 0
    %958 = vperm.xlu0 %957, %v932
    %v959 = vpop.permute.xlu0 %958
    %962 = vset.pattern.permute.xlu0 0
    %963 = vperm.xlu0 %962, %v933
    %v964 = vpop.permute.xlu0 %963
    %967 = vset.pattern.permute.xlu0 0
    %968 = vperm.xlu0 %967, %v934
    %v969 = vpop.permute.xlu0 %968
    %972 = vset.pattern.permute.xlu0 0
    %973 = vperm.xlu0 %972, %v935
    %v974 = vpop.permute.xlu0 %973
    %v984 = vunpack.c.l.b16 %v907
    %v985 = vunpack.c.l.b16 %v908
    %v986 = vunpack.c.l.b16 %v909
    %v987 = vunpack.c.l.b16 %v910
    %v988 = vunpack.c.l.b16 %v911
    %v989 = vunpack.c.l.b16 %v912
    %v990 = vunpack.c.l.b16 %v913
    %v991 = vunpack.c.l.b16 %v914
    %v992 = vpack.c.b16 %v985, %v984
    %v993 = vpack.c.b16 %v987, %v986
    %v994 = vpack.c.b16 %v989, %v988
    %v995 = vpack.c.b16 %v991, %v990
    %v1008 = vunpack.c.l.b16 %v915
    %v1009 = vunpack.c.h.b16 %v915
    %v1010 = vunpack.c.l.b16 %v916
    %v1011 = vunpack.c.h.b16 %v916
    %v1012 = vunpack.c.l.b16 %v917
    %v1013 = vunpack.c.h.b16 %v917
    %v1014 = vunpack.c.l.b16 %v918
    %v1015 = vunpack.c.h.b16 %v918
    %v1016 = vunpack.c.l.b16 %v919
    %v1017 = vunpack.c.h.b16 %v919
    %v1018 = vunpack.c.l.b16 %v920
    %v1019 = vunpack.c.h.b16 %v920
    %v1020 = vunpack.c.l.b16 %v921
    %v1021 = vunpack.c.h.b16 %v921
    %v1022 = vunpack.c.l.b16 %v922
    %v1023 = vunpack.c.h.b16 %v922
    %v1024 = vunpack.c.l.b16 %v923
    %v1025 = vunpack.c.h.b16 %v923
    %v1026 = vunpack.c.l.b16 %v924
    %v1027 = vunpack.c.h.b16 %v924
    %v1028 = vunpack.c.l.b16 %v925
    %v1029 = vunpack.c.h.b16 %v925
    %v1030 = vunpack.c.l.b16 %v926
    %v1031 = vunpack.c.h.b16 %v926
    %v1032 = vpack.c.b16 %v1010, %v1008
    %v1033 = vpack.c.b16 %v1011, %v1009
    %v1034 = vpack.c.b16 %v1014, %v1012
    %v1035 = vpack.c.b16 %v1015, %v1013
    %v1036 = vpack.c.b16 %v1018, %v1016
    %v1037 = vpack.c.b16 %v1019, %v1017
    %v1038 = vpack.c.b16 %v1022, %v1020
    %v1039 = vpack.c.b16 %v1023, %v1021
    %v1040 = vpack.c.b16 %v1026, %v1024
    %v1041 = vpack.c.b16 %v1027, %v1025
    %v1042 = vpack.c.b16 %v1030, %v1028
    %v1043 = vpack.c.b16 %v1031, %v1029
    %v1057 = vsel %vm465, %v992, 0
    %v1060 = vsel %vm465, %v993, 0
    %v1063 = vsel %vm465, %v994, 0
    %v1066 = vsel %vm465, %v995, 0
    %1068 = vmatprep.subr.bf16.mxu0 0
    %1069 = vmatpush1.bf16.msra.mxu0 0
    %1070 = vmatprep.subr.bf16.mxu0 0
    %1071 = vmatpush1.bf16.msra.mxu0 0
    %1072 = vmatprep.subr.bf16.mxu0 %v1043
    %1073 = vmatpush1.bf16.msra.mxu0 %v1042
    %1074 = vmatprep.subr.bf16.mxu0 %v1041
    %1075 = vmatpush1.bf16.msra.mxu0 %v1040
    %1076 = vmatprep.subr.bf16.mxu0 %v1039
    %1077 = vmatpush1.bf16.msra.mxu0 %v1038
    %1078 = vmatprep.subr.bf16.mxu0 %v1037
    %1079 = vmatpush1.bf16.msra.mxu0 %v1036
    %1080 = vmatprep.subr.bf16.mxu0 %v1035
    %1081 = vmatpush1.bf16.msra.mxu0 %v1034
    %1082 = vmatprep.subr.bf16.mxu0 %v1033
    %1083 = vmatpush1.bf16.msra.mxu0 %v1032
    %1084 = vmatprep.subr.bf16.mxu0 0
    %1085 = vmatpush2.bf16.msra.mxu0 0
    %1086 = vmatprep.subr.bf16.mxu0 0
    %1087 = vmatpush2.bf16.msra.mxu0 0
    %1088 = vmatprep.subr.bf16.mxu0 0
    %1089 = vmatpush2.bf16.msra.mxu0 0
    %1090 = vmatprep.subr.bf16.mxu0 0
    %1091 = vmatpush2.bf16.msra.mxu0 0
    %1092 = vmatprep.subr.bf16.mxu0 0
    %1093 = vmatpush2.bf16.msra.mxu0 0
    %1094 = vmatprep.subr.bf16.mxu0 0
    %1095 = vmatpush2.bf16.msra.mxu0 0
    %1096 = vmatprep.subr.bf16.mxu0 0
    %1097 = vmatpush2.bf16.msra.mxu0 0
    %1098 = vmatprep.subr.bf16.mxu0 0
    %1099 = vmatpush2.bf16.msra.mxu0 0
    %1100 = vmatprep.mubr.bf16.mxu0 0
    %1101 = vmatmul.mubr.bf16.gmra.mxu0 %v1057
    %v1102 = vpop.f32.mrf.mxu0
    %v1103 = vadd.f32 %v939, %v1102
    %v1104 = vpop.f32.mrf.mxu0
    %v1105 = vadd.f32 %v939, %v1104
    %v1106 = vpop.f32.mrf.mxu0
    %v1107 = vadd.f32 %v944, %v1106
    %v1108 = vpop.f32.mrf.mxu0
    %v1109 = vadd.f32 %v944, %v1108
    %1110 = vmatprep.mubr.bf16.mxu0 0
    %1111 = vmatmul.mubr.bf16.gmra.mxu0 %v1060
    %v1112 = vpop.f32.mrf.mxu0
    %v1113 = vadd.f32 %v949, %v1112
    %v1114 = vpop.f32.mrf.mxu0
    %v1115 = vadd.f32 %v949, %v1114
    %v1116 = vpop.f32.mrf.mxu0
    %v1117 = vadd.f32 %v954, %v1116
    %v1118 = vpop.f32.mrf.mxu0
    %v1119 = vadd.f32 %v954, %v1118
    %1120 = vmatprep.mubr.bf16.mxu0 0
    %1121 = vmatmul.mubr.bf16.gmra.mxu0 %v1063
    %v1122 = vpop.f32.mrf.mxu0
    %v1123 = vadd.f32 %v959, %v1122
    %v1124 = vpop.f32.mrf.mxu0
    %v1125 = vadd.f32 %v959, %v1124
    %v1126 = vpop.f32.mrf.mxu0
    %v1127 = vadd.f32 %v964, %v1126
    %v1128 = vpop.f32.mrf.mxu0
    %v1129 = vadd.f32 %v964, %v1128
    %1130 = vmatprep.mubr.bf16.mxu0 0
    %1131 = vmatmul.mubr.bf16.gmra.mxu0 %v1066
    %v1132 = vpop.f32.mrf.mxu0
    %v1133 = vadd.f32 %v969, %v1132
    %v1134 = vpop.f32.mrf.mxu0
    %v1135 = vadd.f32 %v969, %v1134
    %v1136 = vpop.f32.mrf.mxu0
    %v1137 = vadd.f32 %v974, %v1136
    %v1138 = vpop.f32.mrf.mxu0
    %v1139 = vadd.f32 %v974, %v1138
    %1140 = vdwg.mxu0
    %v1141 = vtanh.pop %v1103
    %v1142 = vtanh.pop %v1105
    %v1143 = vtanh.pop %v1107
    %v1144 = vtanh.pop %v1109
    %v1145 = vtanh.pop %v1113
    %v1146 = vtanh.pop %v1115
    %v1147 = vtanh.pop %v1117
    %v1148 = vtanh.pop %v1119
    %v1149 = vxor.u32 %v1123, 2147483648
    %v1150 = vxor.u32 %v1125, 2147483648
    %v1151 = vxor.u32 %v1127, 2147483648
    %v1152 = vxor.u32 %v1129, 2147483648
    %v1153 = vxor.u32 %v1133, 2147483648
    %v1154 = vxor.u32 %v1135, 2147483648
    %v1155 = vxor.u32 %v1137, 2147483648
    %v1156 = vxor.u32 %v1139, 2147483648
    %v1157 = vmul.f32 %v1149, 1.442695
    %v1158 = vpow.pop %v1157
    %v1159 = vmul.f32 %v1150, 1.442695
    %v1160 = vpow.pop %v1159
    %v1161 = vmul.f32 %v1151, 1.442695
    %v1162 = vpow.pop %v1161
    %v1163 = vmul.f32 %v1152, 1.442695
    %v1164 = vpow.pop %v1163
    %v1165 = vmul.f32 %v1153, 1.442695
    %v1166 = vpow.pop %v1165
    %v1167 = vmul.f32 %v1154, 1.442695
    %v1168 = vpow.pop %v1167
    %v1169 = vmul.f32 %v1155, 1.442695
    %v1170 = vpow.pop %v1169
    %v1171 = vmul.f32 %v1156, 1.442695
    %v1172 = vpow.pop %v1171
    %v1173 = vadd.f32 %v1158, 1.0
    %v1174 = vadd.f32 %v1160, 1.0
    %v1175 = vadd.f32 %v1162, 1.0
    %v1176 = vadd.f32 %v1164, 1.0
    %v1177 = vadd.f32 %v1166, 1.0
    %v1178 = vadd.f32 %v1168, 1.0
    %v1179 = vadd.f32 %v1170, 1.0
    %v1180 = vadd.f32 %v1172, 1.0
    %v1181 = vrcp.pop %v1173
    %v1182 = vmul.f32 1.0, %v1181
    %v1183 = vrcp.pop %v1174
    %v1184 = vmul.f32 1.0, %v1183
    %v1185 = vrcp.pop %v1175
    %v1186 = vmul.f32 1.0, %v1185
    %v1187 = vrcp.pop %v1176
    %v1188 = vmul.f32 1.0, %v1187
    %v1189 = vrcp.pop %v1177
    %v1190 = vmul.f32 1.0, %v1189
    %v1191 = vrcp.pop %v1178
    %v1192 = vmul.f32 1.0, %v1191
    %v1193 = vrcp.pop %v1179
    %v1194 = vmul.f32 1.0, %v1193
    %v1195 = vrcp.pop %v1180
    %v1196 = vmul.f32 1.0, %v1195
    %v1197 = vmul.f32 %v1141, %v1182
    %v1198 = vmul.f32 %v1142, %v1184
    %v1199 = vmul.f32 %v1143, %v1186
    %v1200 = vmul.f32 %v1144, %v1188
    %v1201 = vmul.f32 %v1145, %v1190
    %v1202 = vmul.f32 %v1146, %v1192
    %v1203 = vmul.f32 %v1147, %v1194
    %v1204 = vmul.f32 %v1148, %v1196
    %v1205 = vpack.c.bf16 %v1199, %v1197
    %v1206 = vpack.c.bf16 %v1200, %v1198
    %v1207 = vpack.c.bf16 %v1203, %v1201
    %v1208 = vpack.c.bf16 %v1204, %v1202
    %v1213 = vunpack.c.l.b16 %v1205
    %v1214 = vunpack.c.l.b16 %v1206
    %v1215 = vunpack.c.h.b16 %v1205
    %v1216 = vunpack.c.h.b16 %v1206
    %v1217 = vunpack.c.l.b16 %v1207
    %v1218 = vunpack.c.l.b16 %v1208
    %v1219 = vunpack.c.h.b16 %v1207
    %v1220 = vunpack.c.h.b16 %v1208
    %v1221 = vpack.c.b16 %v1214, %v1213
    %v1222 = vpack.c.b16 %v1216, %v1215
    %v1223 = vpack.c.b16 %v1218, %v1217
    %v1224 = vpack.c.b16 %v1220, %v1219
    %1229 = vst [vmem:[#allocation3 + $0x20] sm:$0xff] %v1221
    %1230 = vst [vmem:[#allocation3 + $0x28] sm:$0xff] %v1222
    %1231 = vst [vmem:[#allocation3 + $0x30] sm:$0xff] %v1223
    %1232 = vst [vmem:[#allocation3 + $0x38] sm:$0xff] %v1224
    %s1233 = scalar_lea.vmem %s5, 16
    %v1234 = vld [vmem:[%s1233] sm:$0xf]
    %v1235 = vld [vmem:[%s1233 + $0x4] sm:$0xf]
    %v1236 = vld [vmem:[%s1233 + $0x8] sm:$0xf]
    %v1237 = vld [vmem:[%s1233 + $0xc] sm:$0xf]
    %v1242 = vunpack.c.l.b16 %v1234
    %v1243 = vunpack.c.l.b16 %v1235
    %v1244 = vunpack.c.l.b16 %v1236
    %v1245 = vunpack.c.l.b16 %v1237
    %v1246 = vpack.c.b16 %v1243, %v1242
    %v1247 = vpack.c.b16 %v1245, %v1244
    %v1249 = vsel %vm657, %v1246, 0
    %v1252 = vsel %vm657, %v1247, 0
    %1254 = vmatprep.subr.bf16.mxu0 0
    %1255 = vmatpush1.bf16.msra.mxu0 0
    %1256 = vmatprep.subr.bf16.mxu0 0
    %1257 = vmatpush1.bf16.msra.mxu0 0
    %1258 = vmatprep.subr.bf16.mxu0 0
    %1259 = vmatpush1.bf16.msra.mxu0 0
    %1260 = vmatprep.subr.bf16.mxu0 0
    %1261 = vmatpush1.bf16.msra.mxu0 0
    %1262 = vmatprep.subr.bf16.mxu0 0
    %1263 = vmatpush1.bf16.msra.mxu0 0
    %1264 = vmatprep.subr.bf16.mxu0 0
    %1265 = vmatpush1.bf16.msra.mxu0 0
    %1266 = vmatprep.subr.bf16.mxu0 %v1208
    %1267 = vmatpush1.bf16.msra.mxu0 %v1207
    %1268 = vmatprep.subr.bf16.mxu0 %v1206
    %1269 = vmatpush1.bf16.msra.mxu0 %v1205
    %1270 = vmatprep.subr.bf16.mxu0 0
    %1271 = vmatpush2.bf16.msra.mxu0 0
    %1272 = vmatprep.subr.bf16.mxu0 0
    %1273 = vmatpush2.bf16.msra.mxu0 0
    %1274 = vmatprep.subr.bf16.mxu0 0
    %1275 = vmatpush2.bf16.msra.mxu0 0
    %1276 = vmatprep.subr.bf16.mxu0 0
    %1277 = vmatpush2.bf16.msra.mxu0 0
    %1278 = vmatprep.subr.bf16.mxu0 0
    %1279 = vmatpush2.bf16.msra.mxu0 0
    %1280 = vmatprep.subr.bf16.mxu0 0
    %1281 = vmatpush2.bf16.msra.mxu0 0
    %1282 = vmatprep.subr.bf16.mxu0 0
    %1283 = vmatpush2.bf16.msra.mxu0 0
    %1284 = vmatprep.subr.bf16.mxu0 0
    %1285 = vmatpush2.bf16.msra.mxu0 0
    %1286 = vmatprep.mubr.bf16.mxu0 0
    %1287 = vmatmul.mubr.bf16.gmra.mxu0 %v1249
    %v1288 = vpop.f32.mrf.mxu0
    %v1289 = vadd.f32 0.0, %v1288
    %v1290 = vpop.f32.mrf.mxu0
    %v1291 = vadd.f32 0.0, %v1290
    %v1292 = vpop.f32.mrf.mxu0
    %v1293 = vadd.f32 0.0, %v1292
    %v1294 = vpop.f32.mrf.mxu0
    %v1295 = vadd.f32 0.0, %v1294
    %1296 = vmatprep.mubr.bf16.mxu0 0
    %1297 = vmatmul.mubr.bf16.gmra.mxu0 %v1252
    %v1298 = vpop.f32.mrf.mxu0
    %v1299 = vadd.f32 0.0, %v1298
    %v1300 = vpop.f32.mrf.mxu0
    %v1301 = vadd.f32 0.0, %v1300
    %v1302 = vpop.f32.mrf.mxu0
    %v1303 = vadd.f32 0.0, %v1302
    %v1304 = vpop.f32.mrf.mxu0
    %v1305 = vadd.f32 0.0, %v1304
    %1306 = vdwg.mxu0
    %v1307 = vadd.f32 %v749, %v1289
    %v1308 = vadd.f32 %v750, %v1291
    %v1309 = vadd.f32 %v751, %v1293
    %v1310 = vadd.f32 %v752, %v1295
    %v1311 = vadd.f32 %v753, %v1299
    %v1312 = vadd.f32 %v754, %v1301
    %v1313 = vadd.f32 %v755, %v1303
    %v1314 = vadd.f32 %v756, %v1305
    %s1315 = scalar_lea.vmem %s6, 32
    %v1316 = vld [vmem:[%s1315] sm:$0xff]
    %v1317 = vld [vmem:[%s1315 + $0x8] sm:$0xff]
    %v1318 = vld [vmem:[%s1315 + $0x10] sm:$0xff]
    %v1319 = vld [vmem:[%s1315 + $0x18] sm:$0xff]
    %1321 = vset.pattern.permute.xlu0 0
    %1322 = vperm.xlu0 %1321, %v1316
    %v1323 = vpop.permute.xlu0 %1322
    %1326 = vset.pattern.permute.xlu0 0
    %1327 = vperm.xlu0 %1326, %v1317
    %v1328 = vpop.permute.xlu0 %1327
    %1331 = vset.pattern.permute.xlu0 0
    %1332 = vperm.xlu0 %1331, %v1318
    %v1333 = vpop.permute.xlu0 %1332
    %1336 = vset.pattern.permute.xlu0 0
    %1337 = vperm.xlu0 %1336, %v1319
    %v1338 = vpop.permute.xlu0 %1337
    %v1340 = vadd.f32 %v1307, %v1323
    %v1341 = vadd.f32 %v1308, %v1323
    %v1342 = vadd.f32 %v1309, %v1328
    %v1343 = vadd.f32 %v1310, %v1328
    %v1344 = vadd.f32 %v1311, %v1333
    %v1345 = vadd.f32 %v1312, %v1333
    %v1346 = vadd.f32 %v1313, %v1338
    %v1347 = vadd.f32 %v1314, %v1338
    %1348 = vrot.lane.b32.xlu0 %v1340, 2
    %v1349 = vpop.permute.xlu0 %1348
    %1350 = vrot.lane.b32.xlu0 %v1342, 2
    %v1351 = vpop.permute.xlu0 %1350
    %1352 = vrot.lane.b32.xlu0 %v1344, 2
    %v1353 = vpop.permute.xlu0 %1352
    %1354 = vrot.lane.b32.xlu0 %v1346, 2
    %v1355 = vpop.permute.xlu0 %1354
    %1356 = vrot.lane.b32.xlu0 %v1341, 2
    %v1357 = vpop.permute.xlu0 %1356
    %1358 = vrot.lane.b32.xlu0 %v1343, 2
    %v1359 = vpop.permute.xlu0 %1358
    %1360 = vrot.lane.b32.xlu0 %v1345, 2
    %v1361 = vpop.permute.xlu0 %1360
    %1362 = vrot.lane.b32.xlu0 %v1347, 2
    %v1363 = vpop.permute.xlu0 %1362
    %v1364 = vsel %vm183, %v1349, %v1357
    %v1365 = vsel %vm183, %v1351, %v1359
    %v1366 = vsel %vm183, %v1353, %v1361
    %v1367 = vsel %vm183, %v1355, %v1363
    %v1368 = vsel %vm183, %v1357, %v1349
    %v1369 = vsel %vm183, %v1359, %v1351
    %v1370 = vsel %vm183, %v1361, %v1353
    %v1371 = vsel %vm183, %v1363, %v1355
    %v1372 = vmul.f32 %v1368, %v159
    %v1373 = vmul.f32 %v1364, %v160
    %v1374 = vmul.f32 %v1369, %v159
    %v1375 = vmul.f32 %v1365, %v160
    %v1376 = vmul.f32 %v1370, %v159
    %v1377 = vmul.f32 %v1366, %v160
    %v1378 = vmul.f32 %v1371, %v159
    %v1379 = vmul.f32 %v1367, %v160
    %v1380 = vpack.c.bf16 %v1374, %v1372
    %v1381 = vpack.c.bf16 %v1375, %v1373
    %v1382 = vpack.c.bf16 %v1378, %v1376
    %v1383 = vpack.c.bf16 %v1379, %v1377
    %v1388 = vunpack.c.l.b16 %v1380
    %v1389 = vunpack.c.l.b16 %v1381
    %v1390 = vunpack.c.h.b16 %v1380
    %v1391 = vunpack.c.h.b16 %v1381
    %v1392 = vunpack.c.l.b16 %v1382
    %v1393 = vunpack.c.l.b16 %v1383
    %v1394 = vunpack.c.h.b16 %v1382
    %v1395 = vunpack.c.h.b16 %v1383
    %v1396 = vpack.c.b16 %v1389, %v1388
    %v1397 = vpack.c.b16 %v1391, %v1390
    %v1398 = vpack.c.b16 %v1393, %v1392
    %v1399 = vpack.c.b16 %v1395, %v1394
    %1404 = vst [vmem:[#allocation2] sm:$0xff] %v1396
    %1405 = vst [vmem:[#allocation2 + $0x8] sm:$0xff] %v1397
    %1406 = vst [vmem:[#allocation2 + $0x10] sm:$0xff] %v1398
    %1407 = vst [vmem:[#allocation2 + $0x18] sm:$0xff] %v1399
    %1408 = vrot.lane.b32.xlu0 %v1340, 1
    %v1409 = vpop.permute.xlu0 %1408
    %1410 = vrot.lane.b32.xlu0 %v1342, 1
    %v1411 = vpop.permute.xlu0 %1410
    %1412 = vrot.lane.b32.xlu0 %v1344, 1
    %v1413 = vpop.permute.xlu0 %1412
    %1414 = vrot.lane.b32.xlu0 %v1346, 1
    %v1415 = vpop.permute.xlu0 %1414
    %1416 = vrot.lane.b32.xlu0 %v1341, 1
    %v1417 = vpop.permute.xlu0 %1416
    %1418 = vrot.lane.b32.xlu0 %v1343, 1
    %v1419 = vpop.permute.xlu0 %1418
    %1420 = vrot.lane.b32.xlu0 %v1345, 1
    %v1421 = vpop.permute.xlu0 %1420
    %1422 = vrot.lane.b32.xlu0 %v1347, 1
    %v1423 = vpop.permute.xlu0 %1422
    %v1424 = vsel %vm244, %v1409, %v1417
    %v1425 = vsel %vm244, %v1411, %v1419
    %v1426 = vsel %vm244, %v1413, %v1421
    %v1427 = vsel %vm244, %v1415, %v1423
    %v1428 = vsel %vm244, %v1417, %v1409
    %v1429 = vsel %vm244, %v1419, %v1411
    %v1430 = vsel %vm244, %v1421, %v1413
    %v1431 = vsel %vm244, %v1423, %v1415
    %v1432 = vmul.f32 %v1428, %v153
    %v1433 = vmul.f32 %v1424, %v154
    %v1434 = vmul.f32 %v1429, %v153
    %v1435 = vmul.f32 %v1425, %v154
    %v1436 = vmul.f32 %v1430, %v153
    %v1437 = vmul.f32 %v1426, %v154
    %v1438 = vmul.f32 %v1431, %v153
    %v1439 = vmul.f32 %v1427, %v154
    %v1440 = vpack.c.bf16 %v1434, %v1432
    %v1441 = vpack.c.bf16 %v1435, %v1433
    %v1442 = vpack.c.bf16 %v1438, %v1436
    %v1443 = vpack.c.bf16 %v1439, %v1437
    %v1448 = vunpack.c.l.b16 %v1440
    %v1449 = vunpack.c.l.b16 %v1441
    %v1450 = vunpack.c.h.b16 %v1440
    %v1451 = vunpack.c.h.b16 %v1441
    %v1452 = vunpack.c.l.b16 %v1442
    %v1453 = vunpack.c.l.b16 %v1443
    %v1454 = vunpack.c.h.b16 %v1442
    %v1455 = vunpack.c.h.b16 %v1443
    %v1456 = vpack.c.b16 %v1449, %v1448
    %v1457 = vpack.c.b16 %v1451, %v1450
    %v1458 = vpack.c.b16 %v1453, %v1452
    %v1459 = vpack.c.b16 %v1455, %v1454
    %1464 = vst [vmem:[#allocation2 + $0x20] sm:$0xff] %v1456
    %1465 = vst [vmem:[#allocation2 + $0x28] sm:$0xff] %v1457
    %1466 = vst [vmem:[#allocation2 + $0x30] sm:$0xff] %v1458
    %1467 = vst [vmem:[#allocation2 + $0x38] sm:$0xff] %v1459
    %v1468 = vpack.c.bf16 %v1342, %v1340
    %v1469 = vpack.c.bf16 %v1343, %v1341
    %v1470 = vpack.c.bf16 %v1346, %v1344
    %v1471 = vpack.c.bf16 %v1347, %v1345
    %v1476 = vunpack.c.l.b16 %v1468
    %v1477 = vunpack.c.l.b16 %v1469
    %v1478 = vunpack.c.h.b16 %v1468
    %v1479 = vunpack.c.h.b16 %v1469
    %v1480 = vunpack.c.l.b16 %v1470
    %v1481 = vunpack.c.l.b16 %v1471
    %v1482 = vunpack.c.h.b16 %v1470
    %v1483 = vunpack.c.h.b16 %v1471
    %v1484 = vpack.c.b16 %v1477, %v1476
    %v1485 = vpack.c.b16 %v1479, %v1478
    %v1486 = vpack.c.b16 %v1481, %v1480
    %v1487 = vpack.c.b16 %v1483, %v1482
    %1492 = vst [vmem:[#allocation2 + $0x40] sm:$0xff] %v1484
    %1493 = vst [vmem:[#allocation2 + $0x48] sm:$0xff] %v1485
    %1494 = vst [vmem:[#allocation2 + $0x50] sm:$0xff] %v1486
    %1495 = vst [vmem:[#allocation2 + $0x58] sm:$0xff] %v1487
    %s1496 = scalar_lea.vmem %s3, 64
    %v1497 = vld [vmem:[%s1496] sm:$0xf]
    %v1498 = vld [vmem:[%s1496 + $0x4] sm:$0xf]
    %v1499 = vld [vmem:[%s1496 + $0x8] sm:$0xf]
    %v1500 = vld [vmem:[%s1496 + $0xc] sm:$0xf]
    %v1501 = vld [vmem:[%s1496 + $0x10] sm:$0xf]
    %v1502 = vld [vmem:[%s1496 + $0x14] sm:$0xf]
    %v1503 = vld [vmem:[%s1496 + $0x18] sm:$0xf]
    %v1504 = vld [vmem:[%s1496 + $0x1c] sm:$0xf]
    %v1505 = vld [vmem:[#allocation2] sm:$0xff]
    %v1506 = vld [vmem:[#allocation2 + $0x8] sm:$0xff]
    %v1507 = vld [vmem:[#allocation2 + $0x10] sm:$0xff]
    %v1508 = vld [vmem:[#allocation2 + $0x18] sm:$0xff]
    %v1509 = vld [vmem:[#allocation2 + $0x20] sm:$0xff]
    %v1510 = vld [vmem:[#allocation2 + $0x28] sm:$0xff]
    %v1511 = vld [vmem:[#allocation2 + $0x30] sm:$0xff]
    %v1512 = vld [vmem:[#allocation2 + $0x38] sm:$0xff]
    %v1513 = vld [vmem:[#allocation2 + $0x40] sm:$0xff]
    %v1514 = vld [vmem:[#allocation2 + $0x48] sm:$0xff]
    %v1515 = vld [vmem:[#allocation2 + $0x50] sm:$0xff]
    %v1516 = vld [vmem:[#allocation2 + $0x58] sm:$0xff]
    %s1517 = scalar_lea.vmem %s4, 128
    %v1518 = vld [vmem:[%s1517] sm:$0xff]
    %v1519 = vld [vmem:[%s1517 + $0x8] sm:$0xff]
    %v1520 = vld [vmem:[%s1517 + $0x10] sm:$0xff]
    %v1521 = vld [vmem:[%s1517 + $0x18] sm:$0xff]
    %v1522 = vld [vmem:[%s1517 + $0x20] sm:$0xff]
    %v1523 = vld [vmem:[%s1517 + $0x28] sm:$0xff]
    %v1524 = vld [vmem:[%s1517 + $0x30] sm:$0xff]
    %v1525 = vld [vmem:[%s1517 + $0x38] sm:$0xff]
    %1527 = vset.pattern.permute.xlu0 0
    %1528 = vperm.xlu0 %1527, %v1518
    %v1529 = vpop.permute.xlu0 %1528
    %1532 = vset.pattern.permute.xlu0 0
    %1533 = vperm.xlu0 %1532, %v1519
    %v1534 = vpop.permute.xlu0 %1533
    %1537 = vset.pattern.permute.xlu0 0
    %1538 = vperm.xlu0 %1537, %v1520
    %v1539 = vpop.permute.xlu0 %1538
    %1542 = vset.pattern.permute.xlu0 0
    %1543 = vperm.xlu0 %1542, %v1521
    %v1544 = vpop.permute.xlu0 %1543
    %1547 = vset.pattern.permute.xlu0 0
    %1548 = vperm.xlu0 %1547, %v1522
    %v1549 = vpop.permute.xlu0 %1548
    %1552 = vset.pattern.permute.xlu0 0
    %1553 = vperm.xlu0 %1552, %v1523
    %v1554 = vpop.permute.xlu0 %1553
    %1557 = vset.pattern.permute.xlu0 0
    %1558 = vperm.xlu0 %1557, %v1524
    %v1559 = vpop.permute.xlu0 %1558
    %1562 = vset.pattern.permute.xlu0 0
    %1563 = vperm.xlu0 %1562, %v1525
    %v1564 = vpop.permute.xlu0 %1563
    %v1574 = vunpack.c.l.b16 %v1497
    %v1575 = vunpack.c.l.b16 %v1498
    %v1576 = vunpack.c.l.b16 %v1499
    %v1577 = vunpack.c.l.b16 %v1500
    %v1578 = vunpack.c.l.b16 %v1501
    %v1579 = vunpack.c.l.b16 %v1502
    %v1580 = vunpack.c.l.b16 %v1503
    %v1581 = vunpack.c.l.b16 %v1504
    %v1582 = vpack.c.b16 %v1575, %v1574
    %v1583 = vpack.c.b16 %v1577, %v1576
    %v1584 = vpack.c.b16 %v1579, %v1578
    %v1585 = vpack.c.b16 %v1581, %v1580
    %v1598 = vunpack.c.l.b16 %v1505
    %v1599 = vunpack.c.h.b16 %v1505
    %v1600 = vunpack.c.l.b16 %v1506
    %v1601 = vunpack.c.h.b16 %v1506
    %v1602 = vunpack.c.l.b16 %v1507
    %v1603 = vunpack.c.h.b16 %v1507
    %v1604 = vunpack.c.l.b16 %v1508
    %v1605 = vunpack.c.h.b16 %v1508
    %v1606 = vunpack.c.l.b16 %v1509
    %v1607 = vunpack.c.h.b16 %v1509
    %v1608 = vunpack.c.l.b16 %v1510
    %v1609 = vunpack.c.h.b16 %v1510
    %v1610 = vunpack.c.l.b16 %v1511
    %v1611 = vunpack.c.h.b16 %v1511
    %v1612 = vunpack.c.l.b16 %v1512
    %v1613 = vunpack.c.h.b16 %v1512
    %v1614 = vunpack.c.l.b16 %v1513
    %v1615 = vunpack.c.h.b16 %v1513
    %v1616 = vunpack.c.l.b16 %v1514
    %v1617 = vunpack.c.h.b16 %v1514
    %v1618 = vunpack.c.l.b16 %v1515
    %v1619 = vunpack.c.h.b16 %v1515
    %v1620 = vunpack.c.l.b16 %v1516
    %v1621 = vunpack.c.h.b16 %v1516
    %v1622 = vpack.c.b16 %v1600, %v1598
    %v1623 = vpack.c.b16 %v1601, %v1599
    %v1624 = vpack.c.b16 %v1604, %v1602
    %v1625 = vpack.c.b16 %v1605, %v1603
    %v1626 = vpack.c.b16 %v1608, %v1606
    %v1627 = vpack.c.b16 %v1609, %v1607
    %v1628 = vpack.c.b16 %v1612, %v1610
    %v1629 = vpack.c.b16 %v1613, %v1611
    %v1630 = vpack.c.b16 %v1616, %v1614
    %v1631 = vpack.c.b16 %v1617, %v1615
    %v1632 = vpack.c.b16 %v1620, %v1618
    %v1633 = vpack.c.b16 %v1621, %v1619
    %v1647 = vsel %vm465, %v1582, 0
    %v1650 = vsel %vm465, %v1583, 0
    %v1653 = vsel %vm465, %v1584, 0
    %v1656 = vsel %vm465, %v1585, 0
    %1658 = vmatprep.subr.bf16.mxu0 0
    %1659 = vmatpush1.bf16.msra.mxu0 0
    %1660 = vmatprep.subr.bf16.mxu0 0
    %1661 = vmatpush1.bf16.msra.mxu0 0
    %1662 = vmatprep.subr.bf16.mxu0 %v1633
    %1663 = vmatpush1.bf16.msra.mxu0 %v1632
    %1664 = vmatprep.subr.bf16.mxu0 %v1631
    %1665 = vmatpush1.bf16.msra.mxu0 %v1630
    %1666 = vmatprep.subr.bf16.mxu0 %v1629
    %1667 = vmatpush1.bf16.msra.mxu0 %v1628
    %1668 = vmatprep.subr.bf16.mxu0 %v1627
    %1669 = vmatpush1.bf16.msra.mxu0 %v1626
    %1670 = vmatprep.subr.bf16.mxu0 %v1625
    %1671 = vmatpush1.bf16.msra.mxu0 %v1624
    %1672 = vmatprep.subr.bf16.mxu0 %v1623
    %1673 = vmatpush1.bf16.msra.mxu0 %v1622
    %1674 = vmatprep.subr.bf16.mxu0 0
    %1675 = vmatpush2.bf16.msra.mxu0 0
    %1676 = vmatprep.subr.bf16.mxu0 0
    %1677 = vmatpush2.bf16.msra.mxu0 0
    %1678 = vmatprep.subr.bf16.mxu0 0
    %1679 = vmatpush2.bf16.msra.mxu0 0
    %1680 = vmatprep.subr.bf16.mxu0 0
    %1681 = vmatpush2.bf16.msra.mxu0 0
    %1682 = vmatprep.subr.bf16.mxu0 0
    %1683 = vmatpush2.bf16.msra.mxu0 0
    %1684 = vmatprep.subr.bf16.mxu0 0
    %1685 = vmatpush2.bf16.msra.mxu0 0
    %1686 = vmatprep.subr.bf16.mxu0 0
    %1687 = vmatpush2.bf16.msra.mxu0 0
    %1688 = vmatprep.subr.bf16.mxu0 0
    %1689 = vmatpush2.bf16.msra.mxu0 0
    %1690 = vmatprep.mubr.bf16.mxu0 0
    %1691 = vmatmul.mubr.bf16.gmra.mxu0 %v1647
    %v1692 = vpop.f32.mrf.mxu0
    %v1693 = vadd.f32 %v1529, %v1692
    %v1694 = vpop.f32.mrf.mxu0
    %v1695 = vadd.f32 %v1529, %v1694
    %v1696 = vpop.f32.mrf.mxu0
    %v1697 = vadd.f32 %v1534, %v1696
    %v1698 = vpop.f32.mrf.mxu0
    %v1699 = vadd.f32 %v1534, %v1698
    %1700 = vmatprep.mubr.bf16.mxu0 0
    %1701 = vmatmul.mubr.bf16.gmra.mxu0 %v1650
    %v1702 = vpop.f32.mrf.mxu0
    %v1703 = vadd.f32 %v1539, %v1702
    %v1704 = vpop.f32.mrf.mxu0
    %v1705 = vadd.f32 %v1539, %v1704
    %v1706 = vpop.f32.mrf.mxu0
    %v1707 = vadd.f32 %v1544, %v1706
    %v1708 = vpop.f32.mrf.mxu0
    %v1709 = vadd.f32 %v1544, %v1708
    %1710 = vmatprep.mubr.bf16.mxu0 0
    %1711 = vmatmul.mubr.bf16.gmra.mxu0 %v1653
    %v1712 = vpop.f32.mrf.mxu0
    %v1713 = vadd.f32 %v1549, %v1712
    %v1714 = vpop.f32.mrf.mxu0
    %v1715 = vadd.f32 %v1549, %v1714
    %v1716 = vpop.f32.mrf.mxu0
    %v1717 = vadd.f32 %v1554, %v1716
    %v1718 = vpop.f32.mrf.mxu0
    %v1719 = vadd.f32 %v1554, %v1718
    %1720 = vmatprep.mubr.bf16.mxu0 0
    %1721 = vmatmul.mubr.bf16.gmra.mxu0 %v1656
    %v1722 = vpop.f32.mrf.mxu0
    %v1723 = vadd.f32 %v1559, %v1722
    %v1724 = vpop.f32.mrf.mxu0
    %v1725 = vadd.f32 %v1559, %v1724
    %v1726 = vpop.f32.mrf.mxu0
    %v1727 = vadd.f32 %v1564, %v1726
    %v1728 = vpop.f32.mrf.mxu0
    %v1729 = vadd.f32 %v1564, %v1728
    %1730 = vdwg.mxu0
    %v1731 = vtanh.pop %v1693
    %v1732 = vtanh.pop %v1695
    %v1733 = vtanh.pop %v1697
    %v1734 = vtanh.pop %v1699
    %v1735 = vtanh.pop %v1703
    %v1736 = vtanh.pop %v1705
    %v1737 = vtanh.pop %v1707
    %v1738 = vtanh.pop %v1709
    %v1739 = vxor.u32 %v1713, 2147483648
    %v1740 = vxor.u32 %v1715, 2147483648
    %v1741 = vxor.u32 %v1717, 2147483648
    %v1742 = vxor.u32 %v1719, 2147483648
    %v1743 = vxor.u32 %v1723, 2147483648
    %v1744 = vxor.u32 %v1725, 2147483648
    %v1745 = vxor.u32 %v1727, 2147483648
    %v1746 = vxor.u32 %v1729, 2147483648
    %v1747 = vmul.f32 %v1739, 1.442695
    %v1748 = vpow.pop %v1747
    %v1749 = vmul.f32 %v1740, 1.442695
    %v1750 = vpow.pop %v1749
    %v1751 = vmul.f32 %v1741, 1.442695
    %v1752 = vpow.pop %v1751
    %v1753 = vmul.f32 %v1742, 1.442695
    %v1754 = vpow.pop %v1753
    %v1755 = vmul.f32 %v1743, 1.442695
    %v1756 = vpow.pop %v1755
    %v1757 = vmul.f32 %v1744, 1.442695
    %v1758 = vpow.pop %v1757
    %v1759 = vmul.f32 %v1745, 1.442695
    %v1760 = vpow.pop %v1759
    %v1761 = vmul.f32 %v1746, 1.442695
    %v1762 = vpow.pop %v1761
    %v1763 = vadd.f32 %v1748, 1.0
    %v1764 = vadd.f32 %v1750, 1.0
    %v1765 = vadd.f32 %v1752, 1.0
    %v1766 = vadd.f32 %v1754, 1.0
    %v1767 = vadd.f32 %v1756, 1.0
    %v1768 = vadd.f32 %v1758, 1.0
    %v1769 = vadd.f32 %v1760, 1.0
    %v1770 = vadd.f32 %v1762, 1.0
    %v1771 = vrcp.pop %v1763
    %v1772 = vmul.f32 1.0, %v1771
    %v1773 = vrcp.pop %v1764
    %v1774 = vmul.f32 1.0, %v1773
    %v1775 = vrcp.pop %v1765
    %v1776 = vmul.f32 1.0, %v1775
    %v1777 = vrcp.pop %v1766
    %v1778 = vmul.f32 1.0, %v1777
    %v1779 = vrcp.pop %v1767
    %v1780 = vmul.f32 1.0, %v1779
    %v1781 = vrcp.pop %v1768
    %v1782 = vmul.f32 1.0, %v1781
    %v1783 = vrcp.pop %v1769
    %v1784 = vmul.f32 1.0, %v1783
    %v1785 = vrcp.pop %v1770
    %v1786 = vmul.f32 1.0, %v1785
    %v1787 = vmul.f32 %v1731, %v1772
    %v1788 = vmul.f32 %v1732, %v1774
    %v1789 = vmul.f32 %v1733, %v1776
    %v1790 = vmul.f32 %v1734, %v1778
    %v1791 = vmul.f32 %v1735, %v1780
    %v1792 = vmul.f32 %v1736, %v1782
    %v1793 = vmul.f32 %v1737, %v1784
    %v1794 = vmul.f32 %v1738, %v1786
    %v1795 = vpack.c.bf16 %v1789, %v1787
    %v1796 = vpack.c.bf16 %v1790, %v1788
    %v1797 = vpack.c.bf16 %v1793, %v1791
    %v1798 = vpack.c.bf16 %v1794, %v1792
    %v1803 = vunpack.c.l.b16 %v1795
    %v1804 = vunpack.c.l.b16 %v1796
    %v1805 = vunpack.c.h.b16 %v1795
    %v1806 = vunpack.c.h.b16 %v1796
    %v1807 = vunpack.c.l.b16 %v1797
    %v1808 = vunpack.c.l.b16 %v1798
    %v1809 = vunpack.c.h.b16 %v1797
    %v1810 = vunpack.c.h.b16 %v1798
    %v1811 = vpack.c.b16 %v1804, %v1803
    %v1812 = vpack.c.b16 %v1806, %v1805
    %v1813 = vpack.c.b16 %v1808, %v1807
    %v1814 = vpack.c.b16 %v1810, %v1809
    %1819 = vst [vmem:[#allocation3 + $0x40] sm:$0xff] %v1811
    %1820 = vst [vmem:[#allocation3 + $0x48] sm:$0xff] %v1812
    %1821 = vst [vmem:[#allocation3 + $0x50] sm:$0xff] %v1813
    %1822 = vst [vmem:[#allocation3 + $0x58] sm:$0xff] %v1814
    %s1823 = scalar_lea.vmem %s5, 32
    %v1824 = vld [vmem:[%s1823] sm:$0xf]
    %v1825 = vld [vmem:[%s1823 + $0x4] sm:$0xf]
    %v1826 = vld [vmem:[%s1823 + $0x8] sm:$0xf]
    %v1827 = vld [vmem:[%s1823 + $0xc] sm:$0xf]
    %v1832 = vunpack.c.l.b16 %v1824
    %v1833 = vunpack.c.l.b16 %v1825
    %v1834 = vunpack.c.l.b16 %v1826
    %v1835 = vunpack.c.l.b16 %v1827
    %v1836 = vpack.c.b16 %v1833, %v1832
    %v1837 = vpack.c.b16 %v1835, %v1834
    %v1839 = vsel %vm657, %v1836, 0
    %v1842 = vsel %vm657, %v1837, 0
    %1844 = vmatprep.subr.bf16.mxu0 0
    %1845 = vmatpush1.bf16.msra.mxu0 0
    %1846 = vmatprep.subr.bf16.mxu0 0
    %1847 = vmatpush1.bf16.msra.mxu0 0
    %1848 = vmatprep.subr.bf16.mxu0 0
    %1849 = vmatpush1.bf16.msra.mxu0 0
    %1850 = vmatprep.subr.bf16.mxu0 0
    %1851 = vmatpush1.bf16.msra.mxu0 0
    %1852 = vmatprep.subr.bf16.mxu0 0
    %1853 = vmatpush1.bf16.msra.mxu0 0
    %1854 = vmatprep.subr.bf16.mxu0 0
    %1855 = vmatpush1.bf16.msra.mxu0 0
    %1856 = vmatprep.subr.bf16.mxu0 %v1798
    %1857 = vmatpush1.bf16.msra.mxu0 %v1797
    %1858 = vmatprep.subr.bf16.mxu0 %v1796
    %1859 = vmatpush1.bf16.msra.mxu0 %v1795
    %1860 = vmatprep.subr.bf16.mxu0 0
    %1861 = vmatpush2.bf16.msra.mxu0 0
    %1862 = vmatprep.subr.bf16.mxu0 0
    %1863 = vmatpush2.bf16.msra.mxu0 0
    %1864 = vmatprep.subr.bf16.mxu0 0
    %1865 = vmatpush2.bf16.msra.mxu0 0
    %1866 = vmatprep.subr.bf16.mxu0 0
    %1867 = vmatpush2.bf16.msra.mxu0 0
    %1868 = vmatprep.subr.bf16.mxu0 0
    %1869 = vmatpush2.bf16.msra.mxu0 0
    %1870 = vmatprep.subr.bf16.mxu0 0
    %1871 = vmatpush2.bf16.msra.mxu0 0
    %1872 = vmatprep.subr.bf16.mxu0 0
    %1873 = vmatpush2.bf16.msra.mxu0 0
    %1874 = vmatprep.subr.bf16.mxu0 0
    %1875 = vmatpush2.bf16.msra.mxu0 0
    %1876 = vmatprep.mubr.bf16.mxu0 0
    %1877 = vmatmul.mubr.bf16.gmra.mxu0 %v1839
    %v1878 = vpop.f32.mrf.mxu0
    %v1879 = vadd.f32 0.0, %v1878
    %v1880 = vpop.f32.mrf.mxu0
    %v1881 = vadd.f32 0.0, %v1880
    %v1882 = vpop.f32.mrf.mxu0
    %v1883 = vadd.f32 0.0, %v1882
    %v1884 = vpop.f32.mrf.mxu0
    %v1885 = vadd.f32 0.0, %v1884
    %1886 = vmatprep.mubr.bf16.mxu0 0
    %1887 = vmatmul.mubr.bf16.gmra.mxu0 %v1842
    %v1888 = vpop.f32.mrf.mxu0
    %v1889 = vadd.f32 0.0, %v1888
    %v1890 = vpop.f32.mrf.mxu0
    %v1891 = vadd.f32 0.0, %v1890
    %v1892 = vpop.f32.mrf.mxu0
    %v1893 = vadd.f32 0.0, %v1892
    %v1894 = vpop.f32.mrf.mxu0
    %v1895 = vadd.f32 0.0, %v1894
    %1896 = vdwg.mxu0
    %v1897 = vadd.f32 %v1340, %v1879
    %v1898 = vadd.f32 %v1341, %v1881
    %v1899 = vadd.f32 %v1342, %v1883
    %v1900 = vadd.f32 %v1343, %v1885
    %v1901 = vadd.f32 %v1344, %v1889
    %v1902 = vadd.f32 %v1345, %v1891
    %v1903 = vadd.f32 %v1346, %v1893
    %v1904 = vadd.f32 %v1347, %v1895
    %s1905 = scalar_lea.vmem %s6, 64
    %v1906 = vld [vmem:[%s1905] sm:$0xff]
    %v1907 = vld [vmem:[%s1905 + $0x8] sm:$0xff]
    %v1908 = vld [vmem:[%s1905 + $0x10] sm:$0xff]
    %v1909 = vld [vmem:[%s1905 + $0x18] sm:$0xff]
    %1911 = vset.pattern.permute.xlu0 0
    %1912 = vperm.xlu0 %1911, %v1906
    %v1913 = vpop.permute.xlu0 %1912
    %1916 = vset.pattern.permute.xlu0 0
    %1917 = vperm.xlu0 %1916, %v1907
    %v1918 = vpop.permute.xlu0 %1917
    %1921 = vset.pattern.permute.xlu0 0
    %1922 = vperm.xlu0 %1921, %v1908
    %v1923 = vpop.permute.xlu0 %1922
    %1926 = vset.pattern.permute.xlu0 0
    %1927 = vperm.xlu0 %1926, %v1909
    %v1928 = vpop.permute.xlu0 %1927
    %v1930 = vadd.f32 %v1897, %v1913
    %v1931 = vadd.f32 %v1898, %v1913
    %v1932 = vadd.f32 %v1899, %v1918
    %v1933 = vadd.f32 %v1900, %v1918
    %v1934 = vadd.f32 %v1901, %v1923
    %v1935 = vadd.f32 %v1902, %v1923
    %v1936 = vadd.f32 %v1903, %v1928
    %v1937 = vadd.f32 %v1904, %v1928
    %1938 = vrot.lane.b32.xlu0 %v1930, 4
    %v1939 = vpop.permute.xlu0 %1938
    %1940 = vrot.lane.b32.xlu0 %v1932, 4
    %v1941 = vpop.permute.xlu0 %1940
    %1942 = vrot.lane.b32.xlu0 %v1934, 4
    %v1943 = vpop.permute.xlu0 %1942
    %1944 = vrot.lane.b32.xlu0 %v1936, 4
    %v1945 = vpop.permute.xlu0 %1944
    %1946 = vrot.lane.b32.xlu0 %v1931, 4
    %v1947 = vpop.permute.xlu0 %1946
    %1948 = vrot.lane.b32.xlu0 %v1933, 4
    %v1949 = vpop.permute.xlu0 %1948
    %1950 = vrot.lane.b32.xlu0 %v1935, 4
    %v1951 = vpop.permute.xlu0 %1950
    %1952 = vrot.lane.b32.xlu0 %v1937, 4
    %v1953 = vpop.permute.xlu0 %1952
    %v1954 = vsel %vm773, %v1939, %v1947
    %v1955 = vsel %vm773, %v1941, %v1949
    %v1956 = vsel %vm773, %v1943, %v1951
    %v1957 = vsel %vm773, %v1945, %v1953
    %v1958 = vsel %vm773, %v1947, %v1939
    %v1959 = vsel %vm773, %v1949, %v1941
    %v1960 = vsel %vm773, %v1951, %v1943
    %v1961 = vsel %vm773, %v1953, %v1945
    %v1962 = vmul.f32 %v1958, %v165
    %v1963 = vmul.f32 %v1954, %v166
    %v1964 = vmul.f32 %v1959, %v165
    %v1965 = vmul.f32 %v1955, %v166
    %v1966 = vmul.f32 %v1960, %v165
    %v1967 = vmul.f32 %v1956, %v166
    %v1968 = vmul.f32 %v1961, %v165
    %v1969 = vmul.f32 %v1957, %v166
    %v1970 = vpack.c.bf16 %v1964, %v1962
    %v1971 = vpack.c.bf16 %v1965, %v1963
    %v1972 = vpack.c.bf16 %v1968, %v1966
    %v1973 = vpack.c.bf16 %v1969, %v1967
    %v1978 = vunpack.c.l.b16 %v1970
    %v1979 = vunpack.c.l.b16 %v1971
    %v1980 = vunpack.c.h.b16 %v1970
    %v1981 = vunpack.c.h.b16 %v1971
    %v1982 = vunpack.c.l.b16 %v1972
    %v1983 = vunpack.c.l.b16 %v1973
    %v1984 = vunpack.c.h.b16 %v1972
    %v1985 = vunpack.c.h.b16 %v1973
    %v1986 = vpack.c.b16 %v1979, %v1978
    %v1987 = vpack.c.b16 %v1981, %v1980
    %v1988 = vpack.c.b16 %v1983, %v1982
    %v1989 = vpack.c.b16 %v1985, %v1984
    %1994 = vst [vmem:[#allocation2] sm:$0xff] %v1986
    %1995 = vst [vmem:[#allocation2 + $0x8] sm:$0xff] %v1987
    %1996 = vst [vmem:[#allocation2 + $0x10] sm:$0xff] %v1988
    %1997 = vst [vmem:[#allocation2 + $0x18] sm:$0xff] %v1989
    %1998 = vrot.lane.b32.xlu0 %v1930, 2
    %v1999 = vpop.permute.xlu0 %1998
    %2000 = vrot.lane.b32.xlu0 %v1932, 2
    %v2001 = vpop.permute.xlu0 %2000
    %2002 = vrot.lane.b32.xlu0 %v1934, 2
    %v2003 = vpop.permute.xlu0 %2002
    %2004 = vrot.lane.b32.xlu0 %v1936, 2
    %v2005 = vpop.permute.xlu0 %2004
    %2006 = vrot.lane.b32.xlu0 %v1931, 2
    %v2007 = vpop.permute.xlu0 %2006
    %2008 = vrot.lane.b32.xlu0 %v1933, 2
    %v2009 = vpop.permute.xlu0 %2008
    %2010 = vrot.lane.b32.xlu0 %v1935, 2
    %v2011 = vpop.permute.xlu0 %2010
    %2012 = vrot.lane.b32.xlu0 %v1937, 2
    %v2013 = vpop.permute.xlu0 %2012
    %v2014 = vsel %vm183, %v1999, %v2007
    %v2015 = vsel %vm183, %v2001, %v2009
    %v2016 = vsel %vm183, %v2003, %v2011
    %v2017 = vsel %vm183, %v2005, %v2013
    %v2018 = vsel %vm183, %v2007, %v1999
    %v2019 = vsel %vm183, %v2009, %v2001
    %v2020 = vsel %vm183, %v2011, %v2003
    %v2021 = vsel %vm183, %v2013, %v2005
    %v2022 = vmul.f32 %v2018, %v159
    %v2023 = vmul.f32 %v2014, %v160
    %v2024 = vmul.f32 %v2019, %v159
    %v2025 = vmul.f32 %v2015, %v160
    %v2026 = vmul.f32 %v2020, %v159
    %v2027 = vmul.f32 %v2016, %v160
    %v2028 = vmul.f32 %v2021, %v159
    %v2029 = vmul.f32 %v2017, %v160
    %v2030 = vpack.c.bf16 %v2024, %v2022
    %v2031 = vpack.c.bf16 %v2025, %v2023
    %v2032 = vpack.c.bf16 %v2028, %v2026
    %v2033 = vpack.c.bf16 %v2029, %v2027
    %v2038 = vunpack.c.l.b16 %v2030
    %v2039 = vunpack.c.l.b16 %v2031
    %v2040 = vunpack.c.h.b16 %v2030
    %v2041 = vunpack.c.h.b16 %v2031
    %v2042 = vunpack.c.l.b16 %v2032
    %v2043 = vunpack.c.l.b16 %v2033
    %v2044 = vunpack.c.h.b16 %v2032
    %v2045 = vunpack.c.h.b16 %v2033
    %v2046 = vpack.c.b16 %v2039, %v2038
    %v2047 = vpack.c.b16 %v2041, %v2040
    %v2048 = vpack.c.b16 %v2043, %v2042
    %v2049 = vpack.c.b16 %v2045, %v2044
    %2054 = vst [vmem:[#allocation2 + $0x20] sm:$0xff] %v2046
    %2055 = vst [vmem:[#allocation2 + $0x28] sm:$0xff] %v2047
    %2056 = vst [vmem:[#allocation2 + $0x30] sm:$0xff] %v2048
    %2057 = vst [vmem:[#allocation2 + $0x38] sm:$0xff] %v2049
    %v2058 = vpack.c.bf16 %v1932, %v1930
    %v2059 = vpack.c.bf16 %v1933, %v1931
    %v2060 = vpack.c.bf16 %v1936, %v1934
    %v2061 = vpack.c.bf16 %v1937, %v1935
    %v2066 = vunpack.c.l.b16 %v2058
    %v2067 = vunpack.c.l.b16 %v2059
    %v2068 = vunpack.c.h.b16 %v2058
    %v2069 = vunpack.c.h.b16 %v2059
    %v2070 = vunpack.c.l.b16 %v2060
    %v2071 = vunpack.c.l.b16 %v2061
    %v2072 = vunpack.c.h.b16 %v2060
    %v2073 = vunpack.c.h.b16 %v2061
    %v2074 = vpack.c.b16 %v2067, %v2066
    %v2075 = vpack.c.b16 %v2069, %v2068
    %v2076 = vpack.c.b16 %v2071, %v2070
    %v2077 = vpack.c.b16 %v2073, %v2072
    %2082 = vst [vmem:[#allocation2 + $0x40] sm:$0xff] %v2074
    %2083 = vst [vmem:[#allocation2 + $0x48] sm:$0xff] %v2075
    %2084 = vst [vmem:[#allocation2 + $0x50] sm:$0xff] %v2076
    %2085 = vst [vmem:[#allocation2 + $0x58] sm:$0xff] %v2077
    %s2086 = scalar_lea.vmem %s3, 96
    %v2087 = vld [vmem:[%s2086] sm:$0xf]
    %v2088 = vld [vmem:[%s2086 + $0x4] sm:$0xf]
    %v2089 = vld [vmem:[%s2086 + $0x8] sm:$0xf]
    %v2090 = vld [vmem:[%s2086 + $0xc] sm:$0xf]
    %v2091 = vld [vmem:[%s2086 + $0x10] sm:$0xf]
    %v2092 = vld [vmem:[%s2086 + $0x14] sm:$0xf]
    %v2093 = vld [vmem:[%s2086 + $0x18] sm:$0xf]
    %v2094 = vld [vmem:[%s2086 + $0x1c] sm:$0xf]
    %v2095 = vld [vmem:[#allocation2] sm:$0xff]
    %v2096 = vld [vmem:[#allocation2 + $0x8] sm:$0xff]
    %v2097 = vld [vmem:[#allocation2 + $0x10] sm:$0xff]
    %v2098 = vld [vmem:[#allocation2 + $0x18] sm:$0xff]
    %v2099 = vld [vmem:[#allocation2 + $0x20] sm:$0xff]
    %v2100 = vld [vmem:[#allocation2 + $0x28] sm:$0xff]
    %v2101 = vld [vmem:[#allocation2 + $0x30] sm:$0xff]
    %v2102 = vld [vmem:[#allocation2 + $0x38] sm:$0xff]
    %v2103 = vld [vmem:[#allocation2 + $0x40] sm:$0xff]
    %v2104 = vld [vmem:[#allocation2 + $0x48] sm:$0xff]
    %v2105 = vld [vmem:[#allocation2 + $0x50] sm:$0xff]
    %v2106 = vld [vmem:[#allocation2 + $0x58] sm:$0xff]
    %s2107 = scalar_lea.vmem %s4, 192
    %v2108 = vld [vmem:[%s2107] sm:$0xff]
    %v2109 = vld [vmem:[%s2107 + $0x8] sm:$0xff]
    %v2110 = vld [vmem:[%s2107 + $0x10] sm:$0xff]
    %v2111 = vld [vmem:[%s2107 + $0x18] sm:$0xff]
    %v2112 = vld [vmem:[%s2107 + $0x20] sm:$0xff]
    %v2113 = vld [vmem:[%s2107 + $0x28] sm:$0xff]
    %v2114 = vld [vmem:[%s2107 + $0x30] sm:$0xff]
    %v2115 = vld [vmem:[%s2107 + $0x38] sm:$0xff]
    %2117 = vset.pattern.permute.xlu0 0
    %2118 = vperm.xlu0 %2117, %v2108
    %v2119 = vpop.permute.xlu0 %2118
    %2122 = vset.pattern.permute.xlu0 0
    %2123 = vperm.xlu0 %2122, %v2109
    %v2124 = vpop.permute.xlu0 %2123
    %2127 = vset.pattern.permute.xlu0 0
    %2128 = vperm.xlu0 %2127, %v2110
    %v2129 = vpop.permute.xlu0 %2128
    %2132 = vset.pattern.permute.xlu0 0
    %2133 = vperm.xlu0 %2132, %v2111
    %v2134 = vpop.permute.xlu0 %2133
    %2137 = vset.pattern.permute.xlu0 0
    %2138 = vperm.xlu0 %2137, %v2112
    %v2139 = vpop.permute.xlu0 %2138
    %2142 = vset.pattern.permute.xlu0 0
    %2143 = vperm.xlu0 %2142, %v2113
    %v2144 = vpop.permute.xlu0 %2143
    %2147 = vset.pattern.permute.xlu0 0
    %2148 = vperm.xlu0 %2147, %v2114
    %v2149 = vpop.permute.xlu0 %2148
    %2152 = vset.pattern.permute.xlu0 0
    %2153 = vperm.xlu0 %2152, %v2115
    %v2154 = vpop.permute.xlu0 %2153
    %v2164 = vunpack.c.l.b16 %v2087
    %v2165 = vunpack.c.l.b16 %v2088
    %v2166 = vunpack.c.l.b16 %v2089
    %v2167 = vunpack.c.l.b16 %v2090
    %v2168 = vunpack.c.l.b16 %v2091
    %v2169 = vunpack.c.l.b16 %v2092
    %v2170 = vunpack.c.l.b16 %v2093
    %v2171 = vunpack.c.l.b16 %v2094
    %v2172 = vpack.c.b16 %v2165, %v2164
    %v2173 = vpack.c.b16 %v2167, %v2166
    %v2174 = vpack.c.b16 %v2169, %v2168
    %v2175 = vpack.c.b16 %v2171, %v2170
    %v2188 = vunpack.c.l.b16 %v2095
    %v2189 = vunpack.c.h.b16 %v2095
    %v2190 = vunpack.c.l.b16 %v2096
    %v2191 = vunpack.c.h.b16 %v2096
    %v2192 = vunpack.c.l.b16 %v2097
    %v2193 = vunpack.c.h.b16 %v2097
    %v2194 = vunpack.c.l.b16 %v2098
    %v2195 = vunpack.c.h.b16 %v2098
    %v2196 = vunpack.c.l.b16 %v2099
    %v2197 = vunpack.c.h.b16 %v2099
    %v2198 = vunpack.c.l.b16 %v2100
    %v2199 = vunpack.c.h.b16 %v2100
    %v2200 = vunpack.c.l.b16 %v2101
    %v2201 = vunpack.c.h.b16 %v2101
    %v2202 = vunpack.c.l.b16 %v2102
    %v2203 = vunpack.c.h.b16 %v2102
    %v2204 = vunpack.c.l.b16 %v2103
    %v2205 = vunpack.c.h.b16 %v2103
    %v2206 = vunpack.c.l.b16 %v2104
    %v2207 = vunpack.c.h.b16 %v2104
    %v2208 = vunpack.c.l.b16 %v2105
    %v2209 = vunpack.c.h.b16 %v2105
    %v2210 = vunpack.c.l.b16 %v2106
    %v2211 = vunpack.c.h.b16 %v2106
    %v2212 = vpack.c.b16 %v2190, %v2188
    %v2213 = vpack.c.b16 %v2191, %v2189
    %v2214 = vpack.c.b16 %v2194, %v2192
    %v2215 = vpack.c.b16 %v2195, %v2193
    %v2216 = vpack.c.b16 %v2198, %v2196
    %v2217 = vpack.c.b16 %v2199, %v2197
    %v2218 = vpack.c.b16 %v2202, %v2200
    %v2219 = vpack.c.b16 %v2203, %v2201
    %v2220 = vpack.c.b16 %v2206, %v2204
    %v2221 = vpack.c.b16 %v2207, %v2205
    %v2222 = vpack.c.b16 %v2210, %v2208
    %v2223 = vpack.c.b16 %v2211, %v2209
    %v2237 = vsel %vm465, %v2172, 0
    %v2240 = vsel %vm465, %v2173, 0
    %v2243 = vsel %vm465, %v2174, 0
    %v2246 = vsel %vm465, %v2175, 0
    %2248 = vmatprep.subr.bf16.mxu0 0
    %2249 = vmatpush1.bf16.msra.mxu0 0
    %2250 = vmatprep.subr.bf16.mxu0 0
    %2251 = vmatpush1.bf16.msra.mxu0 0
    %2252 = vmatprep.subr.bf16.mxu0 %v2223
    %2253 = vmatpush1.bf16.msra.mxu0 %v2222
    %2254 = vmatprep.subr.bf16.mxu0 %v2221
    %2255 = vmatpush1.bf16.msra.mxu0 %v2220
    %2256 = vmatprep.subr.bf16.mxu0 %v2219
    %2257 = vmatpush1.bf16.msra.mxu0 %v2218
    %2258 = vmatprep.subr.bf16.mxu0 %v2217
    %2259 = vmatpush1.bf16.msra.mxu0 %v2216
    %2260 = vmatprep.subr.bf16.mxu0 %v2215
    %2261 = vmatpush1.bf16.msra.mxu0 %v2214
    %2262 = vmatprep.subr.bf16.mxu0 %v2213
    %2263 = vmatpush1.bf16.msra.mxu0 %v2212
    %2264 = vmatprep.subr.bf16.mxu0 0
    %2265 = vmatpush2.bf16.msra.mxu0 0
    %2266 = vmatprep.subr.bf16.mxu0 0
    %2267 = vmatpush2.bf16.msra.mxu0 0
    %2268 = vmatprep.subr.bf16.mxu0 0
    %2269 = vmatpush2.bf16.msra.mxu0 0
    %2270 = vmatprep.subr.bf16.mxu0 0
    %2271 = vmatpush2.bf16.msra.mxu0 0
    %2272 = vmatprep.subr.bf16.mxu0 0
    %2273 = vmatpush2.bf16.msra.mxu0 0
    %2274 = vmatprep.subr.bf16.mxu0 0
    %2275 = vmatpush2.bf16.msra.mxu0 0
    %2276 = vmatprep.subr.bf16.mxu0 0
    %2277 = vmatpush2.bf16.msra.mxu0 0
    %2278 = vmatprep.subr.bf16.mxu0 0
    %2279 = vmatpush2.bf16.msra.mxu0 0
    %2280 = vmatprep.mubr.bf16.mxu0 0
    %2281 = vmatmul.mubr.bf16.gmra.mxu0 %v2237
    %v2282 = vpop.f32.mrf.mxu0
    %v2283 = vadd.f32 %v2119, %v2282
    %v2284 = vpop.f32.mrf.mxu0
    %v2285 = vadd.f32 %v2119, %v2284
    %v2286 = vpop.f32.mrf.mxu0
    %v2287 = vadd.f32 %v2124, %v2286
    %v2288 = vpop.f32.mrf.mxu0
    %v2289 = vadd.f32 %v2124, %v2288
    %2290 = vmatprep.mubr.bf16.mxu0 0
    %2291 = vmatmul.mubr.bf16.gmra.mxu0 %v2240
    %v2292 = vpop.f32.mrf.mxu0
    %v2293 = vadd.f32 %v2129, %v2292
    %v2294 = vpop.f32.mrf.mxu0
    %v2295 = vadd.f32 %v2129, %v2294
    %v2296 = vpop.f32.mrf.mxu0
    %v2297 = vadd.f32 %v2134, %v2296
    %v2298 = vpop.f32.mrf.mxu0
    %v2299 = vadd.f32 %v2134, %v2298
    %2300 = vmatprep.mubr.bf16.mxu0 0
    %2301 = vmatmul.mubr.bf16.gmra.mxu0 %v2243
    %v2302 = vpop.f32.mrf.mxu0
    %v2303 = vadd.f32 %v2139, %v2302
    %v2304 = vpop.f32.mrf.mxu0
    %v2305 = vadd.f32 %v2139, %v2304
    %v2306 = vpop.f32.mrf.mxu0
    %v2307 = vadd.f32 %v2144, %v2306
    %v2308 = vpop.f32.mrf.mxu0
    %v2309 = vadd.f32 %v2144, %v2308
    %2310 = vmatprep.mubr.bf16.mxu0 0
    %2311 = vmatmul.mubr.bf16.gmra.mxu0 %v2246
    %v2312 = vpop.f32.mrf.mxu0
    %v2313 = vadd.f32 %v2149, %v2312
    %v2314 = vpop.f32.mrf.mxu0
    %v2315 = vadd.f32 %v2149, %v2314
    %v2316 = vpop.f32.mrf.mxu0
    %v2317 = vadd.f32 %v2154, %v2316
    %v2318 = vpop.f32.mrf.mxu0
    %v2319 = vadd.f32 %v2154, %v2318
    %2320 = vdwg.mxu0
    %v2321 = vtanh.pop %v2283
    %v2322 = vtanh.pop %v2285
    %v2323 = vtanh.pop %v2287
    %v2324 = vtanh.pop %v2289
    %v2325 = vtanh.pop %v2293
    %v2326 = vtanh.pop %v2295
    %v2327 = vtanh.pop %v2297
    %v2328 = vtanh.pop %v2299
    %v2329 = vxor.u32 %v2303, 2147483648
    %v2330 = vxor.u32 %v2305, 2147483648
    %v2331 = vxor.u32 %v2307, 2147483648
    %v2332 = vxor.u32 %v2309, 2147483648
    %v2333 = vxor.u32 %v2313, 2147483648
    %v2334 = vxor.u32 %v2315, 2147483648
    %v2335 = vxor.u32 %v2317, 2147483648
    %v2336 = vxor.u32 %v2319, 2147483648
    %v2337 = vmul.f32 %v2329, 1.442695
    %v2338 = vpow.pop %v2337
    %v2339 = vmul.f32 %v2330, 1.442695
    %v2340 = vpow.pop %v2339
    %v2341 = vmul.f32 %v2331, 1.442695
    %v2342 = vpow.pop %v2341
    %v2343 = vmul.f32 %v2332, 1.442695
    %v2344 = vpow.pop %v2343
    %v2345 = vmul.f32 %v2333, 1.442695
    %v2346 = vpow.pop %v2345
    %v2347 = vmul.f32 %v2334, 1.442695
    %v2348 = vpow.pop %v2347
    %v2349 = vmul.f32 %v2335, 1.442695
    %v2350 = vpow.pop %v2349
    %v2351 = vmul.f32 %v2336, 1.442695
    %v2352 = vpow.pop %v2351
    %v2353 = vadd.f32 %v2338, 1.0
    %v2354 = vadd.f32 %v2340, 1.0
    %v2355 = vadd.f32 %v2342, 1.0
    %v2356 = vadd.f32 %v2344, 1.0
    %v2357 = vadd.f32 %v2346, 1.0
    %v2358 = vadd.f32 %v2348, 1.0
    %v2359 = vadd.f32 %v2350, 1.0
    %v2360 = vadd.f32 %v2352, 1.0
    %v2361 = vrcp.pop %v2353
    %v2362 = vmul.f32 1.0, %v2361
    %v2363 = vrcp.pop %v2354
    %v2364 = vmul.f32 1.0, %v2363
    %v2365 = vrcp.pop %v2355
    %v2366 = vmul.f32 1.0, %v2365
    %v2367 = vrcp.pop %v2356
    %v2368 = vmul.f32 1.0, %v2367
    %v2369 = vrcp.pop %v2357
    %v2370 = vmul.f32 1.0, %v2369
    %v2371 = vrcp.pop %v2358
    %v2372 = vmul.f32 1.0, %v2371
    %v2373 = vrcp.pop %v2359
    %v2374 = vmul.f32 1.0, %v2373
    %v2375 = vrcp.pop %v2360
    %v2376 = vmul.f32 1.0, %v2375
    %v2377 = vmul.f32 %v2321, %v2362
    %v2378 = vmul.f32 %v2322, %v2364
    %v2379 = vmul.f32 %v2323, %v2366
    %v2380 = vmul.f32 %v2324, %v2368
    %v2381 = vmul.f32 %v2325, %v2370
    %v2382 = vmul.f32 %v2326, %v2372
    %v2383 = vmul.f32 %v2327, %v2374
    %v2384 = vmul.f32 %v2328, %v2376
    %v2385 = vpack.c.bf16 %v2379, %v2377
    %v2386 = vpack.c.bf16 %v2380, %v2378
    %v2387 = vpack.c.bf16 %v2383, %v2381
    %v2388 = vpack.c.bf16 %v2384, %v2382
    %v2393 = vunpack.c.l.b16 %v2385
    %v2394 = vunpack.c.l.b16 %v2386
    %v2395 = vunpack.c.h.b16 %v2385
    %v2396 = vunpack.c.h.b16 %v2386
    %v2397 = vunpack.c.l.b16 %v2387
    %v2398 = vunpack.c.l.b16 %v2388
    %v2399 = vunpack.c.h.b16 %v2387
    %v2400 = vunpack.c.h.b16 %v2388
    %v2401 = vpack.c.b16 %v2394, %v2393
    %v2402 = vpack.c.b16 %v2396, %v2395
    %v2403 = vpack.c.b16 %v2398, %v2397
    %v2404 = vpack.c.b16 %v2400, %v2399
    %2409 = vst [vmem:[#allocation3 + $0x60] sm:$0xff] %v2401
    %2410 = vst [vmem:[#allocation3 + $0x68] sm:$0xff] %v2402
    %2411 = vst [vmem:[#allocation3 + $0x70] sm:$0xff] %v2403
    %2412 = vst [vmem:[#allocation3 + $0x78] sm:$0xff] %v2404
    %v2413 = vld [vmem:[%s7] sm:$0xf]
    %v2414 = vld [vmem:[%s7 + $0x4] sm:$0xf]
    %v2415 = vld [vmem:[%s7 + $0x8] sm:$0xf]
    %v2416 = vld [vmem:[%s7 + $0xc] sm:$0xf]
    %v2417 = vld [vmem:[#allocation3] sm:$0xff]
    %v2418 = vld [vmem:[#allocation3 + $0x8] sm:$0xff]
    %v2419 = vld [vmem:[#allocation3 + $0x10] sm:$0xff]
    %v2420 = vld [vmem:[#allocation3 + $0x18] sm:$0xff]
    %v2421 = vld [vmem:[#allocation3 + $0x20] sm:$0xff]
    %v2422 = vld [vmem:[#allocation3 + $0x28] sm:$0xff]
    %v2423 = vld [vmem:[#allocation3 + $0x30] sm:$0xff]
    %v2424 = vld [vmem:[#allocation3 + $0x38] sm:$0xff]
    %v2425 = vld [vmem:[#allocation3 + $0x40] sm:$0xff]
    %v2426 = vld [vmem:[#allocation3 + $0x48] sm:$0xff]
    %v2427 = vld [vmem:[#allocation3 + $0x50] sm:$0xff]
    %v2428 = vld [vmem:[#allocation3 + $0x58] sm:$0xff]
    %v2429 = vld [vmem:[#allocation3 + $0x60] sm:$0xff]
    %v2430 = vld [vmem:[#allocation3 + $0x68] sm:$0xff]
    %v2431 = vld [vmem:[#allocation3 + $0x70] sm:$0xff]
    %v2432 = vld [vmem:[#allocation3 + $0x78] sm:$0xff]
    %v2433 = vld [vmem:[%s8] sm:$0xff]
    %v2434 = vld [vmem:[%s8 + $0x8] sm:$0xff]
    %v2435 = vld [vmem:[%s8 + $0x10] sm:$0xff]
    %v2436 = vld [vmem:[%s8 + $0x18] sm:$0xff]
    %2438 = vset.pattern.permute.xlu0 0
    %2439 = vperm.xlu0 %2438, %v2433
    %v2440 = vpop.permute.xlu0 %2439
    %2443 = vset.pattern.permute.xlu0 0
    %2444 = vperm.xlu0 %2443, %v2434
    %v2445 = vpop.permute.xlu0 %2444
    %2448 = vset.pattern.permute.xlu0 0
    %2449 = vperm.xlu0 %2448, %v2435
    %v2450 = vpop.permute.xlu0 %2449
    %2453 = vset.pattern.permute.xlu0 0
    %2454 = vperm.xlu0 %2453, %v2436
    %v2455 = vpop.permute.xlu0 %2454
    %v2461 = vunpack.c.l.b16 %v2413
    %v2462 = vunpack.c.l.b16 %v2414
    %v2463 = vunpack.c.l.b16 %v2415
    %v2464 = vunpack.c.l.b16 %v2416
    %v2465 = vpack.c.b16 %v2462, %v2461
    %v2466 = vpack.c.b16 %v2464, %v2463
    %v2485 = vunpack.c.l.b16 %v2417
    %v2486 = vunpack.c.h.b16 %v2417
    %v2487 = vunpack.c.l.b16 %v2418
    %v2488 = vunpack.c.h.b16 %v2418
    %v2489 = vunpack.c.l.b16 %v2419
    %v2490 = vunpack.c.h.b16 %v2419
    %v2491 = vunpack.c.l.b16 %v2420
    %v2492 = vunpack.c.h.b16 %v2420
    %v2493 = vunpack.c.l.b16 %v2421
    %v2494 = vunpack.c.h.b16 %v2421
    %v2495 = vunpack.c.l.b16 %v2422
    %v2496 = vunpack.c.h.b16 %v2422
    %v2497 = vunpack.c.l.b16 %v2423
    %v2498 = vunpack.c.h.b16 %v2423
    %v2499 = vunpack.c.l.b16 %v2424
    %v2500 = vunpack.c.h.b16 %v2424
    %v2501 = vunpack.c.l.b16 %v2425
    %v2502 = vunpack.c.h.b16 %v2425
    %v2503 = vunpack.c.l.b16 %v2426
    %v2504 = vunpack.c.h.b16 %v2426
    %v2505 = vunpack.c.l.b16 %v2427
    %v2506 = vunpack.c.h.b16 %v2427
    %v2507 = vunpack.c.l.b16 %v2428
    %v2508 = vunpack.c.h.b16 %v2428
    %v2509 = vunpack.c.l.b16 %v2429
    %v2510 = vunpack.c.h.b16 %v2429
    %v2511 = vunpack.c.l.b16 %v2430
    %v2512 = vunpack.c.h.b16 %v2430
    %v2513 = vunpack.c.l.b16 %v2431
    %v2514 = vunpack.c.h.b16 %v2431
    %v2515 = vunpack.c.l.b16 %v2432
    %v2516 = vunpack.c.h.b16 %v2432
    %v2517 = vpack.c.b16 %v2487, %v2485
    %v2518 = vpack.c.b16 %v2488, %v2486
    %v2519 = vpack.c.b16 %v2491, %v2489
    %v2520 = vpack.c.b16 %v2492, %v2490
    %v2521 = vpack.c.b16 %v2495, %v2493
    %v2522 = vpack.c.b16 %v2496, %v2494
    %v2523 = vpack.c.b16 %v2499, %v2497
    %v2524 = vpack.c.b16 %v2500, %v2498
    %v2525 = vpack.c.b16 %v2503, %v2501
    %v2526 = vpack.c.b16 %v2504, %v2502
    %v2527 = vpack.c.b16 %v2507, %v2505
    %v2528 = vpack.c.b16 %v2508, %v2506
    %v2529 = vpack.c.b16 %v2511, %v2509
    %v2530 = vpack.c.b16 %v2512, %v2510
    %v2531 = vpack.c.b16 %v2515, %v2513
    %v2532 = vpack.c.b16 %v2516, %v2514
    %2549 = vmatprep.subr.bf16.mxu0 %v2532
    %2550 = vmatpush1.bf16.msra.mxu0 %v2531
    %2551 = vmatprep.subr.bf16.mxu0 %v2530
    %2552 = vmatpush1.bf16.msra.mxu0 %v2529
    %2553 = vmatprep.subr.bf16.mxu0 %v2528
    %2554 = vmatpush1.bf16.msra.mxu0 %v2527
    %2555 = vmatprep.subr.bf16.mxu0 %v2526
    %2556 = vmatpush1.bf16.msra.mxu0 %v2525
    %2557 = vmatprep.subr.bf16.mxu0 %v2524
    %2558 = vmatpush1.bf16.msra.mxu0 %v2523
    %2559 = vmatprep.subr.bf16.mxu0 %v2522
    %2560 = vmatpush1.bf16.msra.mxu0 %v2521
    %2561 = vmatprep.subr.bf16.mxu0 %v2520
    %2562 = vmatpush1.bf16.msra.mxu0 %v2519
    %2563 = vmatprep.subr.bf16.mxu0 %v2518
    %2564 = vmatpush1.bf16.msra.mxu0 %v2517
    %2565 = vmatprep.subr.bf16.mxu0 0
    %2566 = vmatpush2.bf16.msra.mxu0 0
    %2567 = vmatprep.subr.bf16.mxu0 0
    %2568 = vmatpush2.bf16.msra.mxu0 0
    %2569 = vmatprep.subr.bf16.mxu0 0
    %2570 = vmatpush2.bf16.msra.mxu0 0
    %2571 = vmatprep.subr.bf16.mxu0 0
    %2572 = vmatpush2.bf16.msra.mxu0 0
    %2573 = vmatprep.subr.bf16.mxu0 0
    %2574 = vmatpush2.bf16.msra.mxu0 0
    %2575 = vmatprep.subr.bf16.mxu0 0
    %2576 = vmatpush2.bf16.msra.mxu0 0
    %2577 = vmatprep.subr.bf16.mxu0 0
    %2578 = vmatpush2.bf16.msra.mxu0 0
    %2579 = vmatprep.subr.bf16.mxu0 0
    %2580 = vmatpush2.bf16.msra.mxu0 0
    %2581 = vmatprep.mubr.bf16.mxu0 0
    %2582 = vmatmul.mubr.bf16.gmra.mxu0 %v2465
    %v2583 = vpop.f32.mrf.mxu0
    %v2584 = vadd.f32 %v2440, %v2583
    %v2585 = vpop.f32.mrf.mxu0
    %v2586 = vadd.f32 %v2440, %v2585
    %v2587 = vpop.f32.mrf.mxu0
    %v2588 = vadd.f32 %v2445, %v2587
    %v2589 = vpop.f32.mrf.mxu0
    %v2590 = vadd.f32 %v2445, %v2589
    %2591 = vmatprep.mubr.bf16.mxu0 0
    %2592 = vmatmul.mubr.bf16.gmra.mxu0 %v2466
    %v2593 = vpop.f32.mrf.mxu0
    %v2594 = vadd.f32 %v2450, %v2593
    %v2595 = vpop.f32.mrf.mxu0
    %v2596 = vadd.f32 %v2450, %v2595
    %v2597 = vpop.f32.mrf.mxu0
    %v2598 = vadd.f32 %v2455, %v2597
    %v2599 = vpop.f32.mrf.mxu0
    %v2600 = vadd.f32 %v2455, %v2599
    %2601 = vdwg.mxu0
    %v2602 = vld [vmem:[%s9] sm:$0xf]
    %v2603 = vld [vmem:[%s9 + $0x4] sm:$0xf]
    %v2604 = vld [vmem:[%s9 + $0x8] sm:$0xf]
    %v2605 = vld [vmem:[%s9 + $0xc] sm:$0xf]
    %v2606 = vmax.f32 %v2584, 0.0
    %v2607 = vmax.f32 %v2586, 0.0
    %v2608 = vmax.f32 %v2588, 0.0
    %v2609 = vmax.f32 %v2590, 0.0
    %v2610 = vmax.f32 %v2594, 0.0
    %v2611 = vmax.f32 %v2596, 0.0
    %v2612 = vmax.f32 %v2598, 0.0
    %v2613 = vmax.f32 %v2600, 0.0
    %v2614 = vpack.c.bf16 %v2608, %v2606
    %v2615 = vpack.c.bf16 %v2609, %v2607
    %v2616 = vpack.c.bf16 %v2612, %v2610
    %v2617 = vpack.c.bf16 %v2613, %v2611
    %v2618 = vld [vmem:[%s10] sm:$0xff]
    %v2619 = vld [vmem:[%s10 + $0x8] sm:$0xff]
    %v2620 = vld [vmem:[%s10 + $0x10] sm:$0xff]
    %v2621 = vld [vmem:[%s10 + $0x18] sm:$0xff]
    %2623 = vset.pattern.permute.xlu0 0
    %2624 = vperm.xlu0 %2623, %v2618
    %v2625 = vpop.permute.xlu0 %2624
    %2628 = vset.pattern.permute.xlu0 0
    %2629 = vperm.xlu0 %2628, %v2619
    %v2630 = vpop.permute.xlu0 %2629
    %2633 = vset.pattern.permute.xlu0 0
    %2634 = vperm.xlu0 %2633, %v2620
    %v2635 = vpop.permute.xlu0 %2634
    %2638 = vset.pattern.permute.xlu0 0
    %2639 = vperm.xlu0 %2638, %v2621
    %v2640 = vpop.permute.xlu0 %2639
    %v2646 = vunpack.c.l.b16 %v2602
    %v2647 = vunpack.c.l.b16 %v2603
    %v2648 = vunpack.c.l.b16 %v2604
    %v2649 = vunpack.c.l.b16 %v2605
    %v2650 = vpack.c.b16 %v2647, %v2646
    %v2651 = vpack.c.b16 %v2649, %v2648
    %v2653 = vsel %vm657, %v2650, 0
    %v2656 = vsel %vm657, %v2651, 0
    %2658 = vmatprep.subr.bf16.mxu0 0
    %2659 = vmatpush1.bf16.msra.mxu0 0
    %2660 = vmatprep.subr.bf16.mxu0 0
    %2661 = vmatpush1.bf16.msra.mxu0 0
    %2662 = vmatprep.subr.bf16.mxu0 0
    %2663 = vmatpush1.bf16.msra.mxu0 0
    %2664 = vmatprep.subr.bf16.mxu0 0
    %2665 = vmatpush1.bf16.msra.mxu0 0
    %2666 = vmatprep.subr.bf16.mxu0 0
    %2667 = vmatpush1.bf16.msra.mxu0 0
    %2668 = vmatprep.subr.bf16.mxu0 0
    %2669 = vmatpush1.bf16.msra.mxu0 0
    %2670 = vmatprep.subr.bf16.mxu0 %v2617
    %2671 = vmatpush1.bf16.msra.mxu0 %v2616
    %2672 = vmatprep.subr.bf16.mxu0 %v2615
    %2673 = vmatpush1.bf16.msra.mxu0 %v2614
    %2674 = vmatprep.subr.bf16.mxu0 0
    %2675 = vmatpush2.bf16.msra.mxu0 0
    %2676 = vmatprep.subr.bf16.mxu0 0
    %2677 = vmatpush2.bf16.msra.mxu0 0
    %2678 = vmatprep.subr.bf16.mxu0 0
    %2679 = vmatpush2.bf16.msra.mxu0 0
    %2680 = vmatprep.subr.bf16.mxu0 0
    %2681 = vmatpush2.bf16.msra.mxu0 0
    %2682 = vmatprep.subr.bf16.mxu0 0
    %2683 = vmatpush2.bf16.msra.mxu0 0
    %2684 = vmatprep.subr.bf16.mxu0 0
    %2685 = vmatpush2.bf16.msra.mxu0 0
    %2686 = vmatprep.subr.bf16.mxu0 0
    %2687 = vmatpush2.bf16.msra.mxu0 0
    %2688 = vmatprep.subr.bf16.mxu0 0
    %2689 = vmatpush2.bf16.msra.mxu0 0
    %2690 = vmatprep.mubr.bf16.mxu0 0
    %2691 = vmatmul.mubr.bf16.gmra.mxu0 %v2653
    %v2692 = vpop.f32.mrf.mxu0
    %v2693 = vadd.f32 %v2625, %v2692
    %v2694 = vpop.f32.mrf.mxu0
    %v2695 = vadd.f32 %v2625, %v2694
    %v2696 = vpop.f32.mrf.mxu0
    %v2697 = vadd.f32 %v2630, %v2696
    %v2698 = vpop.f32.mrf.mxu0
    %v2699 = vadd.f32 %v2630, %v2698
    %2700 = vmatprep.mubr.bf16.mxu0 0
    %2701 = vmatmul.mubr.bf16.gmra.mxu0 %v2656
    %v2702 = vpop.f32.mrf.mxu0
    %v2703 = vadd.f32 %v2635, %v2702
    %v2704 = vpop.f32.mrf.mxu0
    %v2705 = vadd.f32 %v2635, %v2704
    %v2706 = vpop.f32.mrf.mxu0
    %v2707 = vadd.f32 %v2640, %v2706
    %v2708 = vpop.f32.mrf.mxu0
    %v2709 = vadd.f32 %v2640, %v2708
    %2710 = vdwg.mxu0
    %v2711 = vld [vmem:[%s11] sm:$0xf]
    %v2712 = vld [vmem:[%s11 + $0x4] sm:$0xf]
    %v2713 = vld [vmem:[%s11 + $0x8] sm:$0xf]
    %v2714 = vld [vmem:[%s11 + $0xc] sm:$0xf]
    %v2715 = vmax.f32 %v2693, 0.0
    %v2716 = vmax.f32 %v2695, 0.0
    %v2717 = vmax.f32 %v2697, 0.0
    %v2718 = vmax.f32 %v2699, 0.0
    %v2719 = vmax.f32 %v2703, 0.0
    %v2720 = vmax.f32 %v2705, 0.0
    %v2721 = vmax.f32 %v2707, 0.0
    %v2722 = vmax.f32 %v2709, 0.0
    %v2723 = vpack.c.bf16 %v2717, %v2715
    %v2724 = vpack.c.bf16 %v2718, %v2716
    %v2725 = vpack.c.bf16 %v2721, %v2719
    %v2726 = vpack.c.bf16 %v2722, %v2720
    %v2727 = vld [vmem:[%s12] sm:$0xff]
    %v2728 = vld [vmem:[%s12 + $0x8] sm:$0xff]
    %v2729 = vld [vmem:[%s12 + $0x10] sm:$0xff]
    %v2730 = vld [vmem:[%s12 + $0x18] sm:$0xff]
    %2732 = vset.pattern.permute.xlu0 0
    %2733 = vperm.xlu0 %2732, %v2727
    %v2734 = vpop.permute.xlu0 %2733
    %2737 = vset.pattern.permute.xlu0 0
    %2738 = vperm.xlu0 %2737, %v2728
    %v2739 = vpop.permute.xlu0 %2738
    %2742 = vset.pattern.permute.xlu0 0
    %2743 = vperm.xlu0 %2742, %v2729
    %v2744 = vpop.permute.xlu0 %2743
    %2747 = vset.pattern.permute.xlu0 0
    %2748 = vperm.xlu0 %2747, %v2730
    %v2749 = vpop.permute.xlu0 %2748
    %v2755 = vunpack.c.l.b16 %v2711
    %v2756 = vunpack.c.l.b16 %v2712
    %v2757 = vunpack.c.l.b16 %v2713
    %v2758 = vunpack.c.l.b16 %v2714
    %v2759 = vpack.c.b16 %v2756, %v2755
    %v2760 = vpack.c.b16 %v2758, %v2757
    %v2762 = vsel %vm657, %v2759, 0
    %v2765 = vsel %vm657, %v2760, 0
    %2767 = vmatprep.subr.bf16.mxu0 0
    %2768 = vmatpush1.bf16.msra.mxu0 0
    %2769 = vmatprep.subr.bf16.mxu0 0
    %2770 = vmatpush1.bf16.msra.mxu0 0
    %2771 = vmatprep.subr.bf16.mxu0 0
    %2772 = vmatpush1.bf16.msra.mxu0 0
    %2773 = vmatprep.subr.bf16.mxu0 0
    %2774 = vmatpush1.bf16.msra.mxu0 0
    %2775 = vmatprep.subr.bf16.mxu0 0
    %2776 = vmatpush1.bf16.msra.mxu0 0
    %2777 = vmatprep.subr.bf16.mxu0 0
    %2778 = vmatpush1.bf16.msra.mxu0 0
    %2779 = vmatprep.subr.bf16.mxu0 %v2726
    %2780 = vmatpush1.bf16.msra.mxu0 %v2725
    %2781 = vmatprep.subr.bf16.mxu0 %v2724
    %2782 = vmatpush1.bf16.msra.mxu0 %v2723
    %2783 = vmatprep.subr.bf16.mxu0 0
    %2784 = vmatpush2.bf16.msra.mxu0 0
    %2785 = vmatprep.subr.bf16.mxu0 0
    %2786 = vmatpush2.bf16.msra.mxu0 0
    %2787 = vmatprep.subr.bf16.mxu0 0
    %2788 = vmatpush2.bf16.msra.mxu0 0
    %2789 = vmatprep.subr.bf16.mxu0 0
    %2790 = vmatpush2.bf16.msra.mxu0 0
    %2791 = vmatprep.subr.bf16.mxu0 0
    %2792 = vmatpush2.bf16.msra.mxu0 0
    %2793 = vmatprep.subr.bf16.mxu0 0
    %2794 = vmatpush2.bf16.msra.mxu0 0
    %2795 = vmatprep.subr.bf16.mxu0 0
    %2796 = vmatpush2.bf16.msra.mxu0 0
    %2797 = vmatprep.subr.bf16.mxu0 0
    %2798 = vmatpush2.bf16.msra.mxu0 0
    %2799 = vmatprep.mubr.bf16.mxu0 0
    %2800 = vmatmul.mubr.bf16.gmra.mxu0 %v2762
    %v2801 = vpop.f32.mrf.mxu0
    %v2802 = vadd.f32 %v2734, %v2801
    %v2803 = vpop.f32.mrf.mxu0
    %v2804 = vadd.f32 %v2734, %v2803
    %v2805 = vpop.f32.mrf.mxu0
    %v2806 = vadd.f32 %v2739, %v2805
    %v2807 = vpop.f32.mrf.mxu0
    %v2808 = vadd.f32 %v2739, %v2807
    %2809 = vmatprep.mubr.bf16.mxu0 0
    %2810 = vmatmul.mubr.bf16.gmra.mxu0 %v2765
    %v2811 = vpop.f32.mrf.mxu0
    %v2812 = vadd.f32 %v2744, %v2811
    %v2813 = vpop.f32.mrf.mxu0
    %v2814 = vadd.f32 %v2744, %v2813
    %v2815 = vpop.f32.mrf.mxu0
    %v2816 = vadd.f32 %v2749, %v2815
    %v2817 = vpop.f32.mrf.mxu0
    %v2818 = vadd.f32 %v2749, %v2817
    %2819 = vdwg.mxu0
    %v2820 = vmax.f32 %v2802, %v2812
    %v2821 = vmax.f32 %v2806, %v2816
    %v2822 = vmax.f32 %v2820, %v2821
    %v2823 = vrot.slane %v2822, 4
    %v2824 = vmax.f32 %v2822, %v2823
    %v2825 = vrot.slane %v2824, 2
    %v2826 = vmax.f32 %v2824, %v2825
    %v2827 = vrot.slane %v2826, 1
    %v2828 = vmax.f32 %v2826, %v2827
    %v2829 = vmax.f32 %v2804, %v2814
    %v2830 = vmax.f32 %v2808, %v2818
    %v2831 = vmax.f32 %v2829, %v2830
    %v2832 = vrot.slane %v2831, 4
    %v2833 = vmax.f32 %v2831, %v2832
    %v2834 = vrot.slane %v2833, 2
    %v2835 = vmax.f32 %v2833, %v2834
    %v2836 = vrot.slane %v2835, 1
    %v2837 = vmax.f32 %v2835, %v2836
    %v2838 = vsub.f32 %v2802, %v2828
    %v2839 = vsub.f32 %v2804, %v2837
    %v2840 = vsub.f32 %v2806, %v2828
    %v2841 = vsub.f32 %v2808, %v2837
    %v2842 = vsub.f32 %v2812, %v2828
    %v2843 = vsub.f32 %v2814, %v2837
    %v2844 = vsub.f32 %v2816, %v2828
    %v2845 = vsub.f32 %v2818, %v2837
    %v2846 = vmul.f32 %v2838, 1.442695
    %v2847 = vpow.pop %v2846
    %v2848 = vmul.f32 %v2839, 1.442695
    %v2849 = vpow.pop %v2848
    %v2850 = vmul.f32 %v2840, 1.442695
    %v2851 = vpow.pop %v2850
    %v2852 = vmul.f32 %v2841, 1.442695
    %v2853 = vpow.pop %v2852
    %v2854 = vmul.f32 %v2842, 1.442695
    %v2855 = vpow.pop %v2854
    %v2856 = vmul.f32 %v2843, 1.442695
    %v2857 = vpow.pop %v2856
    %v2858 = vmul.f32 %v2844, 1.442695
    %v2859 = vpow.pop %v2858
    %v2860 = vmul.f32 %v2845, 1.442695
    %v2861 = vpow.pop %v2860
    %v2862 = vadd.f32 %v2847, %v2851
    %v2863 = vadd.f32 %v2862, %v2855
    %v2864 = vadd.f32 %v2863, %v2859
    %v2865 = vrot.slane %v2864, 4
    %v2866 = vadd.f32 %v2864, %v2865
    %v2867 = vrot.slane %v2866, 2
    %v2868 = vadd.f32 %v2866, %v2867
    %v2869 = vrot.slane %v2868, 1
    %v2870 = vadd.f32 %v2868, %v2869
    %v2871 = vadd.f32 %v2849, %v2853
    %v2872 = vadd.f32 %v2871, %v2857
    %v2873 = vadd.f32 %v2872, %v2861
    %v2874 = vrot.slane %v2873, 4
    %v2875 = vadd.f32 %v2873, %v2874
    %v2876 = vrot.slane %v2875, 2
    %v2877 = vadd.f32 %v2875, %v2876
    %v2878 = vrot.slane %v2877, 1
    %v2879 = vadd.f32 %v2877, %v2878
    %v2880 = vlog2.pop %v2870
    %v2881 = vmul.f32 %v2880, 0.6931472
    %v2882 = vlog2.pop %v2879
    %v2883 = vmul.f32 %v2882, 0.6931472
    %v2884 = vadd.f32 %v2881, %v2828
    %v2885 = vadd.f32 %v2883, %v2837
    %v2886 = vsub.f32 %v2802, %v2884
    %v2887 = vsub.f32 %v2804, %v2885
    %v2888 = vsub.f32 %v2806, %v2884
    %v2889 = vsub.f32 %v2808, %v2885
    %v2890 = vsub.f32 %v2812, %v2884
    %v2891 = vsub.f32 %v2814, %v2885
    %v2892 = vsub.f32 %v2816, %v2884
    %v2893 = vsub.f32 %v2818, %v2885
    %2894 = vst [vmem:[#allocation4] sm:$0xff] %v2886
    %2895 = vst [vmem:[#allocation4 + $0x8] sm:$0xff] %v2887
    %2896 = vst [vmem:[#allocation4 + $0x10] sm:$0xff] %v2888
    %2897 = vst [vmem:[#allocation4 + $0x18] sm:$0xff] %v2889
    %2898 = vst [vmem:[#allocation4 + $0x20] sm:$0xff] %v2890
    %2899 = vst [vmem:[#allocation4 + $0x28] sm:$0xff] %v2891
    %2900 = vst [vmem:[#allocation4 + $0x30] sm:$0xff] %v2892
    %2901 = vst [vmem:[#allocation4 + $0x38] sm:$0xff] %v2893
    // Predicated region
    $region54: #{tpu_custom_call.1} parent=1 // pred_check
      _
    $region55: #{tpu_custom_call.1} parent=1 // pred_check_branch
      %2903 = sbr.rel (0) target = $region57
    $region56: #{tpu_custom_call.1} parent=1 // pred_region
      %s2905 = ssub.s32 1024, 1024
      %2906 = vsyncadd [#allocation5], %s2905
      %s2907 = sshll.u32 [#allocation4], 4
      %s2908 = int_to_ptr.vmem [resolvable:$true] %s2907
      %2913 = dma.vmem_to_hbm [thread:$0]  %s2908, 1024, %s13, [#allocation5], 256, 256, 16
    $region57: #{tpu_custom_call.1} parent=1 // pred_fallthru
      _
    // Predicated region
    $region58: #{tpu_custom_call.1} parent=1 // pred_check
      _
    $region59: #{tpu_custom_call.1} parent=1 // pred_check_branch
      %2915 = sbr.rel (0) target = $region61
    $region60: #{tpu_custom_call.1} parent=1 // pred_region
      %2916 = dma.done [#allocation5], 1024
    $region61: #{tpu_custom_call.1} parent=1 // pred_fallthru
      _
    %2917 = vsyncpa [#allocation5], 1

</llo_original>
